<compile_context>
chip_gen: v6e
topology: v6e:2x2x1
jax: 0.10.0
libtpu: 0.0.40
codegen_flags: <defaults>
</compile_context>

<pallas_src>
import functools

import jax
import jax.numpy as jnp
from jax.experimental import pallas as pl
from jax.experimental.pallas import tpu as pltpu

EPS = 1e-5          # nn.BatchNorm2d default eps
NEG_SLOPE = 0.2     # LeakyReLU negative slope
LANES = 128


def _conv_stats_kernel(x_ref, w_ref, conv_ref, stats_ref, *, th, wo, kh_taps, kw_taps):
    """Pass 1: conv tile (MXU) + per-image partial BN stats.

    x_ref    : (Hp, Wp, Cin)      padded NHWC input for the current batch element
    w_ref    : (KH, KW, Cin, Cp)  conv weights, Cout zero-padded to Cp (lane-dense)
    conv_ref : (th*wo, Cp)        f32 conv output tile (output rows flattened)
    stats_ref: (2, 8, Cp)         f32 running [sum, sumsq] slabs for this batch element
    """
    t = pl.program_id(1)            # output-row-tile index (reduction axis for stats)
    rows = th * wo
    cp = conv_ref.shape[-1]
    cin = x_ref.shape[-1]
    row0 = t * th

    # 3x3 conv as 9 shifted matmuls accumulated in f32 (no im2col materialization).
    acc = None
    for kh in range(kh_taps):
        for kw in range(kw_taps):
            xs = x_ref[pl.ds(row0 + kh, th), pl.ds(kw, wo), :]      # (th, wo, Cin)
            xs = xs.reshape(rows, cin)
            d = jnp.dot(xs, w_ref[kh, kw], preferred_element_type=jnp.float32)
            acc = d if acc is None else acc + d
    conv_ref[...] = acc

    # Partial BN stats: (rows, Cp) -> (8, Cp) via vreg-wise VPU adds only
    # (the single cross-sublane reduce happens once, after the grid, in the wrapper).
    part_sum = jnp.sum(acc.reshape(rows // 8, 8, cp), axis=0)
    part_sq = jnp.sum((acc * acc).reshape(rows // 8, 8, cp), axis=0)

    @pl.when(t == 0)
    def _():
        stats_ref[...] = jnp.zeros_like(stats_ref)

    stats_ref[0, :, :] = stats_ref[0, :, :] + part_sum
    stats_ref[1, :, :] = stats_ref[1, :, :] + part_sq


def _norm_act_kernel(conv_ref, scale_ref, shift_ref, o_ref):
    """Pass 2: y = conv * scale + shift ; LeakyReLU(0.2). Fully parallel grid."""
    y = conv_ref[...] * scale_ref[...] + shift_ref[...]
    o_ref[...] = jnp.where(y > 0, y, NEG_SLOPE * y)


def _pick_row_tile(ho, wo, max_rows):
    """Largest divisor TH of Ho with TH*Wo <= max_rows and TH*Wo % 8 == 0."""
    best = None
    for th in range(1, ho + 1):
        if ho % th:
            continue
        if (th * wo) % 8:
            continue
        if th * wo <= max_rows:
            best = th
    return best if best is not None else ho


@functools.partial(
    jax.jit, static_argnames=("stride", "padding", "matmul_dtype", "max_tile_rows"))
def conv_block_forward(x_nchw, weight, bias, gamma, beta, *, stride=1, padding=1,
                       matmul_dtype=jnp.bfloat16, max_tile_rows=1024):
    """x_nchw: (N, Cin, H, W) f32; weight: (Cout, Cin, KH, KW); returns (N, Cout, Ho, Wo)."""
    # Training-mode BatchNorm right after the conv cancels any per-channel constant, so the
    # conv bias has exactly zero effect on the output: drop it (saves a VPU add + a DMA).
    del bias
    if stride != 1:
        raise NotImplementedError("Pallas ConvBlock kernel implements stride=1 (module default).")

    N, Cin, H, W = x_nchw.shape
    Cout, _, KH, KW = weight.shape
    Ho = H + 2 * padding - KH + 1
    Wo = W + 2 * padding - KW + 1
    Hp, Wp = H + 2 * padding, W + 2 * padding
    Cp = ((Cout + LANES - 1) // LANES) * LANES            # lane-dense output channels

    TH = _pick_row_tile(Ho, Wo, max_tile_rows)
    assert (TH * Wo) % 8 == 0, "row tile * Wo must be a multiple of 8"
    nH = Ho // TH
    grid = (N, nH)

    # --- glue: NCHW -> padded NHWC; weight -> (KH, KW, Cin, Cp) ---
    x = jnp.transpose(x_nchw, (0, 2, 3, 1))
    xp = jnp.pad(x, ((0, 0), (padding, padding), (padding, padding), (0, 0)))
    xp = xp.astype(matmul_dtype)
    w = jnp.transpose(weight, (2, 3, 1, 0))               # (KH, KW, Cin, Cout)
    w = jnp.pad(w, ((0, 0), (0, 0), (0, 0), (0, Cp - Cout))).astype(matmul_dtype)
    gamma_p = jnp.pad(gamma.astype(jnp.float32), (0, Cp - Cout))
    beta_p = jnp.pad(beta.astype(jnp.float32), (0, Cp - Cout))

    # --- pass 1: conv tiles + per-image partial stats ---
    kernel1 = functools.partial(_conv_stats_kernel, th=TH, wo=Wo, kh_taps=KH, kw_taps=KW)
    conv_out, stats = pl.pallas_call(
        kernel1,
        grid=grid,
        in_specs=[
            # Whole padded image per batch element; block index constant over the row-tile
            # axis, so it is DMA'd once per batch element (no per-tile halo refetch).
            pl.BlockSpec((None, Hp, Wp, Cin), lambda n, t: (n, 0, 0, 0)),
            pl.BlockSpec((KH, KW, Cin, Cp), lambda n, t: (0, 0, 0, 0)),
        ],
        out_specs=(
            pl.BlockSpec((None, TH * Wo, Cp), lambda n, t: (n, t, 0)),
            pl.BlockSpec((None, 2, 8, Cp), lambda n, t: (n, 0, 0, 0)),   # per-n accumulator
        ),
        out_shape=(
            jax.ShapeDtypeStruct((N, Ho * Wo, Cp), jnp.float32),
            jax.ShapeDtypeStruct((N, 2, 8, Cp), jnp.float32),
        ),
        compiler_params=pltpu.CompilerParams(
            dimension_semantics=("parallel", "arbitrary")),
    )(xp, w)

    # --- tiny per-channel finalize (global mean/var -> scale/shift), plain jnp ---
    m = N * Ho * Wo
    totals = jnp.sum(stats, axis=(0, 2))                   # (2, Cp): [sum, sumsq]
    mean = totals[0] / m
    var = jnp.maximum(totals[1] / m - mean * mean, 0.0)    # biased var; guard cancellation
    inv = jax.lax.rsqrt(var + EPS)
    scale = (gamma_p * inv).reshape(1, Cp)
    shift = (beta_p - mean * gamma_p * inv).reshape(1, Cp)

    # --- pass 2: normalize + affine + LeakyReLU (both grid axes parallel / megacore) ---
    y = pl.pallas_call(
        _norm_act_kernel,
        grid=grid,
        in_specs=[
            pl.BlockSpec((None, TH * Wo, Cp), lambda n, t: (n, t, 0)),
            pl.BlockSpec((1, Cp), lambda n, t: (0, 0)),
            pl.BlockSpec((1, Cp), lambda n, t: (0, 0)),
        ],
        out_specs=pl.BlockSpec((None, TH * Wo, Cp), lambda n, t: (n, t, 0)),
        out_shape=jax.ShapeDtypeStruct((N, Ho * Wo, Cp), jnp.float32),
        compiler_params=pltpu.CompilerParams(
            dimension_semantics=("parallel", "parallel")),
    )(conv_out, scale, shift)

    # --- glue: lane-dense (N, Ho*Wo, Cp) -> NCHW (N, Cout, Ho, Wo) ---
    y = y.reshape(N, Ho, Wo, Cp)[..., :Cout]
    return jnp.transpose(y, (0, 3, 1, 2))


def _reference(x, weight, bias, gamma, beta):
    """Pure-JAX reference mirroring PyTorch Conv2d + BatchNorm2d(train) + LeakyReLU(0.2)."""
    y = jax.lax.conv_general_dilated(
        x, weight, window_strides=(1, 1), padding=((1, 1), (1, 1)),
        dimension_numbers=("NCHW", "OIHW", "NCHW"),
        precision=jax.lax.Precision.HIGHEST)
    y = y + bias[None, :, None, None]
    mean = jnp.mean(y, axis=(0, 2, 3), keepdims=True)
    var = jnp.mean((y - mean) ** 2, axis=(0, 2, 3), keepdims=True)
    y = (y - mean) / jnp.sqrt(var + EPS)
    y = y * gamma[None, :, None, None] + beta[None, :, None, None]
    return jnp.where(y > 0, y, NEG_SLOPE * y)


if __name__ == "__main__":
    key = jax.random.PRNGKey(0)
    k_x, k_w, k_b = jax.random.split(key, 3)

    N, Cin, Cout, H, W = 2, 4, 8, 16, 16
    x = jax.random.normal(k_x, (N, Cin, H, W), dtype=jnp.float32)

    # Deterministic synthetic parameters matching ConvBlock(4, 8) shapes.
    fan_in = Cin * 3 * 3
    weight = jax.random.normal(k_w, (Cout, Cin, 3, 3), dtype=jnp.float32) * (1.0 / fan_in) ** 0.5
    bias = jax.random.normal(k_b, (Cout,), dtype=jnp.float32) * 0.1
    gamma = jnp.ones((Cout,), dtype=jnp.float32)   # BatchNorm2d defaults
    beta = jnp.zeros((Cout,), dtype=jnp.float32)

    ref = _reference(x, weight, bias, gamma, beta)

    # Tight semantics check with f32 MXU inputs.
    out_f32 = conv_block_forward(x, weight, bias, gamma, beta, matmul_dtype=jnp.float32)
    out_f32 = jax.block_until_ready(out_f32)
    assert out_f32.shape == (N, Cout, H, W), out_f32.shape
    assert jnp.allclose(out_f32, ref, atol=1e-4, rtol=1e-4), \
        float(jnp.max(jnp.abs(out_f32 - ref)))

    # Default fast path: bf16 MXU inputs, f32 accumulation + f32 BN/LeakyReLU.
    # Looser tolerance only reflects bf16 rounding of the conv inputs.
    out_bf16 = conv_block_forward(x, weight, bias, gamma, beta)
    out_bf16 = jax.block_until_ready(out_bf16)
    assert out_bf16.shape == (N, Cout, H, W), out_bf16.shape
    assert jnp.allclose(out_bf16, ref, atol=5e-2, rtol=5e-2), \
        float(jnp.max(jnp.abs(out_bf16 - ref)))

    print("KERNEL_OK")
</pallas_src>

<mosaic_0001>
module attributes {stable_mosaic.version = 11 : i64} {
  func.func @_conv_stats_kernel(%arg0: i32, %arg1: i32, %arg2: memref<1x18x18x4xf32, #tpu.memory_space<vmem>>, %arg3: memref<3x3x4x128xf32, #tpu.memory_space<vmem>>, %arg4: memref<1x256x128xf32, #tpu.memory_space<vmem>>, %arg5: memref<1x2x8x128xf32, #tpu.memory_space<vmem>>) attributes {dimension_semantics = [#tpu.dimension_semantics<parallel>, #tpu.dimension_semantics<arbitrary>], iteration_bounds = array<i64: 2, 1>, scalar_prefetch = 0 : i64, scratch_operands = 0 : i64, tpu.core_type = #tpu.core_type<tc>, window_params = [{transform_indices = @transform_0, window_bounds = array<i64: 1, 18, 18, 4>}, {pipeline_mode = #tpu.pipeline_mode<synchronous>, transform_indices = @transform_1, window_bounds = array<i64: 3, 3, 4, 128>}, {transform_indices = @transform_2, window_bounds = array<i64: 1, 256, 128>}, {transform_indices = @transform_3, window_bounds = array<i64: 1, 2, 8, 128>}]} {
    %c16_i32 = arith.constant 16 : i32
    %0 = arith.muli %arg1, %c16_i32 : i32
    %c0_i32 = arith.constant 0 : i32
    %1 = arith.addi %0, %c0_i32 : i32
    %c0 = arith.constant 0 : index
    %2 = arith.index_cast %1 : i32 to index
    %c0_0 = arith.constant 0 : index
    %c0_1 = arith.constant 0 : index
    %3 = vector.load %arg2[%c0, %2, %c0_0, %c0_1] : memref<1x18x18x4xf32, #tpu.memory_space<vmem>>, vector<1x16x16x4xf32>
    %4 = vector.shape_cast %3 : vector<1x16x16x4xf32> to vector<16x16x4xf32>
    %5 = vector.shape_cast %4 : vector<16x16x4xf32> to vector<256x4xf32>
    %c0_2 = arith.constant 0 : index
    %c0_3 = arith.constant 0 : index
    %c0_4 = arith.constant 0 : index
    %c0_5 = arith.constant 0 : index
    %6 = vector.load %arg3[%c0_2, %c0_3, %c0_4, %c0_5] : memref<3x3x4x128xf32, #tpu.memory_space<vmem>>, vector<1x1x4x128xf32>
    %7 = vector.shape_cast %6 : vector<1x1x4x128xf32> to vector<4x128xf32>
    %cst = arith.constant dense<0.000000e+00> : vector<256x128xf32>
    %8 = tpu.matmul %5, %7, %cst {dimension_numbers = #tpu.dot_dimension_numbers<[1], [0], [0], [1], [0, 0, 1, 1], [], []>} : vector<256x4xf32>, vector<4x128xf32>, vector<256x128xf32> -> vector<256x128xf32>
    %c0_i32_6 = arith.constant 0 : i32
    %9 = arith.addi %0, %c0_i32_6 : i32
    %c0_7 = arith.constant 0 : index
    %10 = arith.index_cast %9 : i32 to index
    %c1 = arith.constant 1 : index
    %c0_8 = arith.constant 0 : index
    %11 = vector.load %arg2[%c0_7, %10, %c1, %c0_8] : memref<1x18x18x4xf32, #tpu.memory_space<vmem>>, vector<1x16x16x4xf32>
    %12 = vector.shape_cast %11 : vector<1x16x16x4xf32> to vector<16x16x4xf32>
    %13 = vector.shape_cast %12 : vector<16x16x4xf32> to vector<256x4xf32>
    %c0_9 = arith.constant 0 : index
    %c1_10 = arith.constant 1 : index
    %c0_11 = arith.constant 0 : index
    %c0_12 = arith.constant 0 : index
    %14 = vector.load %arg3[%c0_9, %c1_10, %c0_11, %c0_12] : memref<3x3x4x128xf32, #tpu.memory_space<vmem>>, vector<1x1x4x128xf32>
    %15 = vector.shape_cast %14 : vector<1x1x4x128xf32> to vector<4x128xf32>
    %cst_13 = arith.constant dense<0.000000e+00> : vector<256x128xf32>
    %16 = tpu.matmul %13, %15, %cst_13 {dimension_numbers = #tpu.dot_dimension_numbers<[1], [0], [0], [1], [0, 0, 1, 1], [], []>} : vector<256x4xf32>, vector<4x128xf32>, vector<256x128xf32> -> vector<256x128xf32>
    %17 = arith.addf %8, %16 : vector<256x128xf32>
    %c0_i32_14 = arith.constant 0 : i32
    %18 = arith.addi %0, %c0_i32_14 : i32
    %c0_15 = arith.constant 0 : index
    %19 = arith.index_cast %18 : i32 to index
    %c2 = arith.constant 2 : index
    %c0_16 = arith.constant 0 : index
    %20 = vector.load %arg2[%c0_15, %19, %c2, %c0_16] : memref<1x18x18x4xf32, #tpu.memory_space<vmem>>, vector<1x16x16x4xf32>
    %21 = vector.shape_cast %20 : vector<1x16x16x4xf32> to vector<16x16x4xf32>
    %22 = vector.shape_cast %21 : vector<16x16x4xf32> to vector<256x4xf32>
    %c0_17 = arith.constant 0 : index
    %c2_18 = arith.constant 2 : index
    %c0_19 = arith.constant 0 : index
    %c0_20 = arith.constant 0 : index
    %23 = vector.load %arg3[%c0_17, %c2_18, %c0_19, %c0_20] : memref<3x3x4x128xf32, #tpu.memory_space<vmem>>, vector<1x1x4x128xf32>
    %24 = vector.shape_cast %23 : vector<1x1x4x128xf32> to vector<4x128xf32>
    %cst_21 = arith.constant dense<0.000000e+00> : vector<256x128xf32>
    %25 = tpu.matmul %22, %24, %cst_21 {dimension_numbers = #tpu.dot_dimension_numbers<[1], [0], [0], [1], [0, 0, 1, 1], [], []>} : vector<256x4xf32>, vector<4x128xf32>, vector<256x128xf32> -> vector<256x128xf32>
    %26 = arith.addf %17, %25 : vector<256x128xf32>
    %c1_i32 = arith.constant 1 : i32
    %27 = arith.addi %0, %c1_i32 : i32
    %c0_22 = arith.constant 0 : index
    %28 = arith.index_cast %27 : i32 to index
    %c0_23 = arith.constant 0 : index
    %c0_24 = arith.constant 0 : index
    %29 = vector.load %arg2[%c0_22, %28, %c0_23, %c0_24] : memref<1x18x18x4xf32, #tpu.memory_space<vmem>>, vector<1x16x16x4xf32>
    %30 = vector.shape_cast %29 : vector<1x16x16x4xf32> to vector<16x16x4xf32>
    %31 = vector.shape_cast %30 : vector<16x16x4xf32> to vector<256x4xf32>
    %c1_25 = arith.constant 1 : index
    %c0_26 = arith.constant 0 : index
    %c0_27 = arith.constant 0 : index
    %c0_28 = arith.constant 0 : index
    %32 = vector.load %arg3[%c1_25, %c0_26, %c0_27, %c0_28] : memref<3x3x4x128xf32, #tpu.memory_space<vmem>>, vector<1x1x4x128xf32>
    %33 = vector.shape_cast %32 : vector<1x1x4x128xf32> to vector<4x128xf32>
    %cst_29 = arith.constant dense<0.000000e+00> : vector<256x128xf32>
    %34 = tpu.matmul %31, %33, %cst_29 {dimension_numbers = #tpu.dot_dimension_numbers<[1], [0], [0], [1], [0, 0, 1, 1], [], []>} : vector<256x4xf32>, vector<4x128xf32>, vector<256x128xf32> -> vector<256x128xf32>
    %35 = arith.addf %26, %34 : vector<256x128xf32>
    %c1_i32_30 = arith.constant 1 : i32
    %36 = arith.addi %0, %c1_i32_30 : i32
    %c0_31 = arith.constant 0 : index
    %37 = arith.index_cast %36 : i32 to index
    %c1_32 = arith.constant 1 : index
    %c0_33 = arith.constant 0 : index
    %38 = vector.load %arg2[%c0_31, %37, %c1_32, %c0_33] : memref<1x18x18x4xf32, #tpu.memory_space<vmem>>, vector<1x16x16x4xf32>
    %39 = vector.shape_cast %38 : vector<1x16x16x4xf32> to vector<16x16x4xf32>
    %40 = vector.shape_cast %39 : vector<16x16x4xf32> to vector<256x4xf32>
    %c1_34 = arith.constant 1 : index
    %c1_35 = arith.constant 1 : index
    %c0_36 = arith.constant 0 : index
    %c0_37 = arith.constant 0 : index
    %41 = vector.load %arg3[%c1_34, %c1_35, %c0_36, %c0_37] : memref<3x3x4x128xf32, #tpu.memory_space<vmem>>, vector<1x1x4x128xf32>
    %42 = vector.shape_cast %41 : vector<1x1x4x128xf32> to vector<4x128xf32>
    %cst_38 = arith.constant dense<0.000000e+00> : vector<256x128xf32>
    %43 = tpu.matmul %40, %42, %cst_38 {dimension_numbers = #tpu.dot_dimension_numbers<[1], [0], [0], [1], [0, 0, 1, 1], [], []>} : vector<256x4xf32>, vector<4x128xf32>, vector<256x128xf32> -> vector<256x128xf32>
    %44 = arith.addf %35, %43 : vector<256x128xf32>
    %c1_i32_39 = arith.constant 1 : i32
    %45 = arith.addi %0, %c1_i32_39 : i32
    %c0_40 = arith.constant 0 : index
    %46 = arith.index_cast %45 : i32 to index
    %c2_41 = arith.constant 2 : index
    %c0_42 = arith.constant 0 : index
    %47 = vector.load %arg2[%c0_40, %46, %c2_41, %c0_42] : memref<1x18x18x4xf32, #tpu.memory_space<vmem>>, vector<1x16x16x4xf32>
    %48 = vector.shape_cast %47 : vector<1x16x16x4xf32> to vector<16x16x4xf32>
    %49 = vector.shape_cast %48 : vector<16x16x4xf32> to vector<256x4xf32>
    %c1_43 = arith.constant 1 : index
    %c2_44 = arith.constant 2 : index
    %c0_45 = arith.constant 0 : index
    %c0_46 = arith.constant 0 : index
    %50 = vector.load %arg3[%c1_43, %c2_44, %c0_45, %c0_46] : memref<3x3x4x128xf32, #tpu.memory_space<vmem>>, vector<1x1x4x128xf32>
    %51 = vector.shape_cast %50 : vector<1x1x4x128xf32> to vector<4x128xf32>
    %cst_47 = arith.constant dense<0.000000e+00> : vector<256x128xf32>
    %52 = tpu.matmul %49, %51, %cst_47 {dimension_numbers = #tpu.dot_dimension_numbers<[1], [0], [0], [1], [0, 0, 1, 1], [], []>} : vector<256x4xf32>, vector<4x128xf32>, vector<256x128xf32> -> vector<256x128xf32>
    %53 = arith.addf %44, %52 : vector<256x128xf32>
    %c2_i32 = arith.constant 2 : i32
    %54 = arith.addi %0, %c2_i32 : i32
    %c0_48 = arith.constant 0 : index
    %55 = arith.index_cast %54 : i32 to index
    %c0_49 = arith.constant 0 : index
    %c0_50 = arith.constant 0 : index
    %56 = vector.load %arg2[%c0_48, %55, %c0_49, %c0_50] : memref<1x18x18x4xf32, #tpu.memory_space<vmem>>, vector<1x16x16x4xf32>
    %57 = vector.shape_cast %56 : vector<1x16x16x4xf32> to vector<16x16x4xf32>
    %58 = vector.shape_cast %57 : vector<16x16x4xf32> to vector<256x4xf32>
    %c2_51 = arith.constant 2 : index
    %c0_52 = arith.constant 0 : index
    %c0_53 = arith.constant 0 : index
    %c0_54 = arith.constant 0 : index
    %59 = vector.load %arg3[%c2_51, %c0_52, %c0_53, %c0_54] : memref<3x3x4x128xf32, #tpu.memory_space<vmem>>, vector<1x1x4x128xf32>
    %60 = vector.shape_cast %59 : vector<1x1x4x128xf32> to vector<4x128xf32>
    %cst_55 = arith.constant dense<0.000000e+00> : vector<256x128xf32>
    %61 = tpu.matmul %58, %60, %cst_55 {dimension_numbers = #tpu.dot_dimension_numbers<[1], [0], [0], [1], [0, 0, 1, 1], [], []>} : vector<256x4xf32>, vector<4x128xf32>, vector<256x128xf32> -> vector<256x128xf32>
    %62 = arith.addf %53, %61 : vector<256x128xf32>
    %c2_i32_56 = arith.constant 2 : i32
    %63 = arith.addi %0, %c2_i32_56 : i32
    %c0_57 = arith.constant 0 : index
    %64 = arith.index_cast %63 : i32 to index
    %c1_58 = arith.constant 1 : index
    %c0_59 = arith.constant 0 : index
    %65 = vector.load %arg2[%c0_57, %64, %c1_58, %c0_59] : memref<1x18x18x4xf32, #tpu.memory_space<vmem>>, vector<1x16x16x4xf32>
    %66 = vector.shape_cast %65 : vector<1x16x16x4xf32> to vector<16x16x4xf32>
    %67 = vector.shape_cast %66 : vector<16x16x4xf32> to vector<256x4xf32>
    %c2_60 = arith.constant 2 : index
    %c1_61 = arith.constant 1 : index
    %c0_62 = arith.constant 0 : index
    %c0_63 = arith.constant 0 : index
    %68 = vector.load %arg3[%c2_60, %c1_61, %c0_62, %c0_63] : memref<3x3x4x128xf32, #tpu.memory_space<vmem>>, vector<1x1x4x128xf32>
    %69 = vector.shape_cast %68 : vector<1x1x4x128xf32> to vector<4x128xf32>
    %cst_64 = arith.constant dense<0.000000e+00> : vector<256x128xf32>
    %70 = tpu.matmul %67, %69, %cst_64 {dimension_numbers = #tpu.dot_dimension_numbers<[1], [0], [0], [1], [0, 0, 1, 1], [], []>} : vector<256x4xf32>, vector<4x128xf32>, vector<256x128xf32> -> vector<256x128xf32>
    %71 = arith.addf %62, %70 : vector<256x128xf32>
    %c2_i32_65 = arith.constant 2 : i32
    %72 = arith.addi %0, %c2_i32_65 : i32
    %c0_66 = arith.constant 0 : index
    %73 = arith.index_cast %72 : i32 to index
    %c2_67 = arith.constant 2 : index
    %c0_68 = arith.constant 0 : index
    %74 = vector.load %arg2[%c0_66, %73, %c2_67, %c0_68] : memref<1x18x18x4xf32, #tpu.memory_space<vmem>>, vector<1x16x16x4xf32>
    %75 = vector.shape_cast %74 : vector<1x16x16x4xf32> to vector<16x16x4xf32>
    %76 = vector.shape_cast %75 : vector<16x16x4xf32> to vector<256x4xf32>
    %c2_69 = arith.constant 2 : index
    %c2_70 = arith.constant 2 : index
    %c0_71 = arith.constant 0 : index
    %c0_72 = arith.constant 0 : index
    %77 = vector.load %arg3[%c2_69, %c2_70, %c0_71, %c0_72] : memref<3x3x4x128xf32, #tpu.memory_space<vmem>>, vector<1x1x4x128xf32>
    %78 = vector.shape_cast %77 : vector<1x1x4x128xf32> to vector<4x128xf32>
    %cst_73 = arith.constant dense<0.000000e+00> : vector<256x128xf32>
    %79 = tpu.matmul %76, %78, %cst_73 {dimension_numbers = #tpu.dot_dimension_numbers<[1], [0], [0], [1], [0, 0, 1, 1], [], []>} : vector<256x4xf32>, vector<4x128xf32>, vector<256x128xf32> -> vector<256x128xf32>
    %80 = arith.addf %71, %79 : vector<256x128xf32>
    %c0_74 = arith.constant 0 : index
    %c0_75 = arith.constant 0 : index
    %c0_76 = arith.constant 0 : index
    %81 = vector.load %arg4[%c0_74, %c0_75, %c0_76] : memref<1x256x128xf32, #tpu.memory_space<vmem>>, vector<1x256x128xf32>
    %82 = vector.shape_cast %81 : vector<1x256x128xf32> to vector<256x128xf32>
    %83 = vector.shape_cast %80 : vector<256x128xf32> to vector<1x256x128xf32>
    tpu.vector_store %arg4[%c0_74, %c0_75, %c0_76], %83 {strides = array<i32>} : memref<1x256x128xf32, #tpu.memory_space<vmem>>, vector<1x256x128xf32>,
    %84 = vector.shape_cast %80 : vector<256x128xf32> to vector<32x8x128xf32>
    %cst_77 = arith.constant dense<0.000000e+00> : vector<8x128xf32>
    %85 = vector.multi_reduction <add>, %84, %cst_77 [0] : vector<32x8x128xf32> to vector<8x128xf32>
    %86 = arith.mulf %80, %80 : vector<256x128xf32>
    %87 = vector.shape_cast %86 : vector<256x128xf32> to vector<32x8x128xf32>
    %cst_78 = arith.constant dense<0.000000e+00> : vector<8x128xf32>
    %88 = vector.multi_reduction <add>, %87, %cst_78 [0] : vector<32x8x128xf32> to vector<8x128xf32>
    %c0_i32_79 = arith.constant 0 : i32
    %89 = arith.cmpi eq, %arg1, %c0_i32_79 : i32
    %90 = arith.extui %89 : i1 to i32
    %c0_i32_80 = arith.constant 0 : i32
    %91 = arith.cmpi ne, %90, %c0_i32_80 : i32
    scf.if %91 {
      %cst_97 = arith.constant 0.000000e+00 : f32
      %104 = vector.broadcast %cst_97 : f32 to vector<2x8x128xf32>
      %c0_98 = arith.constant 0 : index
      %c0_99 = arith.constant 0 : index
      %c0_100 = arith.constant 0 : index
      %c0_101 = arith.constant 0 : index
      %105 = vector.load %arg5[%c0_98, %c0_99, %c0_100, %c0_101] : memref<1x2x8x128xf32, #tpu.memory_space<vmem>>, vector<1x2x8x128xf32>
      %106 = vector.shape_cast %105 : vector<1x2x8x128xf32> to vector<2x8x128xf32>
      %107 = vector.shape_cast %104 : vector<2x8x128xf32> to vector<1x2x8x128xf32>
      tpu.vector_store %arg5[%c0_98, %c0_99, %c0_100, %c0_101], %107 {strides = array<i32>} : memref<1x2x8x128xf32, #tpu.memory_space<vmem>>, vector<1x2x8x128xf32>,
    } else {
    }
    %c0_81 = arith.constant 0 : index
    %c0_82 = arith.constant 0 : index
    %c0_83 = arith.constant 0 : index
    %c0_84 = arith.constant 0 : index
    %92 = vector.load %arg5[%c0_81, %c0_82, %c0_83, %c0_84] : memref<1x2x8x128xf32, #tpu.memory_space<vmem>>, vector<1x1x8x128xf32>
    %93 = vector.shape_cast %92 : vector<1x1x8x128xf32> to vector<8x128xf32>
    %94 = arith.addf %93, %85 : vector<8x128xf32>
    %c0_85 = arith.constant 0 : index
    %c0_86 = arith.constant 0 : index
    %c0_87 = arith.constant 0 : index
    %c0_88 = arith.constant 0 : index
    %95 = vector.load %arg5[%c0_85, %c0_86, %c0_87, %c0_88] : memref<1x2x8x128xf32, #tpu.memory_space<vmem>>, vector<1x1x8x128xf32>
    %96 = vector.shape_cast %95 : vector<1x1x8x128xf32> to vector<8x128xf32>
    %97 = vector.shape_cast %94 : vector<8x128xf32> to vector<1x1x8x128xf32>
    tpu.vector_store %arg5[%c0_85, %c0_86, %c0_87, %c0_88], %97 {strides = array<i32>} : memref<1x2x8x128xf32, #tpu.memory_space<vmem>>, vector<1x1x8x128xf32>,
    %c0_89 = arith.constant 0 : index
    %c1_90 = arith.constant 1 : index
    %c0_91 = arith.constant 0 : index
    %c0_92 = arith.constant 0 : index
    %98 = vector.load %arg5[%c0_89, %c1_90, %c0_91, %c0_92] : memref<1x2x8x128xf32, #tpu.memory_space<vmem>>, vector<1x1x8x128xf32>
    %99 = vector.shape_cast %98 : vector<1x1x8x128xf32> to vector<8x128xf32>
    %100 = arith.addf %99, %88 : vector<8x128xf32>
    %c0_93 = arith.constant 0 : index
    %c1_94 = arith.constant 1 : index
    %c0_95 = arith.constant 0 : index
    %c0_96 = arith.constant 0 : index
    %101 = vector.load %arg5[%c0_93, %c1_94, %c0_95, %c0_96] : memref<1x2x8x128xf32, #tpu.memory_space<vmem>>, vector<1x1x8x128xf32>
    %102 = vector.shape_cast %101 : vector<1x1x8x128xf32> to vector<8x128xf32>
    %103 = vector.shape_cast %100 : vector<8x128xf32> to vector<1x1x8x128xf32>
    tpu.vector_store %arg5[%c0_93, %c1_94, %c0_95, %c0_96], %103 {strides = array<i32>} : memref<1x2x8x128xf32, #tpu.memory_space<vmem>>, vector<1x1x8x128xf32>,
    return
  }
  func.func @transform_0(%arg0: i32, %arg1: i32) -> (i32, i32, i32, i32) {
    %c0_i32 = arith.constant 0 : i32
    %c0_i32_0 = arith.constant 0 : i32
    %c0_i32_1 = arith.constant 0 : i32
    %c0_i32_2 = arith.constant 0 : i32
    return %arg0, %c0_i32, %c0_i32_0, %c0_i32_1 : i32, i32, i32, i32
  }
  func.func @transform_1(%arg0: i32, %arg1: i32) -> (i32, i32, i32, i32) {
    %c0_i32 = arith.constant 0 : i32
    %c0_i32_0 = arith.constant 0 : i32
    %c0_i32_1 = arith.constant 0 : i32
    %c0_i32_2 = arith.constant 0 : i32
    %c0_i32_3 = arith.constant 0 : i32
    return %c0_i32, %c0_i32_0, %c0_i32_1, %c0_i32_2 : i32, i32, i32, i32
  }
  func.func @transform_2(%arg0: i32, %arg1: i32) -> (i32, i32, i32) {
    %c0_i32 = arith.constant 0 : i32
    %c0_i32_0 = arith.constant 0 : i32
    return %arg0, %arg1, %c0_i32 : i32, i32, i32
  }
  func.func @transform_3(%arg0: i32, %arg1: i32) -> (i32, i32, i32, i32) {
    %c0_i32 = arith.constant 0 : i32
    %c0_i32_0 = arith.constant 0 : i32
    %c0_i32_1 = arith.constant 0 : i32
    %c0_i32_2 = arith.constant 0 : i32
    return %arg0, %c0_i32, %c0_i32_0, %c0_i32_1 : i32, i32, i32, i32
  }
}

module attributes {stable_mosaic.version = 11 : i64} {
  func.func @_norm_act_kernel(%arg0: i32, %arg1: i32, %arg2: memref<1x256x128xf32, #tpu.memory_space<vmem>>, %arg3: memref<1x128xf32, #tpu.memory_space<vmem>>, %arg4: memref<1x128xf32, #tpu.memory_space<vmem>>, %arg5: memref<1x256x128xf32, #tpu.memory_space<vmem>>) attributes {dimension_semantics = [#tpu.dimension_semantics<parallel>, #tpu.dimension_semantics<parallel>], iteration_bounds = array<i64: 2, 1>, scalar_prefetch = 0 : i64, scratch_operands = 0 : i64, tpu.core_type = #tpu.core_type<tc>, window_params = [{transform_indices = @transform_0, window_bounds = array<i64: 1, 256, 128>}, {pipeline_mode = #tpu.pipeline_mode<synchronous>, transform_indices = @transform_1, window_bounds = array<i64: 1, 128>}, {pipeline_mode = #tpu.pipeline_mode<synchronous>, transform_indices = @transform_2, window_bounds = array<i64: 1, 128>}, {transform_indices = @transform_3, window_bounds = array<i64: 1, 256, 128>}]} {
    %c0 = arith.constant 0 : index
    %c0_0 = arith.constant 0 : index
    %c0_1 = arith.constant 0 : index
    %0 = vector.load %arg2[%c0, %c0_0, %c0_1] : memref<1x256x128xf32, #tpu.memory_space<vmem>>, vector<1x256x128xf32>
    %1 = vector.shape_cast %0 : vector<1x256x128xf32> to vector<256x128xf32>
    %c0_2 = arith.constant 0 : index
    %c0_3 = arith.constant 0 : index
    %2 = vector.load %arg3[%c0_2, %c0_3] : memref<1x128xf32, #tpu.memory_space<vmem>>, vector<1x128xf32>
    %3 = vector.broadcast %2 : vector<1x128xf32> to vector<256x128xf32>
    %4 = arith.mulf %1, %3 : vector<256x128xf32>
    %c0_4 = arith.constant 0 : index
    %c0_5 = arith.constant 0 : index
    %5 = vector.load %arg4[%c0_4, %c0_5] : memref<1x128xf32, #tpu.memory_space<vmem>>, vector<1x128xf32>
    %6 = vector.broadcast %5 : vector<1x128xf32> to vector<256x128xf32>
    %7 = arith.addf %4, %6 : vector<256x128xf32>
    %cst = arith.constant 0.000000e+00 : f32
    %8 = vector.broadcast %cst : f32 to vector<256x128xf32>
    %9 = arith.cmpf ogt, %7, %8 : vector<256x128xf32>
    %cst_6 = arith.constant 2.000000e-01 : f32
    %10 = vector.broadcast %cst_6 : f32 to vector<256x128xf32>
    %11 = arith.mulf %10, %7 : vector<256x128xf32>
    %12 = arith.select %9, %7, %11 : vector<256x128xi1>, vector<256x128xf32>
    %c0_7 = arith.constant 0 : index
    %c0_8 = arith.constant 0 : index
    %c0_9 = arith.constant 0 : index
    %13 = vector.load %arg5[%c0_7, %c0_8, %c0_9] : memref<1x256x128xf32, #tpu.memory_space<vmem>>, vector<1x256x128xf32>
    %14 = vector.shape_cast %13 : vector<1x256x128xf32> to vector<256x128xf32>
    %15 = vector.shape_cast %12 : vector<256x128xf32> to vector<1x256x128xf32>
    tpu.vector_store %arg5[%c0_7, %c0_8, %c0_9], %15 {strides = array<i32>} : memref<1x256x128xf32, #tpu.memory_space<vmem>>, vector<1x256x128xf32>,
    return
  }
  func.func @transform_0(%arg0: i32, %arg1: i32) -> (i32, i32, i32) {
    %c0_i32 = arith.constant 0 : i32
    %c0_i32_0 = arith.constant 0 : i32
    return %arg0, %arg1, %c0_i32 : i32, i32, i32
  }
  func.func @transform_1(%arg0: i32, %arg1: i32) -> (i32, i32) {
    %c0_i32 = arith.constant 0 : i32
    %c0_i32_0 = arith.constant 0 : i32
    %c0_i32_1 = arith.constant 0 : i32
    return %c0_i32, %c0_i32_0 : i32, i32
  }
  func.func @transform_2(%arg0: i32, %arg1: i32) -> (i32, i32) {
    %c0_i32 = arith.constant 0 : i32
    %c0_i32_0 = arith.constant 0 : i32
    %c0_i32_1 = arith.constant 0 : i32
    return %c0_i32, %c0_i32_0 : i32, i32
  }
  func.func @transform_3(%arg0: i32, %arg1: i32) -> (i32, i32, i32) {
    %c0_i32 = arith.constant 0 : i32
    %c0_i32_0 = arith.constant 0 : i32
    return %arg0, %arg1, %c0_i32 : i32, i32, i32
  }
}

</mosaic_0001>

<llo_original>
// kernel: conv_block_forward.3
$region0: #{conv_block_forward.3}
  #allocation0 [shape = 'u32[]', space=smem, size = 0x4, offset = 0x4, fixed_abs, tag = 'smem constant byte address 0x4 - core index']
  #allocation1 [shape = 'u32[144,128]{1,0:T(1,128)}', space=vmem, size = 0x12000, scoped, tag = 'internal scratch']
  %s0 = inlined_call_operand.vmem [shape: f32[2,256,128], index: 0, kind: input, shape index: {}]
  %s1 = inlined_call_operand.vmem [shape: f32[1,128], index: 1, kind: input, shape index: {}]
  %s2 = inlined_call_operand.vmem [shape: f32[1,128], index: 2, kind: input, shape index: {}]
  %s3 = inlined_call_operand.vmem [shape: f32[2,256,128], index: 3, kind: output, shape index: {}]
  %s4 = sld [smem:[#allocation0]]
  $region45: #{conv_block_forward.3} parent=0
    _
  %s6 = ssub.s32 1, %s4
  %s7 = scalar_select 0, %s6, %s4
  loop: start=0, step=1, limit=4
  $region2: #{conv_block_forward.3} parent=0 // loop_pre_header
    _
  $region3: #{conv_block_forward.3} parent=0 // loop_header
    %s9 = sphi 0, %s13
    %p10 = scmp.ge.s32.totalorder %s9, 4
    %s16 = sphi 0, %s28
    %s17 = sphi 0, %s24
    %s18 = sphi 0, %s16
    %s19 = sphi 0, %s17
    %s20 = sphi 0, %s18
    %s21 = sphi 0, %s19
    %s33 = sphi 0, %s35
    %s36 = sphi 0, %s33
    %s37 = sphi 0, %s36
    %s53 = sphi 0, %s37
    %s57 = sphi 0, %s57
    %s59 = sphi 0, %s57
    %s60 = sphi 0, %s59
    %s74 = sphi 0, %s60
    %s78 = sphi 0, %s78
    %s80 = sphi 0, %s78
    %s81 = sphi 0, %s80
    %s95 = sphi 0, %s81
    %s103 = sphi 0, %s105
    %s106 = sphi 0, %s103
    %s107 = sphi 0, %s106
    %s123 = sphi 0, %s107
  $region4: #{conv_block_forward.3} parent=0 // loop_header_branch
    %12 = sbr.rel (%p10) target = $region8
  $region5: #{conv_block_forward.3} parent=0 // loop_body
    %s14 = ssub.s32 %s9, 1
    %s15 = ssub.s32 %s9, 2
    %s22 = sadd.s32 1, %s17
    %p23 = scmp.ge.s32.totalorder %s22, 1
    %s24 = scalar_select %p23, 0, %s22
    %s25 = sadd.s32 1, %s16
    %s26 = scalar_select %p23, %s25, %s16
    %p27 = scmp.ge.s32.totalorder %s26, 2
    %s28 = scalar_select %p27, 0, %s26
    %s29 = ssub.s32 %s16, %s28
    %s30 = ssub.s32 %s17, %s24
    %s31 = sor.u32 %s29, %s30
    %p32 = scmp.eq.s32.totalorder %s31, 0
    %s34 = sadd.s32 %s33, 1
    %s35 = scalar_select %p32, %s33, %s34
    %p38 = pneg %p32
    %p39 = scmp.eq.s32.totalorder %s9, 1
    %p40 = por %p38, %p39
    %p41 = scmp.ne.s32.totalorder %s33, %s36
    %p42 = scmp.eq.s32.totalorder %s9, 0
    %p43 = por %p41, %p42
    %p44 = scmp.ne.s32.totalorder %s33, %s36
    %p45 = scmp.eq.s32.totalorder %s14, 1
    %p46 = por %p44, %p45
    %p47 = scmp.ne.s32.totalorder %s36, %s37
    %p48 = scmp.eq.s32.totalorder %s14, 0
    %p49 = por %p47, %p48
    %p50 = scmp.ne.s32.totalorder %s36, %s37
    %p51 = scmp.eq.s32.totalorder %s15, 1
    %p52 = por %p50, %p51
    %p54 = scmp.ne.s32.totalorder %s37, %s53
    %p55 = scmp.eq.s32.totalorder %s15, 0
    %p56 = por %p54, %p55
    %s58 = sadd.s32 %s57, 1
    %p61 = scmp.eq.s32.totalorder %s9, 1
    %p62 = scmp.ne.s32.totalorder %s57, %s59
    %p63 = scmp.eq.s32.totalorder %s9, 0
    %p64 = por %p62, %p63
    %p65 = scmp.ne.s32.totalorder %s57, %s59
    %p66 = scmp.eq.s32.totalorder %s14, 1
    %p67 = por %p65, %p66
    %p68 = scmp.ne.s32.totalorder %s59, %s60
    %p69 = scmp.eq.s32.totalorder %s14, 0
    %p70 = por %p68, %p69
    %p71 = scmp.ne.s32.totalorder %s59, %s60
    %p72 = scmp.eq.s32.totalorder %s15, 1
    %p73 = por %p71, %p72
    %p75 = scmp.ne.s32.totalorder %s60, %s74
    %p76 = scmp.eq.s32.totalorder %s15, 0
    %p77 = por %p75, %p76
    %s79 = sadd.s32 %s78, 1
    %p82 = scmp.eq.s32.totalorder %s9, 1
    %p83 = scmp.ne.s32.totalorder %s78, %s80
    %p84 = scmp.eq.s32.totalorder %s9, 0
    %p85 = por %p83, %p84
    %p86 = scmp.ne.s32.totalorder %s78, %s80
    %p87 = scmp.eq.s32.totalorder %s14, 1
    %p88 = por %p86, %p87
    %p89 = scmp.ne.s32.totalorder %s80, %s81
    %p90 = scmp.eq.s32.totalorder %s14, 0
    %p91 = por %p89, %p90
    %p92 = scmp.ne.s32.totalorder %s80, %s81
    %p93 = scmp.eq.s32.totalorder %s15, 1
    %p94 = por %p92, %p93
    %p96 = scmp.ne.s32.totalorder %s81, %s95
    %p97 = scmp.eq.s32.totalorder %s15, 0
    %p98 = por %p96, %p97
    %s99 = ssub.s32 %s16, %s28
    %s100 = ssub.s32 %s17, %s24
    %s101 = sor.u32 %s99, %s100
    %p102 = scmp.eq.s32.totalorder %s101, 0
    %s104 = sadd.s32 %s103, 1
    %s105 = scalar_select %p102, %s103, %s104
    %p108 = pneg %p102
    %p109 = scmp.eq.s32.totalorder %s9, 1
    %p110 = por %p108, %p109
    %p111 = scmp.ne.s32.totalorder %s103, %s106
    %p112 = scmp.eq.s32.totalorder %s9, 0
    %p113 = por %p111, %p112
    %p114 = scmp.ne.s32.totalorder %s103, %s106
    %p115 = scmp.eq.s32.totalorder %s14, 1
    %p116 = por %p114, %p115
    %p117 = scmp.ne.s32.totalorder %s106, %s107
    %p118 = scmp.eq.s32.totalorder %s14, 0
    %p119 = por %p117, %p118
    %p120 = scmp.ne.s32.totalorder %s106, %s107
    %p121 = scmp.eq.s32.totalorder %s15, 1
    %p122 = por %p120, %p121
    %p124 = scmp.ne.s32.totalorder %s107, %s123
    %p125 = scmp.eq.s32.totalorder %s15, 0
    %p126 = por %p124, %p125
    %p127 = scmp.le.s32.totalorder 1, %s9
    %p128 = scmp.lt.s32.totalorder %s9, 3
    %p129 = pnand %p127, %p128
    %p130 = pneg %p129
    // Predicated region
    $region9: #{conv_block_forward.3} parent=5 // pred_check
      _
    $region10: #{conv_block_forward.3} parent=5 // pred_check_branch
      %132 = sbr.rel (%p129) target = $region12
    $region11: #{conv_block_forward.3} parent=5 // pred_region
      %s133 = ssub.s32 %s9, 1
      // Predicated region
      $region13: #{conv_block_forward.3} parent=11 // pred_check
        %p134 = pneg %p70
      $region14: #{conv_block_forward.3} parent=11 // pred_check_branch
        %136 = sbr.rel (%p134) target = $region16
      $region15: #{conv_block_forward.3} parent=11 // pred_region
        _
      $region16: #{conv_block_forward.3} parent=11 // pred_fallthru
        _
      // Predicated region
      $region17: #{conv_block_forward.3} parent=11 // pred_check
        %p137 = pneg %p91
      $region18: #{conv_block_forward.3} parent=11 // pred_check_branch
        %139 = sbr.rel (%p137) target = $region20
      $region19: #{conv_block_forward.3} parent=11 // pred_region
        _
      $region20: #{conv_block_forward.3} parent=11 // pred_fallthru
        _
    $region12: #{conv_block_forward.3} parent=5 // pred_fallthru
      _
    %p140 = scmp.lt.s32.totalorder %s9, 2
    // Predicated region
    $region21: #{conv_block_forward.3} parent=5 // pred_check
      %p141 = pneg %p140
    $region22: #{conv_block_forward.3} parent=5 // pred_check_branch
      %143 = sbr.rel (%p141) target = $region24
    $region23: #{conv_block_forward.3} parent=5 // pred_region
      // Predicated region
      $region25: #{conv_block_forward.3} parent=23 // pred_check
        %p144 = pneg %p43
      $region26: #{conv_block_forward.3} parent=23 // pred_check_branch
        %146 = sbr.rel (%p144) target = $region28
      $region27: #{conv_block_forward.3} parent=23 // pred_region
        %s147 = smul.u32 32, %s17
        %p148 = scmp.lt.s32.totalorder %s16, 1
        %s149 = scalar_select %p148, %s16, 1
        %p150 = scmp.lt.s32.totalorder %s147, 31
        %s151 = scalar_select %p150, %s147, 31
        %s152 = smul.addr %s149, 32
        %s153 = sadd.s32 %s151, %s152
        %s154 = smul.addr %s153, 8
        %s155 = scalar_lea.vmem %s0, %s154
        %s156 = smul.u32 32, %s17
      $region28: #{conv_block_forward.3} parent=23 // pred_fallthru
        _
    $region24: #{conv_block_forward.3} parent=5 // pred_fallthru
      _
    %p157 = scmp.le.s32.totalorder 1, %s9
    %p158 = scmp.lt.s32.totalorder %s9, 3
    %p159 = pnand %p157, %p158
    %p160 = pneg %p159
    // Predicated region
    $region29: #{conv_block_forward.3} parent=5 // pred_check
      _
    $region30: #{conv_block_forward.3} parent=5 // pred_check_branch
      %162 = sbr.rel (%p159) target = $region32
    $region31: #{conv_block_forward.3} parent=5 // pred_region
      %s163 = ssub.s32 %s9, 1
      %s164 = smul.u32 32, %s19
      %p165 = scmp.lt.s32.totalorder %s18, 1
      %s166 = scalar_select %p165, %s18, 1
      %p167 = scmp.lt.s32.totalorder %s164, 31
      %s168 = scalar_select %p167, %s164, 31
      %s169 = smul.addr %s166, 32
      %s170 = sadd.s32 %s168, %s169
      %s171 = smul.addr %s170, 8
      %s172 = scalar_lea.vmem %s0, %s171
      %p173 = pneg %p49
      %p174 = pneg %p46
      %p175 = pneg %p70
      %p176 = pneg %p67
      %p177 = pneg %p91
      %p178 = pneg %p88
      %p179 = pneg %p119
      %p180 = pneg %p116
      %s181 = smul.u32 32, %s19
      %p182 = scmp.lt.s32.totalorder %s18, 1
      %s183 = scalar_select %p182, %s18, 1
      %p184 = scmp.lt.s32.totalorder %s181, 31
      %s185 = scalar_select %p184, %s181, 31
      %s186 = smul.addr %s183, 32
      %s187 = sadd.s32 %s185, %s186
      %s188 = smul.addr %s187, 8
      %s189 = scalar_lea.vmem %s3, %s188
      %s190 = smul.u32 32, %s19
      %p191 = scmp.lt.s32.totalorder %s18, 1
      %s192 = scalar_select %p191, %s18, 1
      %p193 = scmp.lt.s32.totalorder %s190, 31
      %s194 = scalar_select %p193, %s190, 31
      %s195 = smul.addr %s192, 32
      %s196 = sadd.s32 %s194, %s195
      %s197 = smul.addr %s196, 8
      %s198 = scalar_lea.vmem %s0, %s197
      %s199 = smul.u32 32, %s19
      %s200 = smul.u32 32, %s19
      %p201 = scmp.lt.s32.totalorder %s18, 1
      %s202 = scalar_select %p201, %s18, 1
      %p203 = scmp.lt.s32.totalorder %s200, 31
      %s204 = scalar_select %p203, %s200, 31
      %s205 = smul.addr %s202, 32
      %s206 = sadd.s32 %s204, %s205
      %s207 = smul.addr %s206, 8
      %s208 = scalar_lea.vmem %s3, %s207
      %s209 = smul.u32 32, %s19
      %v210 = vld [vmem:[%s198] sm:$0xff]
      %v211 = vld [vmem:[%s198 + $0x8] sm:$0xff]
      %v212 = vld [vmem:[%s198 + $0x10] sm:$0xff]
      %v213 = vld [vmem:[%s198 + $0x18] sm:$0xff]
      %v214 = vld [vmem:[%s198 + $0x20] sm:$0xff]
      %v215 = vld [vmem:[%s198 + $0x28] sm:$0xff]
      %v216 = vld [vmem:[%s198 + $0x30] sm:$0xff]
      %v217 = vld [vmem:[%s198 + $0x38] sm:$0xff]
      %v218 = vld [vmem:[%s198 + $0x40] sm:$0xff]
      %v219 = vld [vmem:[%s198 + $0x48] sm:$0xff]
      %v220 = vld [vmem:[%s198 + $0x50] sm:$0xff]
      %v221 = vld [vmem:[%s198 + $0x58] sm:$0xff]
      %v222 = vld [vmem:[%s198 + $0x60] sm:$0xff]
      %v223 = vld [vmem:[%s198 + $0x68] sm:$0xff]
      %v224 = vld [vmem:[%s198 + $0x70] sm:$0xff]
      %v225 = vld [vmem:[%s198 + $0x78] sm:$0xff]
      %v226 = vld [vmem:[%s198 + $0x80] sm:$0xff]
      %v227 = vld [vmem:[%s198 + $0x88] sm:$0xff]
      %v228 = vld [vmem:[%s198 + $0x90] sm:$0xff]
      %v229 = vld [vmem:[%s198 + $0x98] sm:$0xff]
      %v230 = vld [vmem:[%s198 + $0xa0] sm:$0xff]
      %v231 = vld [vmem:[%s198 + $0xa8] sm:$0xff]
      %v232 = vld [vmem:[%s198 + $0xb0] sm:$0xff]
      %v233 = vld [vmem:[%s198 + $0xb8] sm:$0xff]
      %v234 = vld [vmem:[%s198 + $0xc0] sm:$0xff]
      %v235 = vld [vmem:[%s198 + $0xc8] sm:$0xff]
      %v236 = vld [vmem:[%s198 + $0xd0] sm:$0xff]
      %v237 = vld [vmem:[%s198 + $0xd8] sm:$0xff]
      %v238 = vld [vmem:[%s198 + $0xe0] sm:$0xff]
      %v239 = vld [vmem:[%s198 + $0xe8] sm:$0xff]
      %v240 = vld [vmem:[%s198 + $0xf0] sm:$0xff]
      %v241 = vld [vmem:[%s198 + $0xf8] sm:$0xff]
      %v242 = vld [vmem:[%s1] sm:$0x1]
      %v244 = vlaneseq
      %v245 = vshrl.u32 %v244, 7
      %v246 = vsub.s32 0, %v245
      %v247 = vrot.slane %v242, %v246
      %v249 = vmul.f32 %v210, %v247
      %v250 = vmul.f32 %v211, %v247
      %v251 = vmul.f32 %v212, %v247
      %v252 = vmul.f32 %v213, %v247
      %v253 = vmul.f32 %v214, %v247
      %v254 = vmul.f32 %v215, %v247
      %v255 = vmul.f32 %v216, %v247
      %v256 = vmul.f32 %v217, %v247
      %v257 = vmul.f32 %v218, %v247
      %v258 = vmul.f32 %v219, %v247
      %v259 = vmul.f32 %v220, %v247
      %v260 = vmul.f32 %v221, %v247
      %v261 = vmul.f32 %v222, %v247
      %v262 = vmul.f32 %v223, %v247
      %v263 = vmul.f32 %v224, %v247
      %v264 = vmul.f32 %v225, %v247
      %v265 = vmul.f32 %v226, %v247
      %v266 = vmul.f32 %v227, %v247
      %v267 = vmul.f32 %v228, %v247
      %v268 = vmul.f32 %v229, %v247
      %v269 = vmul.f32 %v230, %v247
      %v270 = vmul.f32 %v231, %v247
      %v271 = vmul.f32 %v232, %v247
      %v272 = vmul.f32 %v233, %v247
      %v273 = vmul.f32 %v234, %v247
      %v274 = vmul.f32 %v235, %v247
      %v275 = vmul.f32 %v236, %v247
      %v276 = vmul.f32 %v237, %v247
      %v277 = vmul.f32 %v238, %v247
      %v278 = vmul.f32 %v239, %v247
      %v279 = vmul.f32 %v240, %v247
      %v280 = vmul.f32 %v241, %v247
      %v281 = vld [vmem:[%s2] sm:$0x1]
      %v283 = vlaneseq
      %v284 = vshrl.u32 %v283, 7
      %v285 = vsub.s32 0, %v284
      %v286 = vrot.slane %v281, %v285
      %v288 = vadd.f32 %v249, %v286
      %v289 = vadd.f32 %v250, %v286
      %v290 = vadd.f32 %v251, %v286
      %v291 = vadd.f32 %v252, %v286
      %v292 = vadd.f32 %v253, %v286
      %v293 = vadd.f32 %v254, %v286
      %v294 = vadd.f32 %v255, %v286
      %v295 = vadd.f32 %v256, %v286
      %v296 = vadd.f32 %v257, %v286
      %v297 = vadd.f32 %v258, %v286
      %v298 = vadd.f32 %v259, %v286
      %v299 = vadd.f32 %v260, %v286
      %v300 = vadd.f32 %v261, %v286
      %v301 = vadd.f32 %v262, %v286
      %v302 = vadd.f32 %v263, %v286
      %v303 = vadd.f32 %v264, %v286
      %v304 = vadd.f32 %v265, %v286
      %v305 = vadd.f32 %v266, %v286
      %v306 = vadd.f32 %v267, %v286
      %v307 = vadd.f32 %v268, %v286
      %v308 = vadd.f32 %v269, %v286
      %v309 = vadd.f32 %v270, %v286
      %v310 = vadd.f32 %v271, %v286
      %v311 = vadd.f32 %v272, %v286
      %v312 = vadd.f32 %v273, %v286
      %v313 = vadd.f32 %v274, %v286
      %v314 = vadd.f32 %v275, %v286
      %v315 = vadd.f32 %v276, %v286
      %v316 = vadd.f32 %v277, %v286
      %v317 = vadd.f32 %v278, %v286
      %v318 = vadd.f32 %v279, %v286
      %v319 = vadd.f32 %v280, %v286
      %vm320 = vcmp.gt.f32.partialorder %v288, 0.0
      %vm321 = vcmp.gt.f32.partialorder %v289, 0.0
      %vm322 = vcmp.gt.f32.partialorder %v290, 0.0
      %vm323 = vcmp.gt.f32.partialorder %v291, 0.0
      %vm324 = vcmp.gt.f32.partialorder %v292, 0.0
      %vm325 = vcmp.gt.f32.partialorder %v293, 0.0
      %vm326 = vcmp.gt.f32.partialorder %v294, 0.0
      %vm327 = vcmp.gt.f32.partialorder %v295, 0.0
      %vm328 = vcmp.gt.f32.partialorder %v296, 0.0
      %vm329 = vcmp.gt.f32.partialorder %v297, 0.0
      %vm330 = vcmp.gt.f32.partialorder %v298, 0.0
      %vm331 = vcmp.gt.f32.partialorder %v299, 0.0
      %vm332 = vcmp.gt.f32.partialorder %v300, 0.0
      %vm333 = vcmp.gt.f32.partialorder %v301, 0.0
      %vm334 = vcmp.gt.f32.partialorder %v302, 0.0
      %vm335 = vcmp.gt.f32.partialorder %v303, 0.0
      %vm336 = vcmp.gt.f32.partialorder %v304, 0.0
      %vm337 = vcmp.gt.f32.partialorder %v305, 0.0
      %vm338 = vcmp.gt.f32.partialorder %v306, 0.0
      %vm339 = vcmp.gt.f32.partialorder %v307, 0.0
      %vm340 = vcmp.gt.f32.partialorder %v308, 0.0
      %vm341 = vcmp.gt.f32.partialorder %v309, 0.0
      %vm342 = vcmp.gt.f32.partialorder %v310, 0.0
      %vm343 = vcmp.gt.f32.partialorder %v311, 0.0
      %vm344 = vcmp.gt.f32.partialorder %v312, 0.0
      %vm345 = vcmp.gt.f32.partialorder %v313, 0.0
      %vm346 = vcmp.gt.f32.partialorder %v314, 0.0
      %vm347 = vcmp.gt.f32.partialorder %v315, 0.0
      %vm348 = vcmp.gt.f32.partialorder %v316, 0.0
      %vm349 = vcmp.gt.f32.partialorder %v317, 0.0
      %vm350 = vcmp.gt.f32.partialorder %v318, 0.0
      %vm351 = vcmp.gt.f32.partialorder %v319, 0.0
      %v352 = vmul.f32 %v288, 0.2
      %v353 = vmul.f32 %v289, 0.2
      %v354 = vmul.f32 %v290, 0.2
      %v355 = vmul.f32 %v291, 0.2
      %v356 = vmul.f32 %v292, 0.2
      %v357 = vmul.f32 %v293, 0.2
      %v358 = vmul.f32 %v294, 0.2
      %v359 = vmul.f32 %v295, 0.2
      %v360 = vmul.f32 %v296, 0.2
      %v361 = vmul.f32 %v297, 0.2
      %v362 = vmul.f32 %v298, 0.2
      %v363 = vmul.f32 %v299, 0.2
      %v364 = vmul.f32 %v300, 0.2
      %v365 = vmul.f32 %v301, 0.2
      %v366 = vmul.f32 %v302, 0.2
      %v367 = vmul.f32 %v303, 0.2
      %v368 = vmul.f32 %v304, 0.2
      %v369 = vmul.f32 %v305, 0.2
      %v370 = vmul.f32 %v306, 0.2
      %v371 = vmul.f32 %v307, 0.2
      %v372 = vmul.f32 %v308, 0.2
      %v373 = vmul.f32 %v309, 0.2
      %v374 = vmul.f32 %v310, 0.2
      %v375 = vmul.f32 %v311, 0.2
      %v376 = vmul.f32 %v312, 0.2
      %v377 = vmul.f32 %v313, 0.2
      %v378 = vmul.f32 %v314, 0.2
      %v379 = vmul.f32 %v315, 0.2
      %v380 = vmul.f32 %v316, 0.2
      %v381 = vmul.f32 %v317, 0.2
      %v382 = vmul.f32 %v318, 0.2
      %v383 = vmul.f32 %v319, 0.2
      %v384 = vsel %vm320, %v288, %v352
      %v385 = vsel %vm321, %v289, %v353
      %v386 = vsel %vm322, %v290, %v354
      %v387 = vsel %vm323, %v291, %v355
      %v388 = vsel %vm324, %v292, %v356
      %v389 = vsel %vm325, %v293, %v357
      %v390 = vsel %vm326, %v294, %v358
      %v391 = vsel %vm327, %v295, %v359
      %v392 = vsel %vm328, %v296, %v360
      %v393 = vsel %vm329, %v297, %v361
      %v394 = vsel %vm330, %v298, %v362
      %v395 = vsel %vm331, %v299, %v363
      %v396 = vsel %vm332, %v300, %v364
      %v397 = vsel %vm333, %v301, %v365
      %v398 = vsel %vm334, %v302, %v366
      %v399 = vsel %vm335, %v303, %v367
      %v400 = vsel %vm336, %v304, %v368
      %v401 = vsel %vm337, %v305, %v369
      %v402 = vsel %vm338, %v306, %v370
      %v403 = vsel %vm339, %v307, %v371
      %v404 = vsel %vm340, %v308, %v372
      %v405 = vsel %vm341, %v309, %v373
      %v406 = vsel %vm342, %v310, %v374
      %v407 = vsel %vm343, %v311, %v375
      %v408 = vsel %vm344, %v312, %v376
      %v409 = vsel %vm345, %v313, %v377
      %v410 = vsel %vm346, %v314, %v378
      %v411 = vsel %vm347, %v315, %v379
      %v412 = vsel %vm348, %v316, %v380
      %v413 = vsel %vm349, %v317, %v381
      %v414 = vsel %vm350, %v318, %v382
      %v415 = vsel %vm351, %v319, %v383
      %416 = vst [vmem:[%s208] sm:$0xff] %v384
      %417 = vst [vmem:[%s208 + $0x8] sm:$0xff] %v385
      %418 = vst [vmem:[%s208 + $0x10] sm:$0xff] %v386
      %419 = vst [vmem:[%s208 + $0x18] sm:$0xff] %v387
      %420 = vst [vmem:[%s208 + $0x20] sm:$0xff] %v388
      %421 = vst [vmem:[%s208 + $0x28] sm:$0xff] %v389
      %422 = vst [vmem:[%s208 + $0x30] sm:$0xff] %v390
      %423 = vst [vmem:[%s208 + $0x38] sm:$0xff] %v391
      %424 = vst [vmem:[%s208 + $0x40] sm:$0xff] %v392
      %425 = vst [vmem:[%s208 + $0x48] sm:$0xff] %v393
      %426 = vst [vmem:[%s208 + $0x50] sm:$0xff] %v394
      %427 = vst [vmem:[%s208 + $0x58] sm:$0xff] %v395
      %428 = vst [vmem:[%s208 + $0x60] sm:$0xff] %v396
      %429 = vst [vmem:[%s208 + $0x68] sm:$0xff] %v397
      %430 = vst [vmem:[%s208 + $0x70] sm:$0xff] %v398
      %431 = vst [vmem:[%s208 + $0x78] sm:$0xff] %v399
      %432 = vst [vmem:[%s208 + $0x80] sm:$0xff] %v400
      %433 = vst [vmem:[%s208 + $0x88] sm:$0xff] %v401
      %434 = vst [vmem:[%s208 + $0x90] sm:$0xff] %v402
      %435 = vst [vmem:[%s208 + $0x98] sm:$0xff] %v403
      %436 = vst [vmem:[%s208 + $0xa0] sm:$0xff] %v404
      %437 = vst [vmem:[%s208 + $0xa8] sm:$0xff] %v405
      %438 = vst [vmem:[%s208 + $0xb0] sm:$0xff] %v406
      %439 = vst [vmem:[%s208 + $0xb8] sm:$0xff] %v407
      %440 = vst [vmem:[%s208 + $0xc0] sm:$0xff] %v408
      %441 = vst [vmem:[%s208 + $0xc8] sm:$0xff] %v409
      %442 = vst [vmem:[%s208 + $0xd0] sm:$0xff] %v410
      %443 = vst [vmem:[%s208 + $0xd8] sm:$0xff] %v411
      %444 = vst [vmem:[%s208 + $0xe0] sm:$0xff] %v412
      %445 = vst [vmem:[%s208 + $0xe8] sm:$0xff] %v413
      %446 = vst [vmem:[%s208 + $0xf0] sm:$0xff] %v414
      %447 = vst [vmem:[%s208 + $0xf8] sm:$0xff] %v415
      %s448 = smul.u32 32, %s19
      %p449 = scmp.lt.s32.totalorder %s18, 1
      %s450 = scalar_select %p449, %s18, 1
      %p451 = scmp.lt.s32.totalorder %s448, 31
      %s452 = scalar_select %p451, %s448, 31
      %s453 = smul.addr %s450, 32
      %s454 = sadd.s32 %s452, %s453
      %s455 = smul.addr %s454, 8
      %s456 = scalar_lea.vmem %s3, %s455
      // Predicated region
      $region33: #{conv_block_forward.3} parent=31 // pred_check
        %p457 = pneg %p116
      $region34: #{conv_block_forward.3} parent=31 // pred_check_branch
        %459 = sbr.rel (%p457) target = $region36
      $region35: #{conv_block_forward.3} parent=31 // pred_region
        %s460 = smul.u32 32, %s19
      $region36: #{conv_block_forward.3} parent=31 // pred_fallthru
        _
    $region32: #{conv_block_forward.3} parent=5 // pred_fallthru
      _
    %p461 = scmp.le.s32.totalorder 2, %s9
    // Predicated region
    $region37: #{conv_block_forward.3} parent=5 // pred_check
      %p462 = pneg %p461
    $region38: #{conv_block_forward.3} parent=5 // pred_check_branch
      %464 = sbr.rel (%p462) target = $region40
    $region39: #{conv_block_forward.3} parent=5 // pred_region
      %s465 = ssub.s32 %s9, 2
      // Predicated region
      $region41: #{conv_block_forward.3} parent=39 // pred_check
        %p466 = pneg %p122
      $region42: #{conv_block_forward.3} parent=39 // pred_check_branch
        %468 = sbr.rel (%p466) target = $region44
      $region43: #{conv_block_forward.3} parent=39 // pred_region
        %s469 = smul.u32 32, %s21
        %p470 = scmp.lt.s32.totalorder %s20, 1
        %s471 = scalar_select %p470, %s20, 1
        %p472 = scmp.lt.s32.totalorder %s469, 31
        %s473 = scalar_select %p472, %s469, 31
        %s474 = smul.addr %s471, 32
        %s475 = sadd.s32 %s473, %s474
        %s476 = smul.addr %s475, 8
        %s477 = scalar_lea.vmem %s3, %s476
      $region44: #{conv_block_forward.3} parent=39 // pred_fallthru
        _
    $region40: #{conv_block_forward.3} parent=5 // pred_fallthru
      _
  $region6: #{conv_block_forward.3} parent=0 // loop_footer
    %s13 = sadd.s32 1, %s9
  $region7: #{conv_block_forward.3} parent=0 // loop_footer_branch
    %8 = sbr.rel target = $region3
  $region8: #{conv_block_forward.3} parent=0 // loop_exit
    _

// kernel: conv_block_forward.2
$region0: #{conv_block_forward.2}
  #allocation0 [shape = 'u32[]', space=smem, size = 0x4, offset = 0x4, fixed_abs, tag = 'smem constant byte address 0x4 - core index']
  #allocation1 [shape = 'u32[144,128]{1,0:T(1,128)}', space=vmem, size = 0x12000, scoped, tag = 'internal scratch']
  %s0 = inlined_call_operand.vmem [shape: f32[2,18,18,4], index: 0, kind: input, shape index: {}]
  %s1 = inlined_call_operand.vmem [shape: f32[3,3,4,128], index: 1, kind: input, shape index: {}]
  %s2 = inlined_call_operand.vmem [shape: f32[2,256,128], index: 2, kind: output, shape index: {0}]
  %s3 = inlined_call_operand.vmem [shape: f32[2,2,8,128], index: 3, kind: output, shape index: {1}]
  %4 = xla_tuple %s2, %s3
  %s5 = sld [smem:[#allocation0]]
  $region53: #{conv_block_forward.2} parent=0
    _
  %s7 = ssub.s32 1, %s5
  %s8 = scalar_select 0, %s7, %s5
  loop: start=0, step=1, limit=4
  $region2: #{conv_block_forward.2} parent=0 // loop_pre_header
    _
  $region3: #{conv_block_forward.2} parent=0 // loop_header
    %s10 = sphi 0, %s14
    %p11 = scmp.ge.s32.totalorder %s10, 4
    %s17 = sphi 0, %s29
    %s18 = sphi 0, %s25
    %s19 = sphi 0, %s17
    %s20 = sphi 0, %s18
    %s21 = sphi 0, %s19
    %s22 = sphi 0, %s20
    %s32 = sphi 0, %s34
    %s35 = sphi 0, %s32
    %s36 = sphi 0, %s35
    %s52 = sphi 0, %s36
    %s56 = sphi 0, %s56
    %s58 = sphi 0, %s56
    %s59 = sphi 0, %s58
    %s73 = sphi 0, %s59
    %s81 = sphi 0, %s83
    %s84 = sphi 0, %s81
    %s85 = sphi 0, %s84
    %s101 = sphi 0, %s85
    %s107 = sphi 0, %s109
    %s110 = sphi 0, %s107
    %s111 = sphi 0, %s110
    %s127 = sphi 0, %s111
  $region4: #{conv_block_forward.2} parent=0 // loop_header_branch
    %13 = sbr.rel (%p11) target = $region8
  $region5: #{conv_block_forward.2} parent=0 // loop_body
    %s15 = ssub.s32 %s10, 1
    %s16 = ssub.s32 %s10, 2
    %s23 = sadd.s32 1, %s18
    %p24 = scmp.ge.s32.totalorder %s23, 1
    %s25 = scalar_select %p24, 0, %s23
    %s26 = sadd.s32 1, %s17
    %s27 = scalar_select %p24, %s26, %s17
    %p28 = scmp.ge.s32.totalorder %s27, 2
    %s29 = scalar_select %p28, 0, %s27
    %s30 = ssub.s32 %s17, %s29
    %p31 = scmp.eq.s32.totalorder %s30, 0
    %s33 = sadd.s32 %s32, 1
    %s34 = scalar_select %p31, %s32, %s33
    %p37 = pneg %p31
    %p38 = scmp.eq.s32.totalorder %s10, 1
    %p39 = por %p37, %p38
    %p40 = scmp.ne.s32.totalorder %s32, %s35
    %p41 = scmp.eq.s32.totalorder %s10, 0
    %p42 = por %p40, %p41
    %p43 = scmp.ne.s32.totalorder %s32, %s35
    %p44 = scmp.eq.s32.totalorder %s15, 1
    %p45 = por %p43, %p44
    %p46 = scmp.ne.s32.totalorder %s35, %s36
    %p47 = scmp.eq.s32.totalorder %s15, 0
    %p48 = por %p46, %p47
    %p49 = scmp.ne.s32.totalorder %s35, %s36
    %p50 = scmp.eq.s32.totalorder %s16, 1
    %p51 = por %p49, %p50
    %p53 = scmp.ne.s32.totalorder %s36, %s52
    %p54 = scmp.eq.s32.totalorder %s16, 0
    %p55 = por %p53, %p54
    %s57 = sadd.s32 %s56, 1
    %p60 = scmp.eq.s32.totalorder %s10, 1
    %p61 = scmp.ne.s32.totalorder %s56, %s58
    %p62 = scmp.eq.s32.totalorder %s10, 0
    %p63 = por %p61, %p62
    %p64 = scmp.ne.s32.totalorder %s56, %s58
    %p65 = scmp.eq.s32.totalorder %s15, 1
    %p66 = por %p64, %p65
    %p67 = scmp.ne.s32.totalorder %s58, %s59
    %p68 = scmp.eq.s32.totalorder %s15, 0
    %p69 = por %p67, %p68
    %p70 = scmp.ne.s32.totalorder %s58, %s59
    %p71 = scmp.eq.s32.totalorder %s16, 1
    %p72 = por %p70, %p71
    %p74 = scmp.ne.s32.totalorder %s59, %s73
    %p75 = scmp.eq.s32.totalorder %s16, 0
    %p76 = por %p74, %p75
    %s77 = ssub.s32 %s17, %s29
    %s78 = ssub.s32 %s18, %s25
    %s79 = sor.u32 %s77, %s78
    %p80 = scmp.eq.s32.totalorder %s79, 0
    %s82 = sadd.s32 %s81, 1
    %s83 = scalar_select %p80, %s81, %s82
    %p86 = pneg %p80
    %p87 = scmp.eq.s32.totalorder %s10, 1
    %p88 = por %p86, %p87
    %p89 = scmp.ne.s32.totalorder %s81, %s84
    %p90 = scmp.eq.s32.totalorder %s10, 0
    %p91 = por %p89, %p90
    %p92 = scmp.ne.s32.totalorder %s81, %s84
    %p93 = scmp.eq.s32.totalorder %s15, 1
    %p94 = por %p92, %p93
    %p95 = scmp.ne.s32.totalorder %s84, %s85
    %p96 = scmp.eq.s32.totalorder %s15, 0
    %p97 = por %p95, %p96
    %p98 = scmp.ne.s32.totalorder %s84, %s85
    %p99 = scmp.eq.s32.totalorder %s16, 1
    %p100 = por %p98, %p99
    %p102 = scmp.ne.s32.totalorder %s85, %s101
    %p103 = scmp.eq.s32.totalorder %s16, 0
    %p104 = por %p102, %p103
    %s105 = ssub.s32 %s17, %s29
    %p106 = scmp.eq.s32.totalorder %s105, 0
    %s108 = sadd.s32 %s107, 1
    %s109 = scalar_select %p106, %s107, %s108
    %p112 = pneg %p106
    %p113 = scmp.eq.s32.totalorder %s10, 1
    %p114 = por %p112, %p113
    %p115 = scmp.ne.s32.totalorder %s107, %s110
    %p116 = scmp.eq.s32.totalorder %s10, 0
    %p117 = por %p115, %p116
    %p118 = scmp.ne.s32.totalorder %s107, %s110
    %p119 = scmp.eq.s32.totalorder %s15, 1
    %p120 = por %p118, %p119
    %p121 = scmp.ne.s32.totalorder %s110, %s111
    %p122 = scmp.eq.s32.totalorder %s15, 0
    %p123 = por %p121, %p122
    %p124 = scmp.ne.s32.totalorder %s110, %s111
    %p125 = scmp.eq.s32.totalorder %s16, 1
    %p126 = por %p124, %p125
    %p128 = scmp.ne.s32.totalorder %s111, %s127
    %p129 = scmp.eq.s32.totalorder %s16, 0
    %p130 = por %p128, %p129
    %p131 = scmp.le.s32.totalorder 1, %s10
    %p132 = scmp.lt.s32.totalorder %s10, 3
    %p133 = pnand %p131, %p132
    %p134 = pneg %p133
    // Predicated region
    $region9: #{conv_block_forward.2} parent=5 // pred_check
      _
    $region10: #{conv_block_forward.2} parent=5 // pred_check_branch
      %136 = sbr.rel (%p133) target = $region12
    $region11: #{conv_block_forward.2} parent=5 // pred_region
      %s137 = ssub.s32 %s10, 1
      // Predicated region
      $region13: #{conv_block_forward.2} parent=11 // pred_check
        %p138 = pneg %p69
      $region14: #{conv_block_forward.2} parent=11 // pred_check_branch
        %140 = sbr.rel (%p138) target = $region16
      $region15: #{conv_block_forward.2} parent=11 // pred_region
        _
      $region16: #{conv_block_forward.2} parent=11 // pred_fallthru
        _
    $region12: #{conv_block_forward.2} parent=5 // pred_fallthru
      _
    %p141 = scmp.lt.s32.totalorder %s10, 2
    // Predicated region
    $region17: #{conv_block_forward.2} parent=5 // pred_check
      %p142 = pneg %p141
    $region18: #{conv_block_forward.2} parent=5 // pred_check_branch
      %144 = sbr.rel (%p142) target = $region20
    $region19: #{conv_block_forward.2} parent=5 // pred_region
      // Predicated region
      $region21: #{conv_block_forward.2} parent=19 // pred_check
        %p145 = pneg %p42
      $region22: #{conv_block_forward.2} parent=19 // pred_check_branch
        %147 = sbr.rel (%p145) target = $region24
      $region23: #{conv_block_forward.2} parent=19 // pred_region
        %p148 = scmp.lt.s32.totalorder %s17, 1
        %s149 = scalar_select %p148, %s17, 1
        %s150 = smul.addr %s149, 54
        %s151 = smul.addr %s150, 8
        %s152 = scalar_lea.vmem %s0, %s151
      $region24: #{conv_block_forward.2} parent=19 // pred_fallthru
        _
    $region20: #{conv_block_forward.2} parent=5 // pred_fallthru
      _
    %p153 = scmp.le.s32.totalorder 1, %s10
    %p154 = scmp.lt.s32.totalorder %s10, 3
    %p155 = pnand %p153, %p154
    %p156 = pneg %p155
    // Predicated region
    $region25: #{conv_block_forward.2} parent=5 // pred_check
      _
    $region26: #{conv_block_forward.2} parent=5 // pred_check_branch
      %158 = sbr.rel (%p155) target = $region28
    $region27: #{conv_block_forward.2} parent=5 // pred_region
      %s159 = ssub.s32 %s10, 1
      %p160 = scmp.lt.s32.totalorder %s19, 1
      %s161 = scalar_select %p160, %s19, 1
      %s162 = smul.addr %s161, 54
      %s163 = smul.addr %s162, 8
      %s164 = scalar_lea.vmem %s0, %s163
      %p165 = pneg %p48
      %p166 = pneg %p45
      %p167 = pneg %p69
      %p168 = pneg %p66
      %p169 = pneg %p97
      %p170 = pneg %p94
      %s171 = smul.u32 32, %s20
      %p172 = scmp.lt.s32.totalorder %s19, 1
      %s173 = scalar_select %p172, %s19, 1
      %p174 = scmp.lt.s32.totalorder %s171, 31
      %s175 = scalar_select %p174, %s171, 31
      %s176 = smul.addr %s173, 32
      %s177 = sadd.s32 %s175, %s176
      %s178 = smul.addr %s177, 8
      %s179 = scalar_lea.vmem %s2, %s178
      %p180 = pneg %p123
      %p181 = pneg %p120
      %p182 = scmp.lt.s32.totalorder %s19, 1
      %s183 = scalar_select %p182, %s19, 1
      %s184 = smul.addr %s183, 2
      %s185 = smul.addr %s184, 8
      %s186 = scalar_lea.vmem %s3, %s185
      %p187 = scmp.lt.s32.totalorder %s19, 1
      %s188 = scalar_select %p187, %s19, 1
      %s189 = smul.addr %s188, 54
      %s190 = smul.addr %s189, 8
      %s191 = scalar_lea.vmem %s0, %s190
      %s192 = smul.u32 32, %s20
      %p193 = scmp.lt.s32.totalorder %s19, 1
      %s194 = scalar_select %p193, %s19, 1
      %p195 = scmp.lt.s32.totalorder %s192, 31
      %s196 = scalar_select %p195, %s192, 31
      %s197 = smul.addr %s194, 32
      %s198 = sadd.s32 %s196, %s197
      %s199 = smul.addr %s198, 8
      %s200 = scalar_lea.vmem %s2, %s199
      %s201 = smul.u32 32, %s20
      %p202 = scmp.lt.s32.totalorder %s19, 1
      %s203 = scalar_select %p202, %s19, 1
      %s204 = smul.addr %s203, 2
      %s205 = smul.addr %s204, 8
      %s206 = scalar_lea.vmem %s3, %s205
      %s207 = smul.u32 %s20, 16
      %s208 = smul.u32 %s207, 24
      %s209 = scalar_lea.vmem %s191, %s208
      %v210 = vld [vmem:[%s209] sm:$0xff]
      %v211 = vld [vmem:[%s209 + $0x8] sm:$0xff]
      %v212 = vld [vmem:[%s209 + $0x18] sm:$0xff]
      %v213 = vld [vmem:[%s209 + $0x20] sm:$0xff]
      %v214 = vld [vmem:[%s209 + $0x30] sm:$0xff]
      %v215 = vld [vmem:[%s209 + $0x38] sm:$0xff]
      %v216 = vld [vmem:[%s209 + $0x48] sm:$0xff]
      %v217 = vld [vmem:[%s209 + $0x50] sm:$0xff]
      %v218 = vld [vmem:[%s209 + $0x60] sm:$0xff]
      %v219 = vld [vmem:[%s209 + $0x68] sm:$0xff]
      %v220 = vld [vmem:[%s209 + $0x78] sm:$0xff]
      %v221 = vld [vmem:[%s209 + $0x80] sm:$0xff]
      %v222 = vld [vmem:[%s209 + $0x90] sm:$0xff]
      %v223 = vld [vmem:[%s209 + $0x98] sm:$0xff]
      %v224 = vld [vmem:[%s209 + $0xa8] sm:$0xff]
      %v225 = vld [vmem:[%s209 + $0xb0] sm:$0xff]
      %v226 = vld [vmem:[%s209 + $0xc0] sm:$0xff]
      %v227 = vld [vmem:[%s209 + $0xc8] sm:$0xff]
      %v228 = vld [vmem:[%s209 + $0xd8] sm:$0xff]
      %v229 = vld [vmem:[%s209 + $0xe0] sm:$0xff]
      %v230 = vld [vmem:[%s209 + $0xf0] sm:$0xff]
      %v231 = vld [vmem:[%s209 + $0xf8] sm:$0xff]
      %v232 = vld [vmem:[%s209 + $0x108] sm:$0xff]
      %v233 = vld [vmem:[%s209 + $0x110] sm:$0xff]
      %v234 = vld [vmem:[%s209 + $0x120] sm:$0xff]
      %v235 = vld [vmem:[%s209 + $0x128] sm:$0xff]
      %v236 = vld [vmem:[%s209 + $0x138] sm:$0xff]
      %v237 = vld [vmem:[%s209 + $0x140] sm:$0xff]
      %v238 = vld [vmem:[%s209 + $0x150] sm:$0xff]
      %v239 = vld [vmem:[%s209 + $0x158] sm:$0xff]
      %v240 = vld [vmem:[%s209 + $0x168] sm:$0xff]
      %v241 = vld [vmem:[%s209 + $0x170] sm:$0xff]
      %v242 = vld [vmem:[%s1] sm:$0xf]
      %v243 = vld [vmem:[%s209 + $0x1] sm:$0xff]
      %v244 = vld [vmem:[%s209 + $0x9] sm:$0xff]
      %v245 = vld [vmem:[%s209 + $0x19] sm:$0xff]
      %v246 = vld [vmem:[%s209 + $0x21] sm:$0xff]
      %v247 = vld [vmem:[%s209 + $0x31] sm:$0xff]
      %v248 = vld [vmem:[%s209 + $0x39] sm:$0xff]
      %v249 = vld [vmem:[%s209 + $0x49] sm:$0xff]
      %v250 = vld [vmem:[%s209 + $0x51] sm:$0xff]
      %v251 = vld [vmem:[%s209 + $0x61] sm:$0xff]
      %v252 = vld [vmem:[%s209 + $0x69] sm:$0xff]
      %v253 = vld [vmem:[%s209 + $0x79] sm:$0xff]
      %v254 = vld [vmem:[%s209 + $0x81] sm:$0xff]
      %v255 = vld [vmem:[%s209 + $0x91] sm:$0xff]
      %v256 = vld [vmem:[%s209 + $0x99] sm:$0xff]
      %v257 = vld [vmem:[%s209 + $0xa9] sm:$0xff]
      %v258 = vld [vmem:[%s209 + $0xb1] sm:$0xff]
      %v259 = vld [vmem:[%s209 + $0xc1] sm:$0xff]
      %v260 = vld [vmem:[%s209 + $0xc9] sm:$0xff]
      %v261 = vld [vmem:[%s209 + $0xd9] sm:$0xff]
      %v262 = vld [vmem:[%s209 + $0xe1] sm:$0xff]
      %v263 = vld [vmem:[%s209 + $0xf1] sm:$0xff]
      %v264 = vld [vmem:[%s209 + $0xf9] sm:$0xff]
      %v265 = vld [vmem:[%s209 + $0x109] sm:$0xff]
      %v266 = vld [vmem:[%s209 + $0x111] sm:$0xff]
      %v267 = vld [vmem:[%s209 + $0x121] sm:$0xff]
      %v268 = vld [vmem:[%s209 + $0x129] sm:$0xff]
      %v269 = vld [vmem:[%s209 + $0x139] sm:$0xff]
      %v270 = vld [vmem:[%s209 + $0x141] sm:$0xff]
      %v271 = vld [vmem:[%s209 + $0x151] sm:$0xff]
      %v272 = vld [vmem:[%s209 + $0x159] sm:$0xff]
      %v273 = vld [vmem:[%s209 + $0x169] sm:$0xff]
      %v274 = vld [vmem:[%s209 + $0x171] sm:$0xff]
      %s275 = scalar_lea.vmem %s1, 4
      %v276 = vld [vmem:[%s275] sm:$0xf]
      %vm277 = vcmask 31744
      %v279 = vsel %vm277, %v243, 0
      %v282 = vsel %vm277, %v244, 0
      %v285 = vsel %vm277, %v245, 0
      %v288 = vsel %vm277, %v246, 0
      %v291 = vsel %vm277, %v247, 0
      %v294 = vsel %vm277, %v248, 0
      %v297 = vsel %vm277, %v249, 0
      %v300 = vsel %vm277, %v250, 0
      %v303 = vsel %vm277, %v251, 0
      %v306 = vsel %vm277, %v252, 0
      %v309 = vsel %vm277, %v253, 0
      %v312 = vsel %vm277, %v254, 0
      %v315 = vsel %vm277, %v255, 0
      %v318 = vsel %vm277, %v256, 0
      %v321 = vsel %vm277, %v257, 0
      %v324 = vsel %vm277, %v258, 0
      %v327 = vsel %vm277, %v259, 0
      %v330 = vsel %vm277, %v260, 0
      %v333 = vsel %vm277, %v261, 0
      %v336 = vsel %vm277, %v262, 0
      %v339 = vsel %vm277, %v263, 0
      %v342 = vsel %vm277, %v264, 0
      %v345 = vsel %vm277, %v265, 0
      %v348 = vsel %vm277, %v266, 0
      %v351 = vsel %vm277, %v267, 0
      %v354 = vsel %vm277, %v268, 0
      %v357 = vsel %vm277, %v269, 0
      %v360 = vsel %vm277, %v270, 0
      %v363 = vsel %vm277, %v271, 0
      %v366 = vsel %vm277, %v272, 0
      %v369 = vsel %vm277, %v273, 0
      %v372 = vsel %vm277, %v274, 0
      %vm374 = vcmask 1043456
      %v376 = vsel %vm374, %v276, 0
      %378 = vmatprep.subr.mxu0 0.0
      %379 = vmatpush1.msra.mxu0 0.0
      %380 = vmatprep.subr.mxu0 0.0
      %381 = vmatpush1.msra.mxu0 0.0
      %382 = vmatprep.subr.mxu0 0.0
      %383 = vmatpush1.msra.mxu0 0.0
      %384 = vmatprep.subr.mxu0 0.0
      %385 = vmatpush1.msra.mxu0 0.0
      %386 = vmatprep.subr.mxu0 0.0
      %387 = vmatpush1.msra.mxu0 0.0
      %388 = vmatprep.subr.mxu0 0.0
      %389 = vmatpush1.msra.mxu0 0.0
      %390 = vmatprep.subr.mxu0 0.0
      %391 = vmatpush1.msra.mxu0 0.0
      %392 = vmatprep.subr.mxu0 0.0
      %393 = vmatpush1.msra.mxu0 0.0
      %394 = vmatprep.subr.mxu0 0.0
      %395 = vmatpush1.msra.mxu0 0.0
      %396 = vmatprep.subr.mxu0 0.0
      %397 = vmatpush1.msra.mxu0 0.0
      %398 = vmatprep.subr.mxu0 0.0
      %399 = vmatpush1.msra.mxu0 0.0
      %400 = vmatprep.subr.mxu0 0.0
      %401 = vmatpush1.msra.mxu0 0.0
      %402 = vmatprep.subr.mxu0 0.0
      %403 = vmatpush1.msra.mxu0 0.0
      %404 = vmatprep.subr.mxu0 0.0
      %405 = vmatpush1.msra.mxu0 0.0
      %406 = vmatprep.subr.mxu0 0.0
      %407 = vmatpush1.msra.mxu0 0.0
      %408 = vmatprep.subr.mxu0 0.0
      %409 = vmatpush1.msra.mxu0 %v376
      %410 = vmatprep.subr.mxu0 0.0
      %411 = vmatpush2.msra.mxu0 0.0
      %412 = vmatprep.subr.mxu0 0.0
      %413 = vmatpush2.msra.mxu0 0.0
      %414 = vmatprep.subr.mxu0 0.0
      %415 = vmatpush2.msra.mxu0 0.0
      %416 = vmatprep.subr.mxu0 0.0
      %417 = vmatpush2.msra.mxu0 0.0
      %418 = vmatprep.subr.mxu0 0.0
      %419 = vmatpush2.msra.mxu0 0.0
      %420 = vmatprep.subr.mxu0 0.0
      %421 = vmatpush2.msra.mxu0 0.0
      %422 = vmatprep.subr.mxu0 0.0
      %423 = vmatpush2.msra.mxu0 0.0
      %424 = vmatprep.subr.mxu0 0.0
      %425 = vmatpush2.msra.mxu0 0.0
      %426 = vmatprep.subr.mxu0 0.0
      %427 = vmatpush2.msra.mxu0 0.0
      %428 = vmatprep.subr.mxu0 0.0
      %429 = vmatpush2.msra.mxu0 0.0
      %430 = vmatprep.subr.mxu0 0.0
      %431 = vmatpush2.msra.mxu0 0.0
      %432 = vmatprep.subr.mxu0 0.0
      %433 = vmatpush2.msra.mxu0 0.0
      %434 = vmatprep.subr.mxu0 0.0
      %435 = vmatpush2.msra.mxu0 0.0
      %436 = vmatprep.subr.mxu0 0.0
      %437 = vmatpush2.msra.mxu0 0.0
      %438 = vmatprep.subr.mxu0 0.0
      %439 = vmatpush2.msra.mxu0 0.0
      %440 = vmatprep.subr.mxu0 0.0
      %441 = vmatpush2.msra.mxu0 0.0
      %442 = vmatprep.mubr.f32.mxu0 0.0
      %443 = vmatmul.mubr.f32.gmra.mxu0 %v279
      %v444 = vpop.f32.mrf.mxu0
      %v445 = vadd.f32 0.0, %v444
      %v446 = vpop.f32.mrf.mxu0
      %447 = vmatprep.mubr.f32.mxu0 0.0
      %448 = vmatmul.mubr.f32.gmra.mxu0 %v282
      %v449 = vpop.f32.mrf.mxu0
      %v450 = vadd.f32 0.0, %v449
      %v451 = vpop.f32.mrf.mxu0
      %452 = vmatprep.mubr.f32.mxu0 0.0
      %453 = vmatmul.mubr.f32.gmra.mxu0 %v285
      %v454 = vpop.f32.mrf.mxu0
      %v455 = vadd.f32 0.0, %v454
      %v456 = vpop.f32.mrf.mxu0
      %457 = vmatprep.mubr.f32.mxu0 0.0
      %458 = vmatmul.mubr.f32.gmra.mxu0 %v288
      %v459 = vpop.f32.mrf.mxu0
      %v460 = vadd.f32 0.0, %v459
      %v461 = vpop.f32.mrf.mxu0
      %462 = vmatprep.mubr.f32.mxu0 0.0
      %463 = vmatmul.mubr.f32.gmra.mxu0 %v291
      %v464 = vpop.f32.mrf.mxu0
      %v465 = vadd.f32 0.0, %v464
      %v466 = vpop.f32.mrf.mxu0
      %467 = vmatprep.mubr.f32.mxu0 0.0
      %468 = vmatmul.mubr.f32.gmra.mxu0 %v294
      %v469 = vpop.f32.mrf.mxu0
      %v470 = vadd.f32 0.0, %v469
      %v471 = vpop.f32.mrf.mxu0
      %472 = vmatprep.mubr.f32.mxu0 0.0
      %473 = vmatmul.mubr.f32.gmra.mxu0 %v297
      %v474 = vpop.f32.mrf.mxu0
      %v475 = vadd.f32 0.0, %v474
      %v476 = vpop.f32.mrf.mxu0
      %477 = vmatprep.mubr.f32.mxu0 0.0
      %478 = vmatmul.mubr.f32.gmra.mxu0 %v300
      %v479 = vpop.f32.mrf.mxu0
      %v480 = vadd.f32 0.0, %v479
      %v481 = vpop.f32.mrf.mxu0
      %482 = vmatprep.mubr.f32.mxu0 0.0
      %483 = vmatmul.mubr.f32.gmra.mxu0 %v303
      %v484 = vpop.f32.mrf.mxu0
      %v485 = vadd.f32 0.0, %v484
      %v486 = vpop.f32.mrf.mxu0
      %487 = vmatprep.mubr.f32.mxu0 0.0
      %488 = vmatmul.mubr.f32.gmra.mxu0 %v306
      %v489 = vpop.f32.mrf.mxu0
      %v490 = vadd.f32 0.0, %v489
      %v491 = vpop.f32.mrf.mxu0
      %492 = vmatprep.mubr.f32.mxu0 0.0
      %493 = vmatmul.mubr.f32.gmra.mxu0 %v309
      %v494 = vpop.f32.mrf.mxu0
      %v495 = vadd.f32 0.0, %v494
      %v496 = vpop.f32.mrf.mxu0
      %497 = vmatprep.mubr.f32.mxu0 0.0
      %498 = vmatmul.mubr.f32.gmra.mxu0 %v312
      %v499 = vpop.f32.mrf.mxu0
      %v500 = vadd.f32 0.0, %v499
      %v501 = vpop.f32.mrf.mxu0
      %502 = vmatprep.mubr.f32.mxu0 0.0
      %503 = vmatmul.mubr.f32.gmra.mxu0 %v315
      %v504 = vpop.f32.mrf.mxu0
      %v505 = vadd.f32 0.0, %v504
      %v506 = vpop.f32.mrf.mxu0
      %507 = vmatprep.mubr.f32.mxu0 0.0
      %508 = vmatmul.mubr.f32.gmra.mxu0 %v318
      %v509 = vpop.f32.mrf.mxu0
      %v510 = vadd.f32 0.0, %v509
      %v511 = vpop.f32.mrf.mxu0
      %512 = vmatprep.mubr.f32.mxu0 0.0
      %513 = vmatmul.mubr.f32.gmra.mxu0 %v321
      %v514 = vpop.f32.mrf.mxu0
      %v515 = vadd.f32 0.0, %v514
      %v516 = vpop.f32.mrf.mxu0
      %517 = vmatprep.mubr.f32.mxu0 0.0
      %518 = vmatmul.mubr.f32.gmra.mxu0 %v324
      %v519 = vpop.f32.mrf.mxu0
      %v520 = vadd.f32 0.0, %v519
      %v521 = vpop.f32.mrf.mxu0
      %522 = vmatprep.mubr.f32.mxu0 0.0
      %523 = vmatmul.mubr.f32.gmra.mxu0 %v327
      %v524 = vpop.f32.mrf.mxu0
      %v525 = vadd.f32 0.0, %v524
      %v526 = vpop.f32.mrf.mxu0
      %527 = vmatprep.mubr.f32.mxu0 0.0
      %528 = vmatmul.mubr.f32.gmra.mxu0 %v330
      %v529 = vpop.f32.mrf.mxu0
      %v530 = vadd.f32 0.0, %v529
      %v531 = vpop.f32.mrf.mxu0
      %532 = vmatprep.mubr.f32.mxu0 0.0
      %533 = vmatmul.mubr.f32.gmra.mxu0 %v333
      %v534 = vpop.f32.mrf.mxu0
      %v535 = vadd.f32 0.0, %v534
      %v536 = vpop.f32.mrf.mxu0
      %537 = vmatprep.mubr.f32.mxu0 0.0
      %538 = vmatmul.mubr.f32.gmra.mxu0 %v336
      %v539 = vpop.f32.mrf.mxu0
      %v540 = vadd.f32 0.0, %v539
      %v541 = vpop.f32.mrf.mxu0
      %542 = vmatprep.mubr.f32.mxu0 0.0
      %543 = vmatmul.mubr.f32.gmra.mxu0 %v339
      %v544 = vpop.f32.mrf.mxu0
      %v545 = vadd.f32 0.0, %v544
      %v546 = vpop.f32.mrf.mxu0
      %547 = vmatprep.mubr.f32.mxu0 0.0
      %548 = vmatmul.mubr.f32.gmra.mxu0 %v342
      %v549 = vpop.f32.mrf.mxu0
      %v550 = vadd.f32 0.0, %v549
      %v551 = vpop.f32.mrf.mxu0
      %552 = vmatprep.mubr.f32.mxu0 0.0
      %553 = vmatmul.mubr.f32.gmra.mxu0 %v345
      %v554 = vpop.f32.mrf.mxu0
      %v555 = vadd.f32 0.0, %v554
      %v556 = vpop.f32.mrf.mxu0
      %557 = vmatprep.mubr.f32.mxu0 0.0
      %558 = vmatmul.mubr.f32.gmra.mxu0 %v348
      %v559 = vpop.f32.mrf.mxu0
      %v560 = vadd.f32 0.0, %v559
      %v561 = vpop.f32.mrf.mxu0
      %562 = vmatprep.mubr.f32.mxu0 0.0
      %563 = vmatmul.mubr.f32.gmra.mxu0 %v351
      %v564 = vpop.f32.mrf.mxu0
      %v565 = vadd.f32 0.0, %v564
      %v566 = vpop.f32.mrf.mxu0
      %567 = vmatprep.mubr.f32.mxu0 0.0
      %568 = vmatmul.mubr.f32.gmra.mxu0 %v354
      %v569 = vpop.f32.mrf.mxu0
      %v570 = vadd.f32 0.0, %v569
      %v571 = vpop.f32.mrf.mxu0
      %572 = vmatprep.mubr.f32.mxu0 0.0
      %573 = vmatmul.mubr.f32.gmra.mxu0 %v357
      %v574 = vpop.f32.mrf.mxu0
      %v575 = vadd.f32 0.0, %v574
      %v576 = vpop.f32.mrf.mxu0
      %577 = vmatprep.mubr.f32.mxu0 0.0
      %578 = vmatmul.mubr.f32.gmra.mxu0 %v360
      %v579 = vpop.f32.mrf.mxu0
      %v580 = vadd.f32 0.0, %v579
      %v581 = vpop.f32.mrf.mxu0
      %582 = vmatprep.mubr.f32.mxu0 0.0
      %583 = vmatmul.mubr.f32.gmra.mxu0 %v363
      %v584 = vpop.f32.mrf.mxu0
      %v585 = vadd.f32 0.0, %v584
      %v586 = vpop.f32.mrf.mxu0
      %587 = vmatprep.mubr.f32.mxu0 0.0
      %588 = vmatmul.mubr.f32.gmra.mxu0 %v366
      %v589 = vpop.f32.mrf.mxu0
      %v590 = vadd.f32 0.0, %v589
      %v591 = vpop.f32.mrf.mxu0
      %592 = vmatprep.mubr.f32.mxu0 0.0
      %593 = vmatmul.mubr.f32.gmra.mxu0 %v369
      %v594 = vpop.f32.mrf.mxu0
      %v595 = vadd.f32 0.0, %v594
      %v596 = vpop.f32.mrf.mxu0
      %597 = vmatprep.mubr.f32.mxu0 0.0
      %598 = vmatmul.mubr.f32.gmra.mxu0 %v372
      %v599 = vpop.f32.mrf.mxu0
      %v600 = vadd.f32 0.0, %v599
      %v601 = vpop.f32.mrf.mxu0
      %602 = vdwg.mxu0
      %v604 = vsel %vm277, %v210, 0
      %v607 = vsel %vm277, %v211, 0
      %v610 = vsel %vm277, %v212, 0
      %v613 = vsel %vm277, %v213, 0
      %v616 = vsel %vm277, %v214, 0
      %v619 = vsel %vm277, %v215, 0
      %v622 = vsel %vm277, %v216, 0
      %v625 = vsel %vm277, %v217, 0
      %v628 = vsel %vm277, %v218, 0
      %v631 = vsel %vm277, %v219, 0
      %v634 = vsel %vm277, %v220, 0
      %v637 = vsel %vm277, %v221, 0
      %v640 = vsel %vm277, %v222, 0
      %v643 = vsel %vm277, %v223, 0
      %v646 = vsel %vm277, %v224, 0
      %v649 = vsel %vm277, %v225, 0
      %v652 = vsel %vm277, %v226, 0
      %v655 = vsel %vm277, %v227, 0
      %v658 = vsel %vm277, %v228, 0
      %v661 = vsel %vm277, %v229, 0
      %v664 = vsel %vm277, %v230, 0
      %v667 = vsel %vm277, %v231, 0
      %v670 = vsel %vm277, %v232, 0
      %v673 = vsel %vm277, %v233, 0
      %v676 = vsel %vm277, %v234, 0
      %v679 = vsel %vm277, %v235, 0
      %v682 = vsel %vm277, %v236, 0
      %v685 = vsel %vm277, %v237, 0
      %v688 = vsel %vm277, %v238, 0
      %v691 = vsel %vm277, %v239, 0
      %v694 = vsel %vm277, %v240, 0
      %v697 = vsel %vm277, %v241, 0
      %v700 = vsel %vm374, %v242, 0
      %702 = vmatprep.subr.mxu0 0.0
      %703 = vmatpush1.msra.mxu0 0.0
      %704 = vmatprep.subr.mxu0 0.0
      %705 = vmatpush1.msra.mxu0 0.0
      %706 = vmatprep.subr.mxu0 0.0
      %707 = vmatpush1.msra.mxu0 0.0
      %708 = vmatprep.subr.mxu0 0.0
      %709 = vmatpush1.msra.mxu0 0.0
      %710 = vmatprep.subr.mxu0 0.0
      %711 = vmatpush1.msra.mxu0 0.0
      %712 = vmatprep.subr.mxu0 0.0
      %713 = vmatpush1.msra.mxu0 0.0
      %714 = vmatprep.subr.mxu0 0.0
      %715 = vmatpush1.msra.mxu0 0.0
      %716 = vmatprep.subr.mxu0 0.0
      %717 = vmatpush1.msra.mxu0 0.0
      %718 = vmatprep.subr.mxu0 0.0
      %719 = vmatpush1.msra.mxu0 0.0
      %720 = vmatprep.subr.mxu0 0.0
      %721 = vmatpush1.msra.mxu0 0.0
      %722 = vmatprep.subr.mxu0 0.0
      %723 = vmatpush1.msra.mxu0 0.0
      %724 = vmatprep.subr.mxu0 0.0
      %725 = vmatpush1.msra.mxu0 0.0
      %726 = vmatprep.subr.mxu0 0.0
      %727 = vmatpush1.msra.mxu0 0.0
      %728 = vmatprep.subr.mxu0 0.0
      %729 = vmatpush1.msra.mxu0 0.0
      %730 = vmatprep.subr.mxu0 0.0
      %731 = vmatpush1.msra.mxu0 0.0
      %732 = vmatprep.subr.mxu0 0.0
      %733 = vmatpush1.msra.mxu0 %v700
      %734 = vmatprep.subr.mxu0 0.0
      %735 = vmatpush2.msra.mxu0 0.0
      %736 = vmatprep.subr.mxu0 0.0
      %737 = vmatpush2.msra.mxu0 0.0
      %738 = vmatprep.subr.mxu0 0.0
      %739 = vmatpush2.msra.mxu0 0.0
      %740 = vmatprep.subr.mxu0 0.0
      %741 = vmatpush2.msra.mxu0 0.0
      %742 = vmatprep.subr.mxu0 0.0
      %743 = vmatpush2.msra.mxu0 0.0
      %744 = vmatprep.subr.mxu0 0.0
      %745 = vmatpush2.msra.mxu0 0.0
      %746 = vmatprep.subr.mxu0 0.0
      %747 = vmatpush2.msra.mxu0 0.0
      %748 = vmatprep.subr.mxu0 0.0
      %749 = vmatpush2.msra.mxu0 0.0
      %750 = vmatprep.subr.mxu0 0.0
      %751 = vmatpush2.msra.mxu0 0.0
      %752 = vmatprep.subr.mxu0 0.0
      %753 = vmatpush2.msra.mxu0 0.0
      %754 = vmatprep.subr.mxu0 0.0
      %755 = vmatpush2.msra.mxu0 0.0
      %756 = vmatprep.subr.mxu0 0.0
      %757 = vmatpush2.msra.mxu0 0.0
      %758 = vmatprep.subr.mxu0 0.0
      %759 = vmatpush2.msra.mxu0 0.0
      %760 = vmatprep.subr.mxu0 0.0
      %761 = vmatpush2.msra.mxu0 0.0
      %762 = vmatprep.subr.mxu0 0.0
      %763 = vmatpush2.msra.mxu0 0.0
      %764 = vmatprep.subr.mxu0 0.0
      %765 = vmatpush2.msra.mxu0 0.0
      %766 = vmatprep.mubr.f32.mxu0 0.0
      %767 = vmatmul.mubr.f32.gmra.mxu0 %v604
      %v768 = vpop.f32.mrf.mxu0
      %v769 = vadd.f32 %v445, %v768
      %v770 = vpop.f32.mrf.mxu0
      %771 = vmatprep.mubr.f32.mxu0 0.0
      %772 = vmatmul.mubr.f32.gmra.mxu0 %v607
      %v773 = vpop.f32.mrf.mxu0
      %v774 = vadd.f32 %v450, %v773
      %v775 = vpop.f32.mrf.mxu0
      %776 = vmatprep.mubr.f32.mxu0 0.0
      %777 = vmatmul.mubr.f32.gmra.mxu0 %v610
      %v778 = vpop.f32.mrf.mxu0
      %v779 = vadd.f32 %v455, %v778
      %v780 = vpop.f32.mrf.mxu0
      %781 = vmatprep.mubr.f32.mxu0 0.0
      %782 = vmatmul.mubr.f32.gmra.mxu0 %v613
      %v783 = vpop.f32.mrf.mxu0
      %v784 = vadd.f32 %v460, %v783
      %v785 = vpop.f32.mrf.mxu0
      %786 = vmatprep.mubr.f32.mxu0 0.0
      %787 = vmatmul.mubr.f32.gmra.mxu0 %v616
      %v788 = vpop.f32.mrf.mxu0
      %v789 = vadd.f32 %v465, %v788
      %v790 = vpop.f32.mrf.mxu0
      %791 = vmatprep.mubr.f32.mxu0 0.0
      %792 = vmatmul.mubr.f32.gmra.mxu0 %v619
      %v793 = vpop.f32.mrf.mxu0
      %v794 = vadd.f32 %v470, %v793
      %v795 = vpop.f32.mrf.mxu0
      %796 = vmatprep.mubr.f32.mxu0 0.0
      %797 = vmatmul.mubr.f32.gmra.mxu0 %v622
      %v798 = vpop.f32.mrf.mxu0
      %v799 = vadd.f32 %v475, %v798
      %v800 = vpop.f32.mrf.mxu0
      %801 = vmatprep.mubr.f32.mxu0 0.0
      %802 = vmatmul.mubr.f32.gmra.mxu0 %v625
      %v803 = vpop.f32.mrf.mxu0
      %v804 = vadd.f32 %v480, %v803
      %v805 = vpop.f32.mrf.mxu0
      %806 = vmatprep.mubr.f32.mxu0 0.0
      %807 = vmatmul.mubr.f32.gmra.mxu0 %v628
      %v808 = vpop.f32.mrf.mxu0
      %v809 = vadd.f32 %v485, %v808
      %v810 = vpop.f32.mrf.mxu0
      %811 = vmatprep.mubr.f32.mxu0 0.0
      %812 = vmatmul.mubr.f32.gmra.mxu0 %v631
      %v813 = vpop.f32.mrf.mxu0
      %v814 = vadd.f32 %v490, %v813
      %v815 = vpop.f32.mrf.mxu0
      %816 = vmatprep.mubr.f32.mxu0 0.0
      %817 = vmatmul.mubr.f32.gmra.mxu0 %v634
      %v818 = vpop.f32.mrf.mxu0
      %v819 = vadd.f32 %v495, %v818
      %v820 = vpop.f32.mrf.mxu0
      %821 = vmatprep.mubr.f32.mxu0 0.0
      %822 = vmatmul.mubr.f32.gmra.mxu0 %v637
      %v823 = vpop.f32.mrf.mxu0
      %v824 = vadd.f32 %v500, %v823
      %v825 = vpop.f32.mrf.mxu0
      %826 = vmatprep.mubr.f32.mxu0 0.0
      %827 = vmatmul.mubr.f32.gmra.mxu0 %v640
      %v828 = vpop.f32.mrf.mxu0
      %v829 = vadd.f32 %v505, %v828
      %v830 = vpop.f32.mrf.mxu0
      %831 = vmatprep.mubr.f32.mxu0 0.0
      %832 = vmatmul.mubr.f32.gmra.mxu0 %v643
      %v833 = vpop.f32.mrf.mxu0
      %v834 = vadd.f32 %v510, %v833
      %v835 = vpop.f32.mrf.mxu0
      %836 = vmatprep.mubr.f32.mxu0 0.0
      %837 = vmatmul.mubr.f32.gmra.mxu0 %v646
      %v838 = vpop.f32.mrf.mxu0
      %v839 = vadd.f32 %v515, %v838
      %v840 = vpop.f32.mrf.mxu0
      %841 = vmatprep.mubr.f32.mxu0 0.0
      %842 = vmatmul.mubr.f32.gmra.mxu0 %v649
      %v843 = vpop.f32.mrf.mxu0
      %v844 = vadd.f32 %v520, %v843
      %v845 = vpop.f32.mrf.mxu0
      %846 = vmatprep.mubr.f32.mxu0 0.0
      %847 = vmatmul.mubr.f32.gmra.mxu0 %v652
      %v848 = vpop.f32.mrf.mxu0
      %v849 = vadd.f32 %v525, %v848
      %v850 = vpop.f32.mrf.mxu0
      %851 = vmatprep.mubr.f32.mxu0 0.0
      %852 = vmatmul.mubr.f32.gmra.mxu0 %v655
      %v853 = vpop.f32.mrf.mxu0
      %v854 = vadd.f32 %v530, %v853
      %v855 = vpop.f32.mrf.mxu0
      %856 = vmatprep.mubr.f32.mxu0 0.0
      %857 = vmatmul.mubr.f32.gmra.mxu0 %v658
      %v858 = vpop.f32.mrf.mxu0
      %v859 = vadd.f32 %v535, %v858
      %v860 = vpop.f32.mrf.mxu0
      %861 = vmatprep.mubr.f32.mxu0 0.0
      %862 = vmatmul.mubr.f32.gmra.mxu0 %v661
      %v863 = vpop.f32.mrf.mxu0
      %v864 = vadd.f32 %v540, %v863
      %v865 = vpop.f32.mrf.mxu0
      %866 = vmatprep.mubr.f32.mxu0 0.0
      %867 = vmatmul.mubr.f32.gmra.mxu0 %v664
      %v868 = vpop.f32.mrf.mxu0
      %v869 = vadd.f32 %v545, %v868
      %v870 = vpop.f32.mrf.mxu0
      %871 = vmatprep.mubr.f32.mxu0 0.0
      %872 = vmatmul.mubr.f32.gmra.mxu0 %v667
      %v873 = vpop.f32.mrf.mxu0
      %v874 = vadd.f32 %v550, %v873
      %v875 = vpop.f32.mrf.mxu0
      %876 = vmatprep.mubr.f32.mxu0 0.0
      %877 = vmatmul.mubr.f32.gmra.mxu0 %v670
      %v878 = vpop.f32.mrf.mxu0
      %v879 = vadd.f32 %v555, %v878
      %v880 = vpop.f32.mrf.mxu0
      %881 = vmatprep.mubr.f32.mxu0 0.0
      %882 = vmatmul.mubr.f32.gmra.mxu0 %v673
      %v883 = vpop.f32.mrf.mxu0
      %v884 = vadd.f32 %v560, %v883
      %v885 = vpop.f32.mrf.mxu0
      %886 = vmatprep.mubr.f32.mxu0 0.0
      %887 = vmatmul.mubr.f32.gmra.mxu0 %v676
      %v888 = vpop.f32.mrf.mxu0
      %v889 = vadd.f32 %v565, %v888
      %v890 = vpop.f32.mrf.mxu0
      %891 = vmatprep.mubr.f32.mxu0 0.0
      %892 = vmatmul.mubr.f32.gmra.mxu0 %v679
      %v893 = vpop.f32.mrf.mxu0
      %v894 = vadd.f32 %v570, %v893
      %v895 = vpop.f32.mrf.mxu0
      %896 = vmatprep.mubr.f32.mxu0 0.0
      %897 = vmatmul.mubr.f32.gmra.mxu0 %v682
      %v898 = vpop.f32.mrf.mxu0
      %v899 = vadd.f32 %v575, %v898
      %v900 = vpop.f32.mrf.mxu0
      %901 = vmatprep.mubr.f32.mxu0 0.0
      %902 = vmatmul.mubr.f32.gmra.mxu0 %v685
      %v903 = vpop.f32.mrf.mxu0
      %v904 = vadd.f32 %v580, %v903
      %v905 = vpop.f32.mrf.mxu0
      %906 = vmatprep.mubr.f32.mxu0 0.0
      %907 = vmatmul.mubr.f32.gmra.mxu0 %v688
      %v908 = vpop.f32.mrf.mxu0
      %v909 = vadd.f32 %v585, %v908
      %v910 = vpop.f32.mrf.mxu0
      %911 = vmatprep.mubr.f32.mxu0 0.0
      %912 = vmatmul.mubr.f32.gmra.mxu0 %v691
      %v913 = vpop.f32.mrf.mxu0
      %v914 = vadd.f32 %v590, %v913
      %v915 = vpop.f32.mrf.mxu0
      %916 = vmatprep.mubr.f32.mxu0 0.0
      %917 = vmatmul.mubr.f32.gmra.mxu0 %v694
      %v918 = vpop.f32.mrf.mxu0
      %v919 = vadd.f32 %v595, %v918
      %v920 = vpop.f32.mrf.mxu0
      %921 = vmatprep.mubr.f32.mxu0 0.0
      %922 = vmatmul.mubr.f32.gmra.mxu0 %v697
      %v923 = vpop.f32.mrf.mxu0
      %v924 = vadd.f32 %v600, %v923
      %v925 = vpop.f32.mrf.mxu0
      %926 = vdwg.mxu0
      %v927 = vld [vmem:[%s209 + $0x2] sm:$0xff]
      %v928 = vld [vmem:[%s209 + $0xa] sm:$0xff]
      %v929 = vld [vmem:[%s209 + $0x1a] sm:$0xff]
      %v930 = vld [vmem:[%s209 + $0x22] sm:$0xff]
      %v931 = vld [vmem:[%s209 + $0x32] sm:$0xff]
      %v932 = vld [vmem:[%s209 + $0x3a] sm:$0xff]
      %v933 = vld [vmem:[%s209 + $0x4a] sm:$0xff]
      %v934 = vld [vmem:[%s209 + $0x52] sm:$0xff]
      %v935 = vld [vmem:[%s209 + $0x62] sm:$0xff]
      %v936 = vld [vmem:[%s209 + $0x6a] sm:$0xff]
      %v937 = vld [vmem:[%s209 + $0x7a] sm:$0xff]
      %v938 = vld [vmem:[%s209 + $0x82] sm:$0xff]
      %v939 = vld [vmem:[%s209 + $0x92] sm:$0xff]
      %v940 = vld [vmem:[%s209 + $0x9a] sm:$0xff]
      %v941 = vld [vmem:[%s209 + $0xaa] sm:$0xff]
      %v942 = vld [vmem:[%s209 + $0xb2] sm:$0xff]
      %v943 = vld [vmem:[%s209 + $0xc2] sm:$0xff]
      %v944 = vld [vmem:[%s209 + $0xca] sm:$0xff]
      %v945 = vld [vmem:[%s209 + $0xda] sm:$0xff]
      %v946 = vld [vmem:[%s209 + $0xe2] sm:$0xff]
      %v947 = vld [vmem:[%s209 + $0xf2] sm:$0xff]
      %v948 = vld [vmem:[%s209 + $0xfa] sm:$0xff]
      %v949 = vld [vmem:[%s209 + $0x10a] sm:$0xff]
      %v950 = vld [vmem:[%s209 + $0x112] sm:$0xff]
      %v951 = vld [vmem:[%s209 + $0x122] sm:$0xff]
      %v952 = vld [vmem:[%s209 + $0x12a] sm:$0xff]
      %v953 = vld [vmem:[%s209 + $0x13a] sm:$0xff]
      %v954 = vld [vmem:[%s209 + $0x142] sm:$0xff]
      %v955 = vld [vmem:[%s209 + $0x152] sm:$0xff]
      %v956 = vld [vmem:[%s209 + $0x15a] sm:$0xff]
      %v957 = vld [vmem:[%s209 + $0x16a] sm:$0xff]
      %v958 = vld [vmem:[%s209 + $0x172] sm:$0xff]
      %s959 = scalar_lea.vmem %s1, 8
      %v960 = vld [vmem:[%s959] sm:$0xf]
      %v962 = vsel %vm277, %v927, 0
      %v965 = vsel %vm277, %v928, 0
      %v968 = vsel %vm277, %v929, 0
      %v971 = vsel %vm277, %v930, 0
      %v974 = vsel %vm277, %v931, 0
      %v977 = vsel %vm277, %v932, 0
      %v980 = vsel %vm277, %v933, 0
      %v983 = vsel %vm277, %v934, 0
      %v986 = vsel %vm277, %v935, 0
      %v989 = vsel %vm277, %v936, 0
      %v992 = vsel %vm277, %v937, 0
      %v995 = vsel %vm277, %v938, 0
      %v998 = vsel %vm277, %v939, 0
      %v1001 = vsel %vm277, %v940, 0
      %v1004 = vsel %vm277, %v941, 0
      %v1007 = vsel %vm277, %v942, 0
      %v1010 = vsel %vm277, %v943, 0
      %v1013 = vsel %vm277, %v944, 0
      %v1016 = vsel %vm277, %v945, 0
      %v1019 = vsel %vm277, %v946, 0
      %v1022 = vsel %vm277, %v947, 0
      %v1025 = vsel %vm277, %v948, 0
      %v1028 = vsel %vm277, %v949, 0
      %v1031 = vsel %vm277, %v950, 0
      %v1034 = vsel %vm277, %v951, 0
      %v1037 = vsel %vm277, %v952, 0
      %v1040 = vsel %vm277, %v953, 0
      %v1043 = vsel %vm277, %v954, 0
      %v1046 = vsel %vm277, %v955, 0
      %v1049 = vsel %vm277, %v956, 0
      %v1052 = vsel %vm277, %v957, 0
      %v1055 = vsel %vm277, %v958, 0
      %v1058 = vsel %vm374, %v960, 0
      %1060 = vmatprep.subr.mxu0 0.0
      %1061 = vmatpush1.msra.mxu0 0.0
      %1062 = vmatprep.subr.mxu0 0.0
      %1063 = vmatpush1.msra.mxu0 0.0
      %1064 = vmatprep.subr.mxu0 0.0
      %1065 = vmatpush1.msra.mxu0 0.0
      %1066 = vmatprep.subr.mxu0 0.0
      %1067 = vmatpush1.msra.mxu0 0.0
      %1068 = vmatprep.subr.mxu0 0.0
      %1069 = vmatpush1.msra.mxu0 0.0
      %1070 = vmatprep.subr.mxu0 0.0
      %1071 = vmatpush1.msra.mxu0 0.0
      %1072 = vmatprep.subr.mxu0 0.0
      %1073 = vmatpush1.msra.mxu0 0.0
      %1074 = vmatprep.subr.mxu0 0.0
      %1075 = vmatpush1.msra.mxu0 0.0
      %1076 = vmatprep.subr.mxu0 0.0
      %1077 = vmatpush1.msra.mxu0 0.0
      %1078 = vmatprep.subr.mxu0 0.0
      %1079 = vmatpush1.msra.mxu0 0.0
      %1080 = vmatprep.subr.mxu0 0.0
      %1081 = vmatpush1.msra.mxu0 0.0
      %1082 = vmatprep.subr.mxu0 0.0
      %1083 = vmatpush1.msra.mxu0 0.0
      %1084 = vmatprep.subr.mxu0 0.0
      %1085 = vmatpush1.msra.mxu0 0.0
      %1086 = vmatprep.subr.mxu0 0.0
      %1087 = vmatpush1.msra.mxu0 0.0
      %1088 = vmatprep.subr.mxu0 0.0
      %1089 = vmatpush1.msra.mxu0 0.0
      %1090 = vmatprep.subr.mxu0 0.0
      %1091 = vmatpush1.msra.mxu0 %v1058
      %1092 = vmatprep.subr.mxu0 0.0
      %1093 = vmatpush2.msra.mxu0 0.0
      %1094 = vmatprep.subr.mxu0 0.0
      %1095 = vmatpush2.msra.mxu0 0.0
      %1096 = vmatprep.subr.mxu0 0.0
      %1097 = vmatpush2.msra.mxu0 0.0
      %1098 = vmatprep.subr.mxu0 0.0
      %1099 = vmatpush2.msra.mxu0 0.0
      %1100 = vmatprep.subr.mxu0 0.0
      %1101 = vmatpush2.msra.mxu0 0.0
      %1102 = vmatprep.subr.mxu0 0.0
      %1103 = vmatpush2.msra.mxu0 0.0
      %1104 = vmatprep.subr.mxu0 0.0
      %1105 = vmatpush2.msra.mxu0 0.0
      %1106 = vmatprep.subr.mxu0 0.0
      %1107 = vmatpush2.msra.mxu0 0.0
      %1108 = vmatprep.subr.mxu0 0.0
      %1109 = vmatpush2.msra.mxu0 0.0
      %1110 = vmatprep.subr.mxu0 0.0
      %1111 = vmatpush2.msra.mxu0 0.0
      %1112 = vmatprep.subr.mxu0 0.0
      %1113 = vmatpush2.msra.mxu0 0.0
      %1114 = vmatprep.subr.mxu0 0.0
      %1115 = vmatpush2.msra.mxu0 0.0
      %1116 = vmatprep.subr.mxu0 0.0
      %1117 = vmatpush2.msra.mxu0 0.0
      %1118 = vmatprep.subr.mxu0 0.0
      %1119 = vmatpush2.msra.mxu0 0.0
      %1120 = vmatprep.subr.mxu0 0.0
      %1121 = vmatpush2.msra.mxu0 0.0
      %1122 = vmatprep.subr.mxu0 0.0
      %1123 = vmatpush2.msra.mxu0 0.0
      %1124 = vmatprep.mubr.f32.mxu0 0.0
      %1125 = vmatmul.mubr.f32.gmra.mxu0 %v962
      %v1126 = vpop.f32.mrf.mxu0
      %v1127 = vadd.f32 0.0, %v1126
      %v1128 = vpop.f32.mrf.mxu0
      %1129 = vmatprep.mubr.f32.mxu0 0.0
      %1130 = vmatmul.mubr.f32.gmra.mxu0 %v965
      %v1131 = vpop.f32.mrf.mxu0
      %v1132 = vadd.f32 0.0, %v1131
      %v1133 = vpop.f32.mrf.mxu0
      %1134 = vmatprep.mubr.f32.mxu0 0.0
      %1135 = vmatmul.mubr.f32.gmra.mxu0 %v968
      %v1136 = vpop.f32.mrf.mxu0
      %v1137 = vadd.f32 0.0, %v1136
      %v1138 = vpop.f32.mrf.mxu0
      %1139 = vmatprep.mubr.f32.mxu0 0.0
      %1140 = vmatmul.mubr.f32.gmra.mxu0 %v971
      %v1141 = vpop.f32.mrf.mxu0
      %v1142 = vadd.f32 0.0, %v1141
      %v1143 = vpop.f32.mrf.mxu0
      %1144 = vmatprep.mubr.f32.mxu0 0.0
      %1145 = vmatmul.mubr.f32.gmra.mxu0 %v974
      %v1146 = vpop.f32.mrf.mxu0
      %v1147 = vadd.f32 0.0, %v1146
      %v1148 = vpop.f32.mrf.mxu0
      %1149 = vmatprep.mubr.f32.mxu0 0.0
      %1150 = vmatmul.mubr.f32.gmra.mxu0 %v977
      %v1151 = vpop.f32.mrf.mxu0
      %v1152 = vadd.f32 0.0, %v1151
      %v1153 = vpop.f32.mrf.mxu0
      %1154 = vmatprep.mubr.f32.mxu0 0.0
      %1155 = vmatmul.mubr.f32.gmra.mxu0 %v980
      %v1156 = vpop.f32.mrf.mxu0
      %v1157 = vadd.f32 0.0, %v1156
      %v1158 = vpop.f32.mrf.mxu0
      %1159 = vmatprep.mubr.f32.mxu0 0.0
      %1160 = vmatmul.mubr.f32.gmra.mxu0 %v983
      %v1161 = vpop.f32.mrf.mxu0
      %v1162 = vadd.f32 0.0, %v1161
      %v1163 = vpop.f32.mrf.mxu0
      %1164 = vmatprep.mubr.f32.mxu0 0.0
      %1165 = vmatmul.mubr.f32.gmra.mxu0 %v986
      %v1166 = vpop.f32.mrf.mxu0
      %v1167 = vadd.f32 0.0, %v1166
      %v1168 = vpop.f32.mrf.mxu0
      %1169 = vmatprep.mubr.f32.mxu0 0.0
      %1170 = vmatmul.mubr.f32.gmra.mxu0 %v989
      %v1171 = vpop.f32.mrf.mxu0
      %v1172 = vadd.f32 0.0, %v1171
      %v1173 = vpop.f32.mrf.mxu0
      %1174 = vmatprep.mubr.f32.mxu0 0.0
      %1175 = vmatmul.mubr.f32.gmra.mxu0 %v992
      %v1176 = vpop.f32.mrf.mxu0
      %v1177 = vadd.f32 0.0, %v1176
      %v1178 = vpop.f32.mrf.mxu0
      %1179 = vmatprep.mubr.f32.mxu0 0.0
      %1180 = vmatmul.mubr.f32.gmra.mxu0 %v995
      %v1181 = vpop.f32.mrf.mxu0
      %v1182 = vadd.f32 0.0, %v1181
      %v1183 = vpop.f32.mrf.mxu0
      %1184 = vmatprep.mubr.f32.mxu0 0.0
      %1185 = vmatmul.mubr.f32.gmra.mxu0 %v998
      %v1186 = vpop.f32.mrf.mxu0
      %v1187 = vadd.f32 0.0, %v1186
      %v1188 = vpop.f32.mrf.mxu0
      %1189 = vmatprep.mubr.f32.mxu0 0.0
      %1190 = vmatmul.mubr.f32.gmra.mxu0 %v1001
      %v1191 = vpop.f32.mrf.mxu0
      %v1192 = vadd.f32 0.0, %v1191
      %v1193 = vpop.f32.mrf.mxu0
      %1194 = vmatprep.mubr.f32.mxu0 0.0
      %1195 = vmatmul.mubr.f32.gmra.mxu0 %v1004
      %v1196 = vpop.f32.mrf.mxu0
      %v1197 = vadd.f32 0.0, %v1196
      %v1198 = vpop.f32.mrf.mxu0
      %1199 = vmatprep.mubr.f32.mxu0 0.0
      %1200 = vmatmul.mubr.f32.gmra.mxu0 %v1007
      %v1201 = vpop.f32.mrf.mxu0
      %v1202 = vadd.f32 0.0, %v1201
      %v1203 = vpop.f32.mrf.mxu0
      %1204 = vmatprep.mubr.f32.mxu0 0.0
      %1205 = vmatmul.mubr.f32.gmra.mxu0 %v1010
      %v1206 = vpop.f32.mrf.mxu0
      %v1207 = vadd.f32 0.0, %v1206
      %v1208 = vpop.f32.mrf.mxu0
      %1209 = vmatprep.mubr.f32.mxu0 0.0
      %1210 = vmatmul.mubr.f32.gmra.mxu0 %v1013
      %v1211 = vpop.f32.mrf.mxu0
      %v1212 = vadd.f32 0.0, %v1211
      %v1213 = vpop.f32.mrf.mxu0
      %1214 = vmatprep.mubr.f32.mxu0 0.0
      %1215 = vmatmul.mubr.f32.gmra.mxu0 %v1016
      %v1216 = vpop.f32.mrf.mxu0
      %v1217 = vadd.f32 0.0, %v1216
      %v1218 = vpop.f32.mrf.mxu0
      %1219 = vmatprep.mubr.f32.mxu0 0.0
      %1220 = vmatmul.mubr.f32.gmra.mxu0 %v1019
      %v1221 = vpop.f32.mrf.mxu0
      %v1222 = vadd.f32 0.0, %v1221
      %v1223 = vpop.f32.mrf.mxu0
      %1224 = vmatprep.mubr.f32.mxu0 0.0
      %1225 = vmatmul.mubr.f32.gmra.mxu0 %v1022
      %v1226 = vpop.f32.mrf.mxu0
      %v1227 = vadd.f32 0.0, %v1226
      %v1228 = vpop.f32.mrf.mxu0
      %1229 = vmatprep.mubr.f32.mxu0 0.0
      %1230 = vmatmul.mubr.f32.gmra.mxu0 %v1025
      %v1231 = vpop.f32.mrf.mxu0
      %v1232 = vadd.f32 0.0, %v1231
      %v1233 = vpop.f32.mrf.mxu0
      %1234 = vmatprep.mubr.f32.mxu0 0.0
      %1235 = vmatmul.mubr.f32.gmra.mxu0 %v1028
      %v1236 = vpop.f32.mrf.mxu0
      %v1237 = vadd.f32 0.0, %v1236
      %v1238 = vpop.f32.mrf.mxu0
      %1239 = vmatprep.mubr.f32.mxu0 0.0
      %1240 = vmatmul.mubr.f32.gmra.mxu0 %v1031
      %v1241 = vpop.f32.mrf.mxu0
      %v1242 = vadd.f32 0.0, %v1241
      %v1243 = vpop.f32.mrf.mxu0
      %1244 = vmatprep.mubr.f32.mxu0 0.0
      %1245 = vmatmul.mubr.f32.gmra.mxu0 %v1034
      %v1246 = vpop.f32.mrf.mxu0
      %v1247 = vadd.f32 0.0, %v1246
      %v1248 = vpop.f32.mrf.mxu0
      %1249 = vmatprep.mubr.f32.mxu0 0.0
      %1250 = vmatmul.mubr.f32.gmra.mxu0 %v1037
      %v1251 = vpop.f32.mrf.mxu0
      %v1252 = vadd.f32 0.0, %v1251
      %v1253 = vpop.f32.mrf.mxu0
      %1254 = vmatprep.mubr.f32.mxu0 0.0
      %1255 = vmatmul.mubr.f32.gmra.mxu0 %v1040
      %v1256 = vpop.f32.mrf.mxu0
      %v1257 = vadd.f32 0.0, %v1256
      %v1258 = vpop.f32.mrf.mxu0
      %1259 = vmatprep.mubr.f32.mxu0 0.0
      %1260 = vmatmul.mubr.f32.gmra.mxu0 %v1043
      %v1261 = vpop.f32.mrf.mxu0
      %v1262 = vadd.f32 0.0, %v1261
      %v1263 = vpop.f32.mrf.mxu0
      %1264 = vmatprep.mubr.f32.mxu0 0.0
      %1265 = vmatmul.mubr.f32.gmra.mxu0 %v1046
      %v1266 = vpop.f32.mrf.mxu0
      %v1267 = vadd.f32 0.0, %v1266
      %v1268 = vpop.f32.mrf.mxu0
      %1269 = vmatprep.mubr.f32.mxu0 0.0
      %1270 = vmatmul.mubr.f32.gmra.mxu0 %v1049
      %v1271 = vpop.f32.mrf.mxu0
      %v1272 = vadd.f32 0.0, %v1271
      %v1273 = vpop.f32.mrf.mxu0
      %1274 = vmatprep.mubr.f32.mxu0 0.0
      %1275 = vmatmul.mubr.f32.gmra.mxu0 %v1052
      %v1276 = vpop.f32.mrf.mxu0
      %v1277 = vadd.f32 0.0, %v1276
      %v1278 = vpop.f32.mrf.mxu0
      %1279 = vmatprep.mubr.f32.mxu0 0.0
      %1280 = vmatmul.mubr.f32.gmra.mxu0 %v1055
      %v1281 = vpop.f32.mrf.mxu0
      %v1282 = vadd.f32 0.0, %v1281
      %v1283 = vpop.f32.mrf.mxu0
      %1284 = vdwg.mxu0
      %v1285 = vadd.f32 %v769, %v1127
      %v1286 = vadd.f32 %v774, %v1132
      %v1287 = vadd.f32 %v779, %v1137
      %v1288 = vadd.f32 %v784, %v1142
      %v1289 = vadd.f32 %v789, %v1147
      %v1290 = vadd.f32 %v794, %v1152
      %v1291 = vadd.f32 %v799, %v1157
      %v1292 = vadd.f32 %v804, %v1162
      %v1293 = vadd.f32 %v809, %v1167
      %v1294 = vadd.f32 %v814, %v1172
      %v1295 = vadd.f32 %v819, %v1177
      %v1296 = vadd.f32 %v824, %v1182
      %v1297 = vadd.f32 %v829, %v1187
      %v1298 = vadd.f32 %v834, %v1192
      %v1299 = vadd.f32 %v839, %v1197
      %v1300 = vadd.f32 %v844, %v1202
      %v1301 = vadd.f32 %v849, %v1207
      %v1302 = vadd.f32 %v854, %v1212
      %v1303 = vadd.f32 %v859, %v1217
      %v1304 = vadd.f32 %v864, %v1222
      %v1305 = vadd.f32 %v869, %v1227
      %v1306 = vadd.f32 %v874, %v1232
      %v1307 = vadd.f32 %v879, %v1237
      %v1308 = vadd.f32 %v884, %v1242
      %v1309 = vadd.f32 %v889, %v1247
      %v1310 = vadd.f32 %v894, %v1252
      %v1311 = vadd.f32 %v899, %v1257
      %v1312 = vadd.f32 %v904, %v1262
      %v1313 = vadd.f32 %v909, %v1267
      %v1314 = vadd.f32 %v914, %v1272
      %v1315 = vadd.f32 %v919, %v1277
      %v1316 = vadd.f32 %v924, %v1282
      %s1317 = sadd.s32 %s207, 1
      %s1318 = smul.u32 %s1317, 24
      %s1319 = scalar_lea.vmem %s191, %s1318
      %v1320 = vld [vmem:[%s1319] sm:$0xff]
      %v1321 = vld [vmem:[%s1319 + $0x8] sm:$0xff]
      %v1322 = vld [vmem:[%s1319 + $0x18] sm:$0xff]
      %v1323 = vld [vmem:[%s1319 + $0x20] sm:$0xff]
      %v1324 = vld [vmem:[%s1319 + $0x30] sm:$0xff]
      %v1325 = vld [vmem:[%s1319 + $0x38] sm:$0xff]
      %v1326 = vld [vmem:[%s1319 + $0x48] sm:$0xff]
      %v1327 = vld [vmem:[%s1319 + $0x50] sm:$0xff]
      %v1328 = vld [vmem:[%s1319 + $0x60] sm:$0xff]
      %v1329 = vld [vmem:[%s1319 + $0x68] sm:$0xff]
      %v1330 = vld [vmem:[%s1319 + $0x78] sm:$0xff]
      %v1331 = vld [vmem:[%s1319 + $0x80] sm:$0xff]
      %v1332 = vld [vmem:[%s1319 + $0x90] sm:$0xff]
      %v1333 = vld [vmem:[%s1319 + $0x98] sm:$0xff]
      %v1334 = vld [vmem:[%s1319 + $0xa8] sm:$0xff]
      %v1335 = vld [vmem:[%s1319 + $0xb0] sm:$0xff]
      %v1336 = vld [vmem:[%s1319 + $0xc0] sm:$0xff]
      %v1337 = vld [vmem:[%s1319 + $0xc8] sm:$0xff]
      %v1338 = vld [vmem:[%s1319 + $0xd8] sm:$0xff]
      %v1339 = vld [vmem:[%s1319 + $0xe0] sm:$0xff]
      %v1340 = vld [vmem:[%s1319 + $0xf0] sm:$0xff]
      %v1341 = vld [vmem:[%s1319 + $0xf8] sm:$0xff]
      %v1342 = vld [vmem:[%s1319 + $0x108] sm:$0xff]
      %v1343 = vld [vmem:[%s1319 + $0x110] sm:$0xff]
      %v1344 = vld [vmem:[%s1319 + $0x120] sm:$0xff]
      %v1345 = vld [vmem:[%s1319 + $0x128] sm:$0xff]
      %v1346 = vld [vmem:[%s1319 + $0x138] sm:$0xff]
      %v1347 = vld [vmem:[%s1319 + $0x140] sm:$0xff]
      %v1348 = vld [vmem:[%s1319 + $0x150] sm:$0xff]
      %v1349 = vld [vmem:[%s1319 + $0x158] sm:$0xff]
      %v1350 = vld [vmem:[%s1319 + $0x168] sm:$0xff]
      %v1351 = vld [vmem:[%s1319 + $0x170] sm:$0xff]
      %s1352 = scalar_lea.vmem %s1, 12
      %v1353 = vld [vmem:[%s1352] sm:$0xf]
      %v1355 = vsel %vm277, %v1320, 0
      %v1358 = vsel %vm277, %v1321, 0
      %v1361 = vsel %vm277, %v1322, 0
      %v1364 = vsel %vm277, %v1323, 0
      %v1367 = vsel %vm277, %v1324, 0
      %v1370 = vsel %vm277, %v1325, 0
      %v1373 = vsel %vm277, %v1326, 0
      %v1376 = vsel %vm277, %v1327, 0
      %v1379 = vsel %vm277, %v1328, 0
      %v1382 = vsel %vm277, %v1329, 0
      %v1385 = vsel %vm277, %v1330, 0
      %v1388 = vsel %vm277, %v1331, 0
      %v1391 = vsel %vm277, %v1332, 0
      %v1394 = vsel %vm277, %v1333, 0
      %v1397 = vsel %vm277, %v1334, 0
      %v1400 = vsel %vm277, %v1335, 0
      %v1403 = vsel %vm277, %v1336, 0
      %v1406 = vsel %vm277, %v1337, 0
      %v1409 = vsel %vm277, %v1338, 0
      %v1412 = vsel %vm277, %v1339, 0
      %v1415 = vsel %vm277, %v1340, 0
      %v1418 = vsel %vm277, %v1341, 0
      %v1421 = vsel %vm277, %v1342, 0
      %v1424 = vsel %vm277, %v1343, 0
      %v1427 = vsel %vm277, %v1344, 0
      %v1430 = vsel %vm277, %v1345, 0
      %v1433 = vsel %vm277, %v1346, 0
      %v1436 = vsel %vm277, %v1347, 0
      %v1439 = vsel %vm277, %v1348, 0
      %v1442 = vsel %vm277, %v1349, 0
      %v1445 = vsel %vm277, %v1350, 0
      %v1448 = vsel %vm277, %v1351, 0
      %v1451 = vsel %vm374, %v1353, 0
      %1453 = vmatprep.subr.mxu0 0.0
      %1454 = vmatpush1.msra.mxu0 0.0
      %1455 = vmatprep.subr.mxu0 0.0
      %1456 = vmatpush1.msra.mxu0 0.0
      %1457 = vmatprep.subr.mxu0 0.0
      %1458 = vmatpush1.msra.mxu0 0.0
      %1459 = vmatprep.subr.mxu0 0.0
      %1460 = vmatpush1.msra.mxu0 0.0
      %1461 = vmatprep.subr.mxu0 0.0
      %1462 = vmatpush1.msra.mxu0 0.0
      %1463 = vmatprep.subr.mxu0 0.0
      %1464 = vmatpush1.msra.mxu0 0.0
      %1465 = vmatprep.subr.mxu0 0.0
      %1466 = vmatpush1.msra.mxu0 0.0
      %1467 = vmatprep.subr.mxu0 0.0
      %1468 = vmatpush1.msra.mxu0 0.0
      %1469 = vmatprep.subr.mxu0 0.0
      %1470 = vmatpush1.msra.mxu0 0.0
      %1471 = vmatprep.subr.mxu0 0.0
      %1472 = vmatpush1.msra.mxu0 0.0
      %1473 = vmatprep.subr.mxu0 0.0
      %1474 = vmatpush1.msra.mxu0 0.0
      %1475 = vmatprep.subr.mxu0 0.0
      %1476 = vmatpush1.msra.mxu0 0.0
      %1477 = vmatprep.subr.mxu0 0.0
      %1478 = vmatpush1.msra.mxu0 0.0
      %1479 = vmatprep.subr.mxu0 0.0
      %1480 = vmatpush1.msra.mxu0 0.0
      %1481 = vmatprep.subr.mxu0 0.0
      %1482 = vmatpush1.msra.mxu0 0.0
      %1483 = vmatprep.subr.mxu0 0.0
      %1484 = vmatpush1.msra.mxu0 %v1451
      %1485 = vmatprep.subr.mxu0 0.0
      %1486 = vmatpush2.msra.mxu0 0.0
      %1487 = vmatprep.subr.mxu0 0.0
      %1488 = vmatpush2.msra.mxu0 0.0
      %1489 = vmatprep.subr.mxu0 0.0
      %1490 = vmatpush2.msra.mxu0 0.0
      %1491 = vmatprep.subr.mxu0 0.0
      %1492 = vmatpush2.msra.mxu0 0.0
      %1493 = vmatprep.subr.mxu0 0.0
      %1494 = vmatpush2.msra.mxu0 0.0
      %1495 = vmatprep.subr.mxu0 0.0
      %1496 = vmatpush2.msra.mxu0 0.0
      %1497 = vmatprep.subr.mxu0 0.0
      %1498 = vmatpush2.msra.mxu0 0.0
      %1499 = vmatprep.subr.mxu0 0.0
      %1500 = vmatpush2.msra.mxu0 0.0
      %1501 = vmatprep.subr.mxu0 0.0
      %1502 = vmatpush2.msra.mxu0 0.0
      %1503 = vmatprep.subr.mxu0 0.0
      %1504 = vmatpush2.msra.mxu0 0.0
      %1505 = vmatprep.subr.mxu0 0.0
      %1506 = vmatpush2.msra.mxu0 0.0
      %1507 = vmatprep.subr.mxu0 0.0
      %1508 = vmatpush2.msra.mxu0 0.0
      %1509 = vmatprep.subr.mxu0 0.0
      %1510 = vmatpush2.msra.mxu0 0.0
      %1511 = vmatprep.subr.mxu0 0.0
      %1512 = vmatpush2.msra.mxu0 0.0
      %1513 = vmatprep.subr.mxu0 0.0
      %1514 = vmatpush2.msra.mxu0 0.0
      %1515 = vmatprep.subr.mxu0 0.0
      %1516 = vmatpush2.msra.mxu0 0.0
      %1517 = vmatprep.mubr.f32.mxu0 0.0
      %1518 = vmatmul.mubr.f32.gmra.mxu0 %v1355
      %v1519 = vpop.f32.mrf.mxu0
      %v1520 = vadd.f32 0.0, %v1519
      %v1521 = vpop.f32.mrf.mxu0
      %1522 = vmatprep.mubr.f32.mxu0 0.0
      %1523 = vmatmul.mubr.f32.gmra.mxu0 %v1358
      %v1524 = vpop.f32.mrf.mxu0
      %v1525 = vadd.f32 0.0, %v1524
      %v1526 = vpop.f32.mrf.mxu0
      %1527 = vmatprep.mubr.f32.mxu0 0.0
      %1528 = vmatmul.mubr.f32.gmra.mxu0 %v1361
      %v1529 = vpop.f32.mrf.mxu0
      %v1530 = vadd.f32 0.0, %v1529
      %v1531 = vpop.f32.mrf.mxu0
      %1532 = vmatprep.mubr.f32.mxu0 0.0
      %1533 = vmatmul.mubr.f32.gmra.mxu0 %v1364
      %v1534 = vpop.f32.mrf.mxu0
      %v1535 = vadd.f32 0.0, %v1534
      %v1536 = vpop.f32.mrf.mxu0
      %1537 = vmatprep.mubr.f32.mxu0 0.0
      %1538 = vmatmul.mubr.f32.gmra.mxu0 %v1367
      %v1539 = vpop.f32.mrf.mxu0
      %v1540 = vadd.f32 0.0, %v1539
      %v1541 = vpop.f32.mrf.mxu0
      %1542 = vmatprep.mubr.f32.mxu0 0.0
      %1543 = vmatmul.mubr.f32.gmra.mxu0 %v1370
      %v1544 = vpop.f32.mrf.mxu0
      %v1545 = vadd.f32 0.0, %v1544
      %v1546 = vpop.f32.mrf.mxu0
      %1547 = vmatprep.mubr.f32.mxu0 0.0
      %1548 = vmatmul.mubr.f32.gmra.mxu0 %v1373
      %v1549 = vpop.f32.mrf.mxu0
      %v1550 = vadd.f32 0.0, %v1549
      %v1551 = vpop.f32.mrf.mxu0
      %1552 = vmatprep.mubr.f32.mxu0 0.0
      %1553 = vmatmul.mubr.f32.gmra.mxu0 %v1376
      %v1554 = vpop.f32.mrf.mxu0
      %v1555 = vadd.f32 0.0, %v1554
      %v1556 = vpop.f32.mrf.mxu0
      %1557 = vmatprep.mubr.f32.mxu0 0.0
      %1558 = vmatmul.mubr.f32.gmra.mxu0 %v1379
      %v1559 = vpop.f32.mrf.mxu0
      %v1560 = vadd.f32 0.0, %v1559
      %v1561 = vpop.f32.mrf.mxu0
      %1562 = vmatprep.mubr.f32.mxu0 0.0
      %1563 = vmatmul.mubr.f32.gmra.mxu0 %v1382
      %v1564 = vpop.f32.mrf.mxu0
      %v1565 = vadd.f32 0.0, %v1564
      %v1566 = vpop.f32.mrf.mxu0
      %1567 = vmatprep.mubr.f32.mxu0 0.0
      %1568 = vmatmul.mubr.f32.gmra.mxu0 %v1385
      %v1569 = vpop.f32.mrf.mxu0
      %v1570 = vadd.f32 0.0, %v1569
      %v1571 = vpop.f32.mrf.mxu0
      %1572 = vmatprep.mubr.f32.mxu0 0.0
      %1573 = vmatmul.mubr.f32.gmra.mxu0 %v1388
      %v1574 = vpop.f32.mrf.mxu0
      %v1575 = vadd.f32 0.0, %v1574
      %v1576 = vpop.f32.mrf.mxu0
      %1577 = vmatprep.mubr.f32.mxu0 0.0
      %1578 = vmatmul.mubr.f32.gmra.mxu0 %v1391
      %v1579 = vpop.f32.mrf.mxu0
      %v1580 = vadd.f32 0.0, %v1579
      %v1581 = vpop.f32.mrf.mxu0
      %1582 = vmatprep.mubr.f32.mxu0 0.0
      %1583 = vmatmul.mubr.f32.gmra.mxu0 %v1394
      %v1584 = vpop.f32.mrf.mxu0
      %v1585 = vadd.f32 0.0, %v1584
      %v1586 = vpop.f32.mrf.mxu0
      %1587 = vmatprep.mubr.f32.mxu0 0.0
      %1588 = vmatmul.mubr.f32.gmra.mxu0 %v1397
      %v1589 = vpop.f32.mrf.mxu0
      %v1590 = vadd.f32 0.0, %v1589
      %v1591 = vpop.f32.mrf.mxu0
      %1592 = vmatprep.mubr.f32.mxu0 0.0
      %1593 = vmatmul.mubr.f32.gmra.mxu0 %v1400
      %v1594 = vpop.f32.mrf.mxu0
      %v1595 = vadd.f32 0.0, %v1594
      %v1596 = vpop.f32.mrf.mxu0
      %1597 = vmatprep.mubr.f32.mxu0 0.0
      %1598 = vmatmul.mubr.f32.gmra.mxu0 %v1403
      %v1599 = vpop.f32.mrf.mxu0
      %v1600 = vadd.f32 0.0, %v1599
      %v1601 = vpop.f32.mrf.mxu0
      %1602 = vmatprep.mubr.f32.mxu0 0.0
      %1603 = vmatmul.mubr.f32.gmra.mxu0 %v1406
      %v1604 = vpop.f32.mrf.mxu0
      %v1605 = vadd.f32 0.0, %v1604
      %v1606 = vpop.f32.mrf.mxu0
      %1607 = vmatprep.mubr.f32.mxu0 0.0
      %1608 = vmatmul.mubr.f32.gmra.mxu0 %v1409
      %v1609 = vpop.f32.mrf.mxu0
      %v1610 = vadd.f32 0.0, %v1609
      %v1611 = vpop.f32.mrf.mxu0
      %1612 = vmatprep.mubr.f32.mxu0 0.0
      %1613 = vmatmul.mubr.f32.gmra.mxu0 %v1412
      %v1614 = vpop.f32.mrf.mxu0
      %v1615 = vadd.f32 0.0, %v1614
      %v1616 = vpop.f32.mrf.mxu0
      %1617 = vmatprep.mubr.f32.mxu0 0.0
      %1618 = vmatmul.mubr.f32.gmra.mxu0 %v1415
      %v1619 = vpop.f32.mrf.mxu0
      %v1620 = vadd.f32 0.0, %v1619
      %v1621 = vpop.f32.mrf.mxu0
      %1622 = vmatprep.mubr.f32.mxu0 0.0
      %1623 = vmatmul.mubr.f32.gmra.mxu0 %v1418
      %v1624 = vpop.f32.mrf.mxu0
      %v1625 = vadd.f32 0.0, %v1624
      %v1626 = vpop.f32.mrf.mxu0
      %1627 = vmatprep.mubr.f32.mxu0 0.0
      %1628 = vmatmul.mubr.f32.gmra.mxu0 %v1421
      %v1629 = vpop.f32.mrf.mxu0
      %v1630 = vadd.f32 0.0, %v1629
      %v1631 = vpop.f32.mrf.mxu0
      %1632 = vmatprep.mubr.f32.mxu0 0.0
      %1633 = vmatmul.mubr.f32.gmra.mxu0 %v1424
      %v1634 = vpop.f32.mrf.mxu0
      %v1635 = vadd.f32 0.0, %v1634
      %v1636 = vpop.f32.mrf.mxu0
      %1637 = vmatprep.mubr.f32.mxu0 0.0
      %1638 = vmatmul.mubr.f32.gmra.mxu0 %v1427
      %v1639 = vpop.f32.mrf.mxu0
      %v1640 = vadd.f32 0.0, %v1639
      %v1641 = vpop.f32.mrf.mxu0
      %1642 = vmatprep.mubr.f32.mxu0 0.0
      %1643 = vmatmul.mubr.f32.gmra.mxu0 %v1430
      %v1644 = vpop.f32.mrf.mxu0
      %v1645 = vadd.f32 0.0, %v1644
      %v1646 = vpop.f32.mrf.mxu0
      %1647 = vmatprep.mubr.f32.mxu0 0.0
      %1648 = vmatmul.mubr.f32.gmra.mxu0 %v1433
      %v1649 = vpop.f32.mrf.mxu0
      %v1650 = vadd.f32 0.0, %v1649
      %v1651 = vpop.f32.mrf.mxu0
      %1652 = vmatprep.mubr.f32.mxu0 0.0
      %1653 = vmatmul.mubr.f32.gmra.mxu0 %v1436
      %v1654 = vpop.f32.mrf.mxu0
      %v1655 = vadd.f32 0.0, %v1654
      %v1656 = vpop.f32.mrf.mxu0
      %1657 = vmatprep.mubr.f32.mxu0 0.0
      %1658 = vmatmul.mubr.f32.gmra.mxu0 %v1439
      %v1659 = vpop.f32.mrf.mxu0
      %v1660 = vadd.f32 0.0, %v1659
      %v1661 = vpop.f32.mrf.mxu0
      %1662 = vmatprep.mubr.f32.mxu0 0.0
      %1663 = vmatmul.mubr.f32.gmra.mxu0 %v1442
      %v1664 = vpop.f32.mrf.mxu0
      %v1665 = vadd.f32 0.0, %v1664
      %v1666 = vpop.f32.mrf.mxu0
      %1667 = vmatprep.mubr.f32.mxu0 0.0
      %1668 = vmatmul.mubr.f32.gmra.mxu0 %v1445
      %v1669 = vpop.f32.mrf.mxu0
      %v1670 = vadd.f32 0.0, %v1669
      %v1671 = vpop.f32.mrf.mxu0
      %1672 = vmatprep.mubr.f32.mxu0 0.0
      %1673 = vmatmul.mubr.f32.gmra.mxu0 %v1448
      %v1674 = vpop.f32.mrf.mxu0
      %v1675 = vadd.f32 0.0, %v1674
      %v1676 = vpop.f32.mrf.mxu0
      %1677 = vdwg.mxu0
      %v1678 = vadd.f32 %v1285, %v1520
      %v1679 = vadd.f32 %v1286, %v1525
      %v1680 = vadd.f32 %v1287, %v1530
      %v1681 = vadd.f32 %v1288, %v1535
      %v1682 = vadd.f32 %v1289, %v1540
      %v1683 = vadd.f32 %v1290, %v1545
      %v1684 = vadd.f32 %v1291, %v1550
      %v1685 = vadd.f32 %v1292, %v1555
      %v1686 = vadd.f32 %v1293, %v1560
      %v1687 = vadd.f32 %v1294, %v1565
      %v1688 = vadd.f32 %v1295, %v1570
      %v1689 = vadd.f32 %v1296, %v1575
      %v1690 = vadd.f32 %v1297, %v1580
      %v1691 = vadd.f32 %v1298, %v1585
      %v1692 = vadd.f32 %v1299, %v1590
      %v1693 = vadd.f32 %v1300, %v1595
      %v1694 = vadd.f32 %v1301, %v1600
      %v1695 = vadd.f32 %v1302, %v1605
      %v1696 = vadd.f32 %v1303, %v1610
      %v1697 = vadd.f32 %v1304, %v1615
      %v1698 = vadd.f32 %v1305, %v1620
      %v1699 = vadd.f32 %v1306, %v1625
      %v1700 = vadd.f32 %v1307, %v1630
      %v1701 = vadd.f32 %v1308, %v1635
      %v1702 = vadd.f32 %v1309, %v1640
      %v1703 = vadd.f32 %v1310, %v1645
      %v1704 = vadd.f32 %v1311, %v1650
      %v1705 = vadd.f32 %v1312, %v1655
      %v1706 = vadd.f32 %v1313, %v1660
      %v1707 = vadd.f32 %v1314, %v1665
      %v1708 = vadd.f32 %v1315, %v1670
      %v1709 = vadd.f32 %v1316, %v1675
      %v1710 = vld [vmem:[%s1319 + $0x1] sm:$0xff]
      %v1711 = vld [vmem:[%s1319 + $0x9] sm:$0xff]
      %v1712 = vld [vmem:[%s1319 + $0x19] sm:$0xff]
      %v1713 = vld [vmem:[%s1319 + $0x21] sm:$0xff]
      %v1714 = vld [vmem:[%s1319 + $0x31] sm:$0xff]
      %v1715 = vld [vmem:[%s1319 + $0x39] sm:$0xff]
      %v1716 = vld [vmem:[%s1319 + $0x49] sm:$0xff]
      %v1717 = vld [vmem:[%s1319 + $0x51] sm:$0xff]
      %v1718 = vld [vmem:[%s1319 + $0x61] sm:$0xff]
      %v1719 = vld [vmem:[%s1319 + $0x69] sm:$0xff]
      %v1720 = vld [vmem:[%s1319 + $0x79] sm:$0xff]
      %v1721 = vld [vmem:[%s1319 + $0x81] sm:$0xff]
      %v1722 = vld [vmem:[%s1319 + $0x91] sm:$0xff]
      %v1723 = vld [vmem:[%s1319 + $0x99] sm:$0xff]
      %v1724 = vld [vmem:[%s1319 + $0xa9] sm:$0xff]
      %v1725 = vld [vmem:[%s1319 + $0xb1] sm:$0xff]
      %v1726 = vld [vmem:[%s1319 + $0xc1] sm:$0xff]
      %v1727 = vld [vmem:[%s1319 + $0xc9] sm:$0xff]
      %v1728 = vld [vmem:[%s1319 + $0xd9] sm:$0xff]
      %v1729 = vld [vmem:[%s1319 + $0xe1] sm:$0xff]
      %v1730 = vld [vmem:[%s1319 + $0xf1] sm:$0xff]
      %v1731 = vld [vmem:[%s1319 + $0xf9] sm:$0xff]
      %v1732 = vld [vmem:[%s1319 + $0x109] sm:$0xff]
      %v1733 = vld [vmem:[%s1319 + $0x111] sm:$0xff]
      %v1734 = vld [vmem:[%s1319 + $0x121] sm:$0xff]
      %v1735 = vld [vmem:[%s1319 + $0x129] sm:$0xff]
      %v1736 = vld [vmem:[%s1319 + $0x139] sm:$0xff]
      %v1737 = vld [vmem:[%s1319 + $0x141] sm:$0xff]
      %v1738 = vld [vmem:[%s1319 + $0x151] sm:$0xff]
      %v1739 = vld [vmem:[%s1319 + $0x159] sm:$0xff]
      %v1740 = vld [vmem:[%s1319 + $0x169] sm:$0xff]
      %v1741 = vld [vmem:[%s1319 + $0x171] sm:$0xff]
      %s1742 = scalar_lea.vmem %s1, 16
      %v1743 = vld [vmem:[%s1742] sm:$0xf]
      %v1745 = vsel %vm277, %v1710, 0
      %v1748 = vsel %vm277, %v1711, 0
      %v1751 = vsel %vm277, %v1712, 0
      %v1754 = vsel %vm277, %v1713, 0
      %v1757 = vsel %vm277, %v1714, 0
      %v1760 = vsel %vm277, %v1715, 0
      %v1763 = vsel %vm277, %v1716, 0
      %v1766 = vsel %vm277, %v1717, 0
      %v1769 = vsel %vm277, %v1718, 0
      %v1772 = vsel %vm277, %v1719, 0
      %v1775 = vsel %vm277, %v1720, 0
      %v1778 = vsel %vm277, %v1721, 0
      %v1781 = vsel %vm277, %v1722, 0
      %v1784 = vsel %vm277, %v1723, 0
      %v1787 = vsel %vm277, %v1724, 0
      %v1790 = vsel %vm277, %v1725, 0
      %v1793 = vsel %vm277, %v1726, 0
      %v1796 = vsel %vm277, %v1727, 0
      %v1799 = vsel %vm277, %v1728, 0
      %v1802 = vsel %vm277, %v1729, 0
      %v1805 = vsel %vm277, %v1730, 0
      %v1808 = vsel %vm277, %v1731, 0
      %v1811 = vsel %vm277, %v1732, 0
      %v1814 = vsel %vm277, %v1733, 0
      %v1817 = vsel %vm277, %v1734, 0
      %v1820 = vsel %vm277, %v1735, 0
      %v1823 = vsel %vm277, %v1736, 0
      %v1826 = vsel %vm277, %v1737, 0
      %v1829 = vsel %vm277, %v1738, 0
      %v1832 = vsel %vm277, %v1739, 0
      %v1835 = vsel %vm277, %v1740, 0
      %v1838 = vsel %vm277, %v1741, 0
      %v1841 = vsel %vm374, %v1743, 0
      %1843 = vmatprep.subr.mxu0 0.0
      %1844 = vmatpush1.msra.mxu0 0.0
      %1845 = vmatprep.subr.mxu0 0.0
      %1846 = vmatpush1.msra.mxu0 0.0
      %1847 = vmatprep.subr.mxu0 0.0
      %1848 = vmatpush1.msra.mxu0 0.0
      %1849 = vmatprep.subr.mxu0 0.0
      %1850 = vmatpush1.msra.mxu0 0.0
      %1851 = vmatprep.subr.mxu0 0.0
      %1852 = vmatpush1.msra.mxu0 0.0
      %1853 = vmatprep.subr.mxu0 0.0
      %1854 = vmatpush1.msra.mxu0 0.0
      %1855 = vmatprep.subr.mxu0 0.0
      %1856 = vmatpush1.msra.mxu0 0.0
      %1857 = vmatprep.subr.mxu0 0.0
      %1858 = vmatpush1.msra.mxu0 0.0
      %1859 = vmatprep.subr.mxu0 0.0
      %1860 = vmatpush1.msra.mxu0 0.0
      %1861 = vmatprep.subr.mxu0 0.0
      %1862 = vmatpush1.msra.mxu0 0.0
      %1863 = vmatprep.subr.mxu0 0.0
      %1864 = vmatpush1.msra.mxu0 0.0
      %1865 = vmatprep.subr.mxu0 0.0
      %1866 = vmatpush1.msra.mxu0 0.0
      %1867 = vmatprep.subr.mxu0 0.0
      %1868 = vmatpush1.msra.mxu0 0.0
      %1869 = vmatprep.subr.mxu0 0.0
      %1870 = vmatpush1.msra.mxu0 0.0
      %1871 = vmatprep.subr.mxu0 0.0
      %1872 = vmatpush1.msra.mxu0 0.0
      %1873 = vmatprep.subr.mxu0 0.0
      %1874 = vmatpush1.msra.mxu0 %v1841
      %1875 = vmatprep.subr.mxu0 0.0
      %1876 = vmatpush2.msra.mxu0 0.0
      %1877 = vmatprep.subr.mxu0 0.0
      %1878 = vmatpush2.msra.mxu0 0.0
      %1879 = vmatprep.subr.mxu0 0.0
      %1880 = vmatpush2.msra.mxu0 0.0
      %1881 = vmatprep.subr.mxu0 0.0
      %1882 = vmatpush2.msra.mxu0 0.0
      %1883 = vmatprep.subr.mxu0 0.0
      %1884 = vmatpush2.msra.mxu0 0.0
      %1885 = vmatprep.subr.mxu0 0.0
      %1886 = vmatpush2.msra.mxu0 0.0
      %1887 = vmatprep.subr.mxu0 0.0
      %1888 = vmatpush2.msra.mxu0 0.0
      %1889 = vmatprep.subr.mxu0 0.0
      %1890 = vmatpush2.msra.mxu0 0.0
      %1891 = vmatprep.subr.mxu0 0.0
      %1892 = vmatpush2.msra.mxu0 0.0
      %1893 = vmatprep.subr.mxu0 0.0
      %1894 = vmatpush2.msra.mxu0 0.0
      %1895 = vmatprep.subr.mxu0 0.0
      %1896 = vmatpush2.msra.mxu0 0.0
      %1897 = vmatprep.subr.mxu0 0.0
      %1898 = vmatpush2.msra.mxu0 0.0
      %1899 = vmatprep.subr.mxu0 0.0
      %1900 = vmatpush2.msra.mxu0 0.0
      %1901 = vmatprep.subr.mxu0 0.0
      %1902 = vmatpush2.msra.mxu0 0.0
      %1903 = vmatprep.subr.mxu0 0.0
      %1904 = vmatpush2.msra.mxu0 0.0
      %1905 = vmatprep.subr.mxu0 0.0
      %1906 = vmatpush2.msra.mxu0 0.0
      %1907 = vmatprep.mubr.f32.mxu0 0.0
      %1908 = vmatmul.mubr.f32.gmra.mxu0 %v1745
      %v1909 = vpop.f32.mrf.mxu0
      %v1910 = vadd.f32 0.0, %v1909
      %v1911 = vpop.f32.mrf.mxu0
      %1912 = vmatprep.mubr.f32.mxu0 0.0
      %1913 = vmatmul.mubr.f32.gmra.mxu0 %v1748
      %v1914 = vpop.f32.mrf.mxu0
      %v1915 = vadd.f32 0.0, %v1914
      %v1916 = vpop.f32.mrf.mxu0
      %1917 = vmatprep.mubr.f32.mxu0 0.0
      %1918 = vmatmul.mubr.f32.gmra.mxu0 %v1751
      %v1919 = vpop.f32.mrf.mxu0
      %v1920 = vadd.f32 0.0, %v1919
      %v1921 = vpop.f32.mrf.mxu0
      %1922 = vmatprep.mubr.f32.mxu0 0.0
      %1923 = vmatmul.mubr.f32.gmra.mxu0 %v1754
      %v1924 = vpop.f32.mrf.mxu0
      %v1925 = vadd.f32 0.0, %v1924
      %v1926 = vpop.f32.mrf.mxu0
      %1927 = vmatprep.mubr.f32.mxu0 0.0
      %1928 = vmatmul.mubr.f32.gmra.mxu0 %v1757
      %v1929 = vpop.f32.mrf.mxu0
      %v1930 = vadd.f32 0.0, %v1929
      %v1931 = vpop.f32.mrf.mxu0
      %1932 = vmatprep.mubr.f32.mxu0 0.0
      %1933 = vmatmul.mubr.f32.gmra.mxu0 %v1760
      %v1934 = vpop.f32.mrf.mxu0
      %v1935 = vadd.f32 0.0, %v1934
      %v1936 = vpop.f32.mrf.mxu0
      %1937 = vmatprep.mubr.f32.mxu0 0.0
      %1938 = vmatmul.mubr.f32.gmra.mxu0 %v1763
      %v1939 = vpop.f32.mrf.mxu0
      %v1940 = vadd.f32 0.0, %v1939
      %v1941 = vpop.f32.mrf.mxu0
      %1942 = vmatprep.mubr.f32.mxu0 0.0
      %1943 = vmatmul.mubr.f32.gmra.mxu0 %v1766
      %v1944 = vpop.f32.mrf.mxu0
      %v1945 = vadd.f32 0.0, %v1944
      %v1946 = vpop.f32.mrf.mxu0
      %1947 = vmatprep.mubr.f32.mxu0 0.0
      %1948 = vmatmul.mubr.f32.gmra.mxu0 %v1769
      %v1949 = vpop.f32.mrf.mxu0
      %v1950 = vadd.f32 0.0, %v1949
      %v1951 = vpop.f32.mrf.mxu0
      %1952 = vmatprep.mubr.f32.mxu0 0.0
      %1953 = vmatmul.mubr.f32.gmra.mxu0 %v1772
      %v1954 = vpop.f32.mrf.mxu0
      %v1955 = vadd.f32 0.0, %v1954
      %v1956 = vpop.f32.mrf.mxu0
      %1957 = vmatprep.mubr.f32.mxu0 0.0
      %1958 = vmatmul.mubr.f32.gmra.mxu0 %v1775
      %v1959 = vpop.f32.mrf.mxu0
      %v1960 = vadd.f32 0.0, %v1959
      %v1961 = vpop.f32.mrf.mxu0
      %1962 = vmatprep.mubr.f32.mxu0 0.0
      %1963 = vmatmul.mubr.f32.gmra.mxu0 %v1778
      %v1964 = vpop.f32.mrf.mxu0
      %v1965 = vadd.f32 0.0, %v1964
      %v1966 = vpop.f32.mrf.mxu0
      %1967 = vmatprep.mubr.f32.mxu0 0.0
      %1968 = vmatmul.mubr.f32.gmra.mxu0 %v1781
      %v1969 = vpop.f32.mrf.mxu0
      %v1970 = vadd.f32 0.0, %v1969
      %v1971 = vpop.f32.mrf.mxu0
      %1972 = vmatprep.mubr.f32.mxu0 0.0
      %1973 = vmatmul.mubr.f32.gmra.mxu0 %v1784
      %v1974 = vpop.f32.mrf.mxu0
      %v1975 = vadd.f32 0.0, %v1974
      %v1976 = vpop.f32.mrf.mxu0
      %1977 = vmatprep.mubr.f32.mxu0 0.0
      %1978 = vmatmul.mubr.f32.gmra.mxu0 %v1787
      %v1979 = vpop.f32.mrf.mxu0
      %v1980 = vadd.f32 0.0, %v1979
      %v1981 = vpop.f32.mrf.mxu0
      %1982 = vmatprep.mubr.f32.mxu0 0.0
      %1983 = vmatmul.mubr.f32.gmra.mxu0 %v1790
      %v1984 = vpop.f32.mrf.mxu0
      %v1985 = vadd.f32 0.0, %v1984
      %v1986 = vpop.f32.mrf.mxu0
      %1987 = vmatprep.mubr.f32.mxu0 0.0
      %1988 = vmatmul.mubr.f32.gmra.mxu0 %v1793
      %v1989 = vpop.f32.mrf.mxu0
      %v1990 = vadd.f32 0.0, %v1989
      %v1991 = vpop.f32.mrf.mxu0
      %1992 = vmatprep.mubr.f32.mxu0 0.0
      %1993 = vmatmul.mubr.f32.gmra.mxu0 %v1796
      %v1994 = vpop.f32.mrf.mxu0
      %v1995 = vadd.f32 0.0, %v1994
      %v1996 = vpop.f32.mrf.mxu0
      %1997 = vmatprep.mubr.f32.mxu0 0.0
      %1998 = vmatmul.mubr.f32.gmra.mxu0 %v1799
      %v1999 = vpop.f32.mrf.mxu0
      %v2000 = vadd.f32 0.0, %v1999
      %v2001 = vpop.f32.mrf.mxu0
      %2002 = vmatprep.mubr.f32.mxu0 0.0
      %2003 = vmatmul.mubr.f32.gmra.mxu0 %v1802
      %v2004 = vpop.f32.mrf.mxu0
      %v2005 = vadd.f32 0.0, %v2004
      %v2006 = vpop.f32.mrf.mxu0
      %2007 = vmatprep.mubr.f32.mxu0 0.0
      %2008 = vmatmul.mubr.f32.gmra.mxu0 %v1805
      %v2009 = vpop.f32.mrf.mxu0
      %v2010 = vadd.f32 0.0, %v2009
      %v2011 = vpop.f32.mrf.mxu0
      %2012 = vmatprep.mubr.f32.mxu0 0.0
      %2013 = vmatmul.mubr.f32.gmra.mxu0 %v1808
      %v2014 = vpop.f32.mrf.mxu0
      %v2015 = vadd.f32 0.0, %v2014
      %v2016 = vpop.f32.mrf.mxu0
      %2017 = vmatprep.mubr.f32.mxu0 0.0
      %2018 = vmatmul.mubr.f32.gmra.mxu0 %v1811
      %v2019 = vpop.f32.mrf.mxu0
      %v2020 = vadd.f32 0.0, %v2019
      %v2021 = vpop.f32.mrf.mxu0
      %2022 = vmatprep.mubr.f32.mxu0 0.0
      %2023 = vmatmul.mubr.f32.gmra.mxu0 %v1814
      %v2024 = vpop.f32.mrf.mxu0
      %v2025 = vadd.f32 0.0, %v2024
      %v2026 = vpop.f32.mrf.mxu0
      %2027 = vmatprep.mubr.f32.mxu0 0.0
      %2028 = vmatmul.mubr.f32.gmra.mxu0 %v1817
      %v2029 = vpop.f32.mrf.mxu0
      %v2030 = vadd.f32 0.0, %v2029
      %v2031 = vpop.f32.mrf.mxu0
      %2032 = vmatprep.mubr.f32.mxu0 0.0
      %2033 = vmatmul.mubr.f32.gmra.mxu0 %v1820
      %v2034 = vpop.f32.mrf.mxu0
      %v2035 = vadd.f32 0.0, %v2034
      %v2036 = vpop.f32.mrf.mxu0
      %2037 = vmatprep.mubr.f32.mxu0 0.0
      %2038 = vmatmul.mubr.f32.gmra.mxu0 %v1823
      %v2039 = vpop.f32.mrf.mxu0
      %v2040 = vadd.f32 0.0, %v2039
      %v2041 = vpop.f32.mrf.mxu0
      %2042 = vmatprep.mubr.f32.mxu0 0.0
      %2043 = vmatmul.mubr.f32.gmra.mxu0 %v1826
      %v2044 = vpop.f32.mrf.mxu0
      %v2045 = vadd.f32 0.0, %v2044
      %v2046 = vpop.f32.mrf.mxu0
      %2047 = vmatprep.mubr.f32.mxu0 0.0
      %2048 = vmatmul.mubr.f32.gmra.mxu0 %v1829
      %v2049 = vpop.f32.mrf.mxu0
      %v2050 = vadd.f32 0.0, %v2049
      %v2051 = vpop.f32.mrf.mxu0
      %2052 = vmatprep.mubr.f32.mxu0 0.0
      %2053 = vmatmul.mubr.f32.gmra.mxu0 %v1832
      %v2054 = vpop.f32.mrf.mxu0
      %v2055 = vadd.f32 0.0, %v2054
      %v2056 = vpop.f32.mrf.mxu0
      %2057 = vmatprep.mubr.f32.mxu0 0.0
      %2058 = vmatmul.mubr.f32.gmra.mxu0 %v1835
      %v2059 = vpop.f32.mrf.mxu0
      %v2060 = vadd.f32 0.0, %v2059
      %v2061 = vpop.f32.mrf.mxu0
      %2062 = vmatprep.mubr.f32.mxu0 0.0
      %2063 = vmatmul.mubr.f32.gmra.mxu0 %v1838
      %v2064 = vpop.f32.mrf.mxu0
      %v2065 = vadd.f32 0.0, %v2064
      %v2066 = vpop.f32.mrf.mxu0
      %2067 = vdwg.mxu0
      %v2068 = vadd.f32 %v1678, %v1910
      %v2069 = vadd.f32 %v1679, %v1915
      %v2070 = vadd.f32 %v1680, %v1920
      %v2071 = vadd.f32 %v1681, %v1925
      %v2072 = vadd.f32 %v1682, %v1930
      %v2073 = vadd.f32 %v1683, %v1935
      %v2074 = vadd.f32 %v1684, %v1940
      %v2075 = vadd.f32 %v1685, %v1945
      %v2076 = vadd.f32 %v1686, %v1950
      %v2077 = vadd.f32 %v1687, %v1955
      %v2078 = vadd.f32 %v1688, %v1960
      %v2079 = vadd.f32 %v1689, %v1965
      %v2080 = vadd.f32 %v1690, %v1970
      %v2081 = vadd.f32 %v1691, %v1975
      %v2082 = vadd.f32 %v1692, %v1980
      %v2083 = vadd.f32 %v1693, %v1985
      %v2084 = vadd.f32 %v1694, %v1990
      %v2085 = vadd.f32 %v1695, %v1995
      %v2086 = vadd.f32 %v1696, %v2000
      %v2087 = vadd.f32 %v1697, %v2005
      %v2088 = vadd.f32 %v1698, %v2010
      %v2089 = vadd.f32 %v1699, %v2015
      %v2090 = vadd.f32 %v1700, %v2020
      %v2091 = vadd.f32 %v1701, %v2025
      %v2092 = vadd.f32 %v1702, %v2030
      %v2093 = vadd.f32 %v1703, %v2035
      %v2094 = vadd.f32 %v1704, %v2040
      %v2095 = vadd.f32 %v1705, %v2045
      %v2096 = vadd.f32 %v1706, %v2050
      %v2097 = vadd.f32 %v1707, %v2055
      %v2098 = vadd.f32 %v1708, %v2060
      %v2099 = vadd.f32 %v1709, %v2065
      %v2100 = vld [vmem:[%s1319 + $0x2] sm:$0xff]
      %v2101 = vld [vmem:[%s1319 + $0xa] sm:$0xff]
      %v2102 = vld [vmem:[%s1319 + $0x1a] sm:$0xff]
      %v2103 = vld [vmem:[%s1319 + $0x22] sm:$0xff]
      %v2104 = vld [vmem:[%s1319 + $0x32] sm:$0xff]
      %v2105 = vld [vmem:[%s1319 + $0x3a] sm:$0xff]
      %v2106 = vld [vmem:[%s1319 + $0x4a] sm:$0xff]
      %v2107 = vld [vmem:[%s1319 + $0x52] sm:$0xff]
      %v2108 = vld [vmem:[%s1319 + $0x62] sm:$0xff]
      %v2109 = vld [vmem:[%s1319 + $0x6a] sm:$0xff]
      %v2110 = vld [vmem:[%s1319 + $0x7a] sm:$0xff]
      %v2111 = vld [vmem:[%s1319 + $0x82] sm:$0xff]
      %v2112 = vld [vmem:[%s1319 + $0x92] sm:$0xff]
      %v2113 = vld [vmem:[%s1319 + $0x9a] sm:$0xff]
      %v2114 = vld [vmem:[%s1319 + $0xaa] sm:$0xff]
      %v2115 = vld [vmem:[%s1319 + $0xb2] sm:$0xff]
      %v2116 = vld [vmem:[%s1319 + $0xc2] sm:$0xff]
      %v2117 = vld [vmem:[%s1319 + $0xca] sm:$0xff]
      %v2118 = vld [vmem:[%s1319 + $0xda] sm:$0xff]
      %v2119 = vld [vmem:[%s1319 + $0xe2] sm:$0xff]
      %v2120 = vld [vmem:[%s1319 + $0xf2] sm:$0xff]
      %v2121 = vld [vmem:[%s1319 + $0xfa] sm:$0xff]
      %v2122 = vld [vmem:[%s1319 + $0x10a] sm:$0xff]
      %v2123 = vld [vmem:[%s1319 + $0x112] sm:$0xff]
      %v2124 = vld [vmem:[%s1319 + $0x122] sm:$0xff]
      %v2125 = vld [vmem:[%s1319 + $0x12a] sm:$0xff]
      %v2126 = vld [vmem:[%s1319 + $0x13a] sm:$0xff]
      %v2127 = vld [vmem:[%s1319 + $0x142] sm:$0xff]
      %v2128 = vld [vmem:[%s1319 + $0x152] sm:$0xff]
      %v2129 = vld [vmem:[%s1319 + $0x15a] sm:$0xff]
      %v2130 = vld [vmem:[%s1319 + $0x16a] sm:$0xff]
      %v2131 = vld [vmem:[%s1319 + $0x172] sm:$0xff]
      %s2132 = scalar_lea.vmem %s1, 20
      %v2133 = vld [vmem:[%s2132] sm:$0xf]
      %v2135 = vsel %vm277, %v2100, 0
      %v2138 = vsel %vm277, %v2101, 0
      %v2141 = vsel %vm277, %v2102, 0
      %v2144 = vsel %vm277, %v2103, 0
      %v2147 = vsel %vm277, %v2104, 0
      %v2150 = vsel %vm277, %v2105, 0
      %v2153 = vsel %vm277, %v2106, 0
      %v2156 = vsel %vm277, %v2107, 0
      %v2159 = vsel %vm277, %v2108, 0
      %v2162 = vsel %vm277, %v2109, 0
      %v2165 = vsel %vm277, %v2110, 0
      %v2168 = vsel %vm277, %v2111, 0
      %v2171 = vsel %vm277, %v2112, 0
      %v2174 = vsel %vm277, %v2113, 0
      %v2177 = vsel %vm277, %v2114, 0
      %v2180 = vsel %vm277, %v2115, 0
      %v2183 = vsel %vm277, %v2116, 0
      %v2186 = vsel %vm277, %v2117, 0
      %v2189 = vsel %vm277, %v2118, 0
      %v2192 = vsel %vm277, %v2119, 0
      %v2195 = vsel %vm277, %v2120, 0
      %v2198 = vsel %vm277, %v2121, 0
      %v2201 = vsel %vm277, %v2122, 0
      %v2204 = vsel %vm277, %v2123, 0
      %v2207 = vsel %vm277, %v2124, 0
      %v2210 = vsel %vm277, %v2125, 0
      %v2213 = vsel %vm277, %v2126, 0
      %v2216 = vsel %vm277, %v2127, 0
      %v2219 = vsel %vm277, %v2128, 0
      %v2222 = vsel %vm277, %v2129, 0
      %v2225 = vsel %vm277, %v2130, 0
      %v2228 = vsel %vm277, %v2131, 0
      %v2231 = vsel %vm374, %v2133, 0
      %2233 = vmatprep.subr.mxu0 0.0
      %2234 = vmatpush1.msra.mxu0 0.0
      %2235 = vmatprep.subr.mxu0 0.0
      %2236 = vmatpush1.msra.mxu0 0.0
      %2237 = vmatprep.subr.mxu0 0.0
      %2238 = vmatpush1.msra.mxu0 0.0
      %2239 = vmatprep.subr.mxu0 0.0
      %2240 = vmatpush1.msra.mxu0 0.0
      %2241 = vmatprep.subr.mxu0 0.0
      %2242 = vmatpush1.msra.mxu0 0.0
      %2243 = vmatprep.subr.mxu0 0.0
      %2244 = vmatpush1.msra.mxu0 0.0
      %2245 = vmatprep.subr.mxu0 0.0
      %2246 = vmatpush1.msra.mxu0 0.0
      %2247 = vmatprep.subr.mxu0 0.0
      %2248 = vmatpush1.msra.mxu0 0.0
      %2249 = vmatprep.subr.mxu0 0.0
      %2250 = vmatpush1.msra.mxu0 0.0
      %2251 = vmatprep.subr.mxu0 0.0
      %2252 = vmatpush1.msra.mxu0 0.0
      %2253 = vmatprep.subr.mxu0 0.0
      %2254 = vmatpush1.msra.mxu0 0.0
      %2255 = vmatprep.subr.mxu0 0.0
      %2256 = vmatpush1.msra.mxu0 0.0
      %2257 = vmatprep.subr.mxu0 0.0
      %2258 = vmatpush1.msra.mxu0 0.0
      %2259 = vmatprep.subr.mxu0 0.0
      %2260 = vmatpush1.msra.mxu0 0.0
      %2261 = vmatprep.subr.mxu0 0.0
      %2262 = vmatpush1.msra.mxu0 0.0
      %2263 = vmatprep.subr.mxu0 0.0
      %2264 = vmatpush1.msra.mxu0 %v2231
      %2265 = vmatprep.subr.mxu0 0.0
      %2266 = vmatpush2.msra.mxu0 0.0
      %2267 = vmatprep.subr.mxu0 0.0
      %2268 = vmatpush2.msra.mxu0 0.0
      %2269 = vmatprep.subr.mxu0 0.0
      %2270 = vmatpush2.msra.mxu0 0.0
      %2271 = vmatprep.subr.mxu0 0.0
      %2272 = vmatpush2.msra.mxu0 0.0
      %2273 = vmatprep.subr.mxu0 0.0
      %2274 = vmatpush2.msra.mxu0 0.0
      %2275 = vmatprep.subr.mxu0 0.0
      %2276 = vmatpush2.msra.mxu0 0.0
      %2277 = vmatprep.subr.mxu0 0.0
      %2278 = vmatpush2.msra.mxu0 0.0
      %2279 = vmatprep.subr.mxu0 0.0
      %2280 = vmatpush2.msra.mxu0 0.0
      %2281 = vmatprep.subr.mxu0 0.0
      %2282 = vmatpush2.msra.mxu0 0.0
      %2283 = vmatprep.subr.mxu0 0.0
      %2284 = vmatpush2.msra.mxu0 0.0
      %2285 = vmatprep.subr.mxu0 0.0
      %2286 = vmatpush2.msra.mxu0 0.0
      %2287 = vmatprep.subr.mxu0 0.0
      %2288 = vmatpush2.msra.mxu0 0.0
      %2289 = vmatprep.subr.mxu0 0.0
      %2290 = vmatpush2.msra.mxu0 0.0
      %2291 = vmatprep.subr.mxu0 0.0
      %2292 = vmatpush2.msra.mxu0 0.0
      %2293 = vmatprep.subr.mxu0 0.0
      %2294 = vmatpush2.msra.mxu0 0.0
      %2295 = vmatprep.subr.mxu0 0.0
      %2296 = vmatpush2.msra.mxu0 0.0
      %2297 = vmatprep.mubr.f32.mxu0 0.0
      %2298 = vmatmul.mubr.f32.gmra.mxu0 %v2135
      %v2299 = vpop.f32.mrf.mxu0
      %v2300 = vadd.f32 0.0, %v2299
      %v2301 = vpop.f32.mrf.mxu0
      %2302 = vmatprep.mubr.f32.mxu0 0.0
      %2303 = vmatmul.mubr.f32.gmra.mxu0 %v2138
      %v2304 = vpop.f32.mrf.mxu0
      %v2305 = vadd.f32 0.0, %v2304
      %v2306 = vpop.f32.mrf.mxu0
      %2307 = vmatprep.mubr.f32.mxu0 0.0
      %2308 = vmatmul.mubr.f32.gmra.mxu0 %v2141
      %v2309 = vpop.f32.mrf.mxu0
      %v2310 = vadd.f32 0.0, %v2309
      %v2311 = vpop.f32.mrf.mxu0
      %2312 = vmatprep.mubr.f32.mxu0 0.0
      %2313 = vmatmul.mubr.f32.gmra.mxu0 %v2144
      %v2314 = vpop.f32.mrf.mxu0
      %v2315 = vadd.f32 0.0, %v2314
      %v2316 = vpop.f32.mrf.mxu0
      %2317 = vmatprep.mubr.f32.mxu0 0.0
      %2318 = vmatmul.mubr.f32.gmra.mxu0 %v2147
      %v2319 = vpop.f32.mrf.mxu0
      %v2320 = vadd.f32 0.0, %v2319
      %v2321 = vpop.f32.mrf.mxu0
      %2322 = vmatprep.mubr.f32.mxu0 0.0
      %2323 = vmatmul.mubr.f32.gmra.mxu0 %v2150
      %v2324 = vpop.f32.mrf.mxu0
      %v2325 = vadd.f32 0.0, %v2324
      %v2326 = vpop.f32.mrf.mxu0
      %2327 = vmatprep.mubr.f32.mxu0 0.0
      %2328 = vmatmul.mubr.f32.gmra.mxu0 %v2153
      %v2329 = vpop.f32.mrf.mxu0
      %v2330 = vadd.f32 0.0, %v2329
      %v2331 = vpop.f32.mrf.mxu0
      %2332 = vmatprep.mubr.f32.mxu0 0.0
      %2333 = vmatmul.mubr.f32.gmra.mxu0 %v2156
      %v2334 = vpop.f32.mrf.mxu0
      %v2335 = vadd.f32 0.0, %v2334
      %v2336 = vpop.f32.mrf.mxu0
      %2337 = vmatprep.mubr.f32.mxu0 0.0
      %2338 = vmatmul.mubr.f32.gmra.mxu0 %v2159
      %v2339 = vpop.f32.mrf.mxu0
      %v2340 = vadd.f32 0.0, %v2339
      %v2341 = vpop.f32.mrf.mxu0
      %2342 = vmatprep.mubr.f32.mxu0 0.0
      %2343 = vmatmul.mubr.f32.gmra.mxu0 %v2162
      %v2344 = vpop.f32.mrf.mxu0
      %v2345 = vadd.f32 0.0, %v2344
      %v2346 = vpop.f32.mrf.mxu0
      %2347 = vmatprep.mubr.f32.mxu0 0.0
      %2348 = vmatmul.mubr.f32.gmra.mxu0 %v2165
      %v2349 = vpop.f32.mrf.mxu0
      %v2350 = vadd.f32 0.0, %v2349
      %v2351 = vpop.f32.mrf.mxu0
      %2352 = vmatprep.mubr.f32.mxu0 0.0
      %2353 = vmatmul.mubr.f32.gmra.mxu0 %v2168
      %v2354 = vpop.f32.mrf.mxu0
      %v2355 = vadd.f32 0.0, %v2354
      %v2356 = vpop.f32.mrf.mxu0
      %2357 = vmatprep.mubr.f32.mxu0 0.0
      %2358 = vmatmul.mubr.f32.gmra.mxu0 %v2171
      %v2359 = vpop.f32.mrf.mxu0
      %v2360 = vadd.f32 0.0, %v2359
      %v2361 = vpop.f32.mrf.mxu0
      %2362 = vmatprep.mubr.f32.mxu0 0.0
      %2363 = vmatmul.mubr.f32.gmra.mxu0 %v2174
      %v2364 = vpop.f32.mrf.mxu0
      %v2365 = vadd.f32 0.0, %v2364
      %v2366 = vpop.f32.mrf.mxu0
      %2367 = vmatprep.mubr.f32.mxu0 0.0
      %2368 = vmatmul.mubr.f32.gmra.mxu0 %v2177
      %v2369 = vpop.f32.mrf.mxu0
      %v2370 = vadd.f32 0.0, %v2369
      %v2371 = vpop.f32.mrf.mxu0
      %2372 = vmatprep.mubr.f32.mxu0 0.0
      %2373 = vmatmul.mubr.f32.gmra.mxu0 %v2180
      %v2374 = vpop.f32.mrf.mxu0
      %v2375 = vadd.f32 0.0, %v2374
      %v2376 = vpop.f32.mrf.mxu0
      %2377 = vmatprep.mubr.f32.mxu0 0.0
      %2378 = vmatmul.mubr.f32.gmra.mxu0 %v2183
      %v2379 = vpop.f32.mrf.mxu0
      %v2380 = vadd.f32 0.0, %v2379
      %v2381 = vpop.f32.mrf.mxu0
      %2382 = vmatprep.mubr.f32.mxu0 0.0
      %2383 = vmatmul.mubr.f32.gmra.mxu0 %v2186
      %v2384 = vpop.f32.mrf.mxu0
      %v2385 = vadd.f32 0.0, %v2384
      %v2386 = vpop.f32.mrf.mxu0
      %2387 = vmatprep.mubr.f32.mxu0 0.0
      %2388 = vmatmul.mubr.f32.gmra.mxu0 %v2189
      %v2389 = vpop.f32.mrf.mxu0
      %v2390 = vadd.f32 0.0, %v2389
      %v2391 = vpop.f32.mrf.mxu0
      %2392 = vmatprep.mubr.f32.mxu0 0.0
      %2393 = vmatmul.mubr.f32.gmra.mxu0 %v2192
      %v2394 = vpop.f32.mrf.mxu0
      %v2395 = vadd.f32 0.0, %v2394
      %v2396 = vpop.f32.mrf.mxu0
      %2397 = vmatprep.mubr.f32.mxu0 0.0
      %2398 = vmatmul.mubr.f32.gmra.mxu0 %v2195
      %v2399 = vpop.f32.mrf.mxu0
      %v2400 = vadd.f32 0.0, %v2399
      %v2401 = vpop.f32.mrf.mxu0
      %2402 = vmatprep.mubr.f32.mxu0 0.0
      %2403 = vmatmul.mubr.f32.gmra.mxu0 %v2198
      %v2404 = vpop.f32.mrf.mxu0
      %v2405 = vadd.f32 0.0, %v2404
      %v2406 = vpop.f32.mrf.mxu0
      %2407 = vmatprep.mubr.f32.mxu0 0.0
      %2408 = vmatmul.mubr.f32.gmra.mxu0 %v2201
      %v2409 = vpop.f32.mrf.mxu0
      %v2410 = vadd.f32 0.0, %v2409
      %v2411 = vpop.f32.mrf.mxu0
      %2412 = vmatprep.mubr.f32.mxu0 0.0
      %2413 = vmatmul.mubr.f32.gmra.mxu0 %v2204
      %v2414 = vpop.f32.mrf.mxu0
      %v2415 = vadd.f32 0.0, %v2414
      %v2416 = vpop.f32.mrf.mxu0
      %2417 = vmatprep.mubr.f32.mxu0 0.0
      %2418 = vmatmul.mubr.f32.gmra.mxu0 %v2207
      %v2419 = vpop.f32.mrf.mxu0
      %v2420 = vadd.f32 0.0, %v2419
      %v2421 = vpop.f32.mrf.mxu0
      %2422 = vmatprep.mubr.f32.mxu0 0.0
      %2423 = vmatmul.mubr.f32.gmra.mxu0 %v2210
      %v2424 = vpop.f32.mrf.mxu0
      %v2425 = vadd.f32 0.0, %v2424
      %v2426 = vpop.f32.mrf.mxu0
      %2427 = vmatprep.mubr.f32.mxu0 0.0
      %2428 = vmatmul.mubr.f32.gmra.mxu0 %v2213
      %v2429 = vpop.f32.mrf.mxu0
      %v2430 = vadd.f32 0.0, %v2429
      %v2431 = vpop.f32.mrf.mxu0
      %2432 = vmatprep.mubr.f32.mxu0 0.0
      %2433 = vmatmul.mubr.f32.gmra.mxu0 %v2216
      %v2434 = vpop.f32.mrf.mxu0
      %v2435 = vadd.f32 0.0, %v2434
      %v2436 = vpop.f32.mrf.mxu0
      %2437 = vmatprep.mubr.f32.mxu0 0.0
      %2438 = vmatmul.mubr.f32.gmra.mxu0 %v2219
      %v2439 = vpop.f32.mrf.mxu0
      %v2440 = vadd.f32 0.0, %v2439
      %v2441 = vpop.f32.mrf.mxu0
      %2442 = vmatprep.mubr.f32.mxu0 0.0
      %2443 = vmatmul.mubr.f32.gmra.mxu0 %v2222
      %v2444 = vpop.f32.mrf.mxu0
      %v2445 = vadd.f32 0.0, %v2444
      %v2446 = vpop.f32.mrf.mxu0
      %2447 = vmatprep.mubr.f32.mxu0 0.0
      %2448 = vmatmul.mubr.f32.gmra.mxu0 %v2225
      %v2449 = vpop.f32.mrf.mxu0
      %v2450 = vadd.f32 0.0, %v2449
      %v2451 = vpop.f32.mrf.mxu0
      %2452 = vmatprep.mubr.f32.mxu0 0.0
      %2453 = vmatmul.mubr.f32.gmra.mxu0 %v2228
      %v2454 = vpop.f32.mrf.mxu0
      %v2455 = vadd.f32 0.0, %v2454
      %v2456 = vpop.f32.mrf.mxu0
      %2457 = vdwg.mxu0
      %v2458 = vadd.f32 %v2068, %v2300
      %v2459 = vadd.f32 %v2069, %v2305
      %v2460 = vadd.f32 %v2070, %v2310
      %v2461 = vadd.f32 %v2071, %v2315
      %v2462 = vadd.f32 %v2072, %v2320
      %v2463 = vadd.f32 %v2073, %v2325
      %v2464 = vadd.f32 %v2074, %v2330
      %v2465 = vadd.f32 %v2075, %v2335
      %v2466 = vadd.f32 %v2076, %v2340
      %v2467 = vadd.f32 %v2077, %v2345
      %v2468 = vadd.f32 %v2078, %v2350
      %v2469 = vadd.f32 %v2079, %v2355
      %v2470 = vadd.f32 %v2080, %v2360
      %v2471 = vadd.f32 %v2081, %v2365
      %v2472 = vadd.f32 %v2082, %v2370
      %v2473 = vadd.f32 %v2083, %v2375
      %v2474 = vadd.f32 %v2084, %v2380
      %v2475 = vadd.f32 %v2085, %v2385
      %v2476 = vadd.f32 %v2086, %v2390
      %v2477 = vadd.f32 %v2087, %v2395
      %v2478 = vadd.f32 %v2088, %v2400
      %v2479 = vadd.f32 %v2089, %v2405
      %v2480 = vadd.f32 %v2090, %v2410
      %v2481 = vadd.f32 %v2091, %v2415
      %v2482 = vadd.f32 %v2092, %v2420
      %v2483 = vadd.f32 %v2093, %v2425
      %v2484 = vadd.f32 %v2094, %v2430
      %v2485 = vadd.f32 %v2095, %v2435
      %v2486 = vadd.f32 %v2096, %v2440
      %v2487 = vadd.f32 %v2097, %v2445
      %v2488 = vadd.f32 %v2098, %v2450
      %v2489 = vadd.f32 %v2099, %v2455
      %s2490 = sadd.s32 %s207, 2
      %s2491 = smul.u32 %s2490, 24
      %s2492 = scalar_lea.vmem %s191, %s2491
      %v2493 = vld [vmem:[%s2492] sm:$0xff]
      %v2494 = vld [vmem:[%s2492 + $0x8] sm:$0xff]
      %v2495 = vld [vmem:[%s2492 + $0x18] sm:$0xff]
      %v2496 = vld [vmem:[%s2492 + $0x20] sm:$0xff]
      %v2497 = vld [vmem:[%s2492 + $0x30] sm:$0xff]
      %v2498 = vld [vmem:[%s2492 + $0x38] sm:$0xff]
      %v2499 = vld [vmem:[%s2492 + $0x48] sm:$0xff]
      %v2500 = vld [vmem:[%s2492 + $0x50] sm:$0xff]
      %v2501 = vld [vmem:[%s2492 + $0x60] sm:$0xff]
      %v2502 = vld [vmem:[%s2492 + $0x68] sm:$0xff]
      %v2503 = vld [vmem:[%s2492 + $0x78] sm:$0xff]
      %v2504 = vld [vmem:[%s2492 + $0x80] sm:$0xff]
      %v2505 = vld [vmem:[%s2492 + $0x90] sm:$0xff]
      %v2506 = vld [vmem:[%s2492 + $0x98] sm:$0xff]
      %v2507 = vld [vmem:[%s2492 + $0xa8] sm:$0xff]
      %v2508 = vld [vmem:[%s2492 + $0xb0] sm:$0xff]
      %v2509 = vld [vmem:[%s2492 + $0xc0] sm:$0xff]
      %v2510 = vld [vmem:[%s2492 + $0xc8] sm:$0xff]
      %v2511 = vld [vmem:[%s2492 + $0xd8] sm:$0xff]
      %v2512 = vld [vmem:[%s2492 + $0xe0] sm:$0xff]
      %v2513 = vld [vmem:[%s2492 + $0xf0] sm:$0xff]
      %v2514 = vld [vmem:[%s2492 + $0xf8] sm:$0xff]
      %v2515 = vld [vmem:[%s2492 + $0x108] sm:$0xff]
      %v2516 = vld [vmem:[%s2492 + $0x110] sm:$0xff]
      %v2517 = vld [vmem:[%s2492 + $0x120] sm:$0xff]
      %v2518 = vld [vmem:[%s2492 + $0x128] sm:$0xff]
      %v2519 = vld [vmem:[%s2492 + $0x138] sm:$0xff]
      %v2520 = vld [vmem:[%s2492 + $0x140] sm:$0xff]
      %v2521 = vld [vmem:[%s2492 + $0x150] sm:$0xff]
      %v2522 = vld [vmem:[%s2492 + $0x158] sm:$0xff]
      %v2523 = vld [vmem:[%s2492 + $0x168] sm:$0xff]
      %v2524 = vld [vmem:[%s2492 + $0x170] sm:$0xff]
      %s2525 = scalar_lea.vmem %s1, 24
      %v2526 = vld [vmem:[%s2525] sm:$0xf]
      %v2528 = vsel %vm277, %v2493, 0
      %v2531 = vsel %vm277, %v2494, 0
      %v2534 = vsel %vm277, %v2495, 0
      %v2537 = vsel %vm277, %v2496, 0
      %v2540 = vsel %vm277, %v2497, 0
      %v2543 = vsel %vm277, %v2498, 0
      %v2546 = vsel %vm277, %v2499, 0
      %v2549 = vsel %vm277, %v2500, 0
      %v2552 = vsel %vm277, %v2501, 0
      %v2555 = vsel %vm277, %v2502, 0
      %v2558 = vsel %vm277, %v2503, 0
      %v2561 = vsel %vm277, %v2504, 0
      %v2564 = vsel %vm277, %v2505, 0
      %v2567 = vsel %vm277, %v2506, 0
      %v2570 = vsel %vm277, %v2507, 0
      %v2573 = vsel %vm277, %v2508, 0
      %v2576 = vsel %vm277, %v2509, 0
      %v2579 = vsel %vm277, %v2510, 0
      %v2582 = vsel %vm277, %v2511, 0
      %v2585 = vsel %vm277, %v2512, 0
      %v2588 = vsel %vm277, %v2513, 0
      %v2591 = vsel %vm277, %v2514, 0
      %v2594 = vsel %vm277, %v2515, 0
      %v2597 = vsel %vm277, %v2516, 0
      %v2600 = vsel %vm277, %v2517, 0
      %v2603 = vsel %vm277, %v2518, 0
      %v2606 = vsel %vm277, %v2519, 0
      %v2609 = vsel %vm277, %v2520, 0
      %v2612 = vsel %vm277, %v2521, 0
      %v2615 = vsel %vm277, %v2522, 0
      %v2618 = vsel %vm277, %v2523, 0
      %v2621 = vsel %vm277, %v2524, 0
      %v2624 = vsel %vm374, %v2526, 0
      %2626 = vmatprep.subr.mxu0 0.0
      %2627 = vmatpush1.msra.mxu0 0.0
      %2628 = vmatprep.subr.mxu0 0.0
      %2629 = vmatpush1.msra.mxu0 0.0
      %2630 = vmatprep.subr.mxu0 0.0
      %2631 = vmatpush1.msra.mxu0 0.0
      %2632 = vmatprep.subr.mxu0 0.0
      %2633 = vmatpush1.msra.mxu0 0.0
      %2634 = vmatprep.subr.mxu0 0.0
      %2635 = vmatpush1.msra.mxu0 0.0
      %2636 = vmatprep.subr.mxu0 0.0
      %2637 = vmatpush1.msra.mxu0 0.0
      %2638 = vmatprep.subr.mxu0 0.0
      %2639 = vmatpush1.msra.mxu0 0.0
      %2640 = vmatprep.subr.mxu0 0.0
      %2641 = vmatpush1.msra.mxu0 0.0
      %2642 = vmatprep.subr.mxu0 0.0
      %2643 = vmatpush1.msra.mxu0 0.0
      %2644 = vmatprep.subr.mxu0 0.0
      %2645 = vmatpush1.msra.mxu0 0.0
      %2646 = vmatprep.subr.mxu0 0.0
      %2647 = vmatpush1.msra.mxu0 0.0
      %2648 = vmatprep.subr.mxu0 0.0
      %2649 = vmatpush1.msra.mxu0 0.0
      %2650 = vmatprep.subr.mxu0 0.0
      %2651 = vmatpush1.msra.mxu0 0.0
      %2652 = vmatprep.subr.mxu0 0.0
      %2653 = vmatpush1.msra.mxu0 0.0
      %2654 = vmatprep.subr.mxu0 0.0
      %2655 = vmatpush1.msra.mxu0 0.0
      %2656 = vmatprep.subr.mxu0 0.0
      %2657 = vmatpush1.msra.mxu0 %v2624
      %2658 = vmatprep.subr.mxu0 0.0
      %2659 = vmatpush2.msra.mxu0 0.0
      %2660 = vmatprep.subr.mxu0 0.0
      %2661 = vmatpush2.msra.mxu0 0.0
      %2662 = vmatprep.subr.mxu0 0.0
      %2663 = vmatpush2.msra.mxu0 0.0
      %2664 = vmatprep.subr.mxu0 0.0
      %2665 = vmatpush2.msra.mxu0 0.0
      %2666 = vmatprep.subr.mxu0 0.0
      %2667 = vmatpush2.msra.mxu0 0.0
      %2668 = vmatprep.subr.mxu0 0.0
      %2669 = vmatpush2.msra.mxu0 0.0
      %2670 = vmatprep.subr.mxu0 0.0
      %2671 = vmatpush2.msra.mxu0 0.0
      %2672 = vmatprep.subr.mxu0 0.0
      %2673 = vmatpush2.msra.mxu0 0.0
      %2674 = vmatprep.subr.mxu0 0.0
      %2675 = vmatpush2.msra.mxu0 0.0
      %2676 = vmatprep.subr.mxu0 0.0
      %2677 = vmatpush2.msra.mxu0 0.0
      %2678 = vmatprep.subr.mxu0 0.0
      %2679 = vmatpush2.msra.mxu0 0.0
      %2680 = vmatprep.subr.mxu0 0.0
      %2681 = vmatpush2.msra.mxu0 0.0
      %2682 = vmatprep.subr.mxu0 0.0
      %2683 = vmatpush2.msra.mxu0 0.0
      %2684 = vmatprep.subr.mxu0 0.0
      %2685 = vmatpush2.msra.mxu0 0.0
      %2686 = vmatprep.subr.mxu0 0.0
      %2687 = vmatpush2.msra.mxu0 0.0
      %2688 = vmatprep.subr.mxu0 0.0
      %2689 = vmatpush2.msra.mxu0 0.0
      %2690 = vmatprep.mubr.f32.mxu0 0.0
      %2691 = vmatmul.mubr.f32.gmra.mxu0 %v2528
      %v2692 = vpop.f32.mrf.mxu0
      %v2693 = vadd.f32 0.0, %v2692
      %v2694 = vpop.f32.mrf.mxu0
      %2695 = vmatprep.mubr.f32.mxu0 0.0
      %2696 = vmatmul.mubr.f32.gmra.mxu0 %v2531
      %v2697 = vpop.f32.mrf.mxu0
      %v2698 = vadd.f32 0.0, %v2697
      %v2699 = vpop.f32.mrf.mxu0
      %2700 = vmatprep.mubr.f32.mxu0 0.0
      %2701 = vmatmul.mubr.f32.gmra.mxu0 %v2534
      %v2702 = vpop.f32.mrf.mxu0
      %v2703 = vadd.f32 0.0, %v2702
      %v2704 = vpop.f32.mrf.mxu0
      %2705 = vmatprep.mubr.f32.mxu0 0.0
      %2706 = vmatmul.mubr.f32.gmra.mxu0 %v2537
      %v2707 = vpop.f32.mrf.mxu0
      %v2708 = vadd.f32 0.0, %v2707
      %v2709 = vpop.f32.mrf.mxu0
      %2710 = vmatprep.mubr.f32.mxu0 0.0
      %2711 = vmatmul.mubr.f32.gmra.mxu0 %v2540
      %v2712 = vpop.f32.mrf.mxu0
      %v2713 = vadd.f32 0.0, %v2712
      %v2714 = vpop.f32.mrf.mxu0
      %2715 = vmatprep.mubr.f32.mxu0 0.0
      %2716 = vmatmul.mubr.f32.gmra.mxu0 %v2543
      %v2717 = vpop.f32.mrf.mxu0
      %v2718 = vadd.f32 0.0, %v2717
      %v2719 = vpop.f32.mrf.mxu0
      %2720 = vmatprep.mubr.f32.mxu0 0.0
      %2721 = vmatmul.mubr.f32.gmra.mxu0 %v2546
      %v2722 = vpop.f32.mrf.mxu0
      %v2723 = vadd.f32 0.0, %v2722
      %v2724 = vpop.f32.mrf.mxu0
      %2725 = vmatprep.mubr.f32.mxu0 0.0
      %2726 = vmatmul.mubr.f32.gmra.mxu0 %v2549
      %v2727 = vpop.f32.mrf.mxu0
      %v2728 = vadd.f32 0.0, %v2727
      %v2729 = vpop.f32.mrf.mxu0
      %2730 = vmatprep.mubr.f32.mxu0 0.0
      %2731 = vmatmul.mubr.f32.gmra.mxu0 %v2552
      %v2732 = vpop.f32.mrf.mxu0
      %v2733 = vadd.f32 0.0, %v2732
      %v2734 = vpop.f32.mrf.mxu0
      %2735 = vmatprep.mubr.f32.mxu0 0.0
      %2736 = vmatmul.mubr.f32.gmra.mxu0 %v2555
      %v2737 = vpop.f32.mrf.mxu0
      %v2738 = vadd.f32 0.0, %v2737
      %v2739 = vpop.f32.mrf.mxu0
      %2740 = vmatprep.mubr.f32.mxu0 0.0
      %2741 = vmatmul.mubr.f32.gmra.mxu0 %v2558
      %v2742 = vpop.f32.mrf.mxu0
      %v2743 = vadd.f32 0.0, %v2742
      %v2744 = vpop.f32.mrf.mxu0
      %2745 = vmatprep.mubr.f32.mxu0 0.0
      %2746 = vmatmul.mubr.f32.gmra.mxu0 %v2561
      %v2747 = vpop.f32.mrf.mxu0
      %v2748 = vadd.f32 0.0, %v2747
      %v2749 = vpop.f32.mrf.mxu0
      %2750 = vmatprep.mubr.f32.mxu0 0.0
      %2751 = vmatmul.mubr.f32.gmra.mxu0 %v2564
      %v2752 = vpop.f32.mrf.mxu0
      %v2753 = vadd.f32 0.0, %v2752
      %v2754 = vpop.f32.mrf.mxu0
      %2755 = vmatprep.mubr.f32.mxu0 0.0
      %2756 = vmatmul.mubr.f32.gmra.mxu0 %v2567
      %v2757 = vpop.f32.mrf.mxu0
      %v2758 = vadd.f32 0.0, %v2757
      %v2759 = vpop.f32.mrf.mxu0
      %2760 = vmatprep.mubr.f32.mxu0 0.0
      %2761 = vmatmul.mubr.f32.gmra.mxu0 %v2570
      %v2762 = vpop.f32.mrf.mxu0
      %v2763 = vadd.f32 0.0, %v2762
      %v2764 = vpop.f32.mrf.mxu0
      %2765 = vmatprep.mubr.f32.mxu0 0.0
      %2766 = vmatmul.mubr.f32.gmra.mxu0 %v2573
      %v2767 = vpop.f32.mrf.mxu0
      %v2768 = vadd.f32 0.0, %v2767
      %v2769 = vpop.f32.mrf.mxu0
      %2770 = vmatprep.mubr.f32.mxu0 0.0
      %2771 = vmatmul.mubr.f32.gmra.mxu0 %v2576
      %v2772 = vpop.f32.mrf.mxu0
      %v2773 = vadd.f32 0.0, %v2772
      %v2774 = vpop.f32.mrf.mxu0
      %2775 = vmatprep.mubr.f32.mxu0 0.0
      %2776 = vmatmul.mubr.f32.gmra.mxu0 %v2579
      %v2777 = vpop.f32.mrf.mxu0
      %v2778 = vadd.f32 0.0, %v2777
      %v2779 = vpop.f32.mrf.mxu0
      %2780 = vmatprep.mubr.f32.mxu0 0.0
      %2781 = vmatmul.mubr.f32.gmra.mxu0 %v2582
      %v2782 = vpop.f32.mrf.mxu0
      %v2783 = vadd.f32 0.0, %v2782
      %v2784 = vpop.f32.mrf.mxu0
      %2785 = vmatprep.mubr.f32.mxu0 0.0
      %2786 = vmatmul.mubr.f32.gmra.mxu0 %v2585
      %v2787 = vpop.f32.mrf.mxu0
      %v2788 = vadd.f32 0.0, %v2787
      %v2789 = vpop.f32.mrf.mxu0
      %2790 = vmatprep.mubr.f32.mxu0 0.0
      %2791 = vmatmul.mubr.f32.gmra.mxu0 %v2588
      %v2792 = vpop.f32.mrf.mxu0
      %v2793 = vadd.f32 0.0, %v2792
      %v2794 = vpop.f32.mrf.mxu0
      %2795 = vmatprep.mubr.f32.mxu0 0.0
      %2796 = vmatmul.mubr.f32.gmra.mxu0 %v2591
      %v2797 = vpop.f32.mrf.mxu0
      %v2798 = vadd.f32 0.0, %v2797
      %v2799 = vpop.f32.mrf.mxu0
      %2800 = vmatprep.mubr.f32.mxu0 0.0
      %2801 = vmatmul.mubr.f32.gmra.mxu0 %v2594
      %v2802 = vpop.f32.mrf.mxu0
      %v2803 = vadd.f32 0.0, %v2802
      %v2804 = vpop.f32.mrf.mxu0
      %2805 = vmatprep.mubr.f32.mxu0 0.0
      %2806 = vmatmul.mubr.f32.gmra.mxu0 %v2597
      %v2807 = vpop.f32.mrf.mxu0
      %v2808 = vadd.f32 0.0, %v2807
      %v2809 = vpop.f32.mrf.mxu0
      %2810 = vmatprep.mubr.f32.mxu0 0.0
      %2811 = vmatmul.mubr.f32.gmra.mxu0 %v2600
      %v2812 = vpop.f32.mrf.mxu0
      %v2813 = vadd.f32 0.0, %v2812
      %v2814 = vpop.f32.mrf.mxu0
      %2815 = vmatprep.mubr.f32.mxu0 0.0
      %2816 = vmatmul.mubr.f32.gmra.mxu0 %v2603
      %v2817 = vpop.f32.mrf.mxu0
      %v2818 = vadd.f32 0.0, %v2817
      %v2819 = vpop.f32.mrf.mxu0
      %2820 = vmatprep.mubr.f32.mxu0 0.0
      %2821 = vmatmul.mubr.f32.gmra.mxu0 %v2606
      %v2822 = vpop.f32.mrf.mxu0
      %v2823 = vadd.f32 0.0, %v2822
      %v2824 = vpop.f32.mrf.mxu0
      %2825 = vmatprep.mubr.f32.mxu0 0.0
      %2826 = vmatmul.mubr.f32.gmra.mxu0 %v2609
      %v2827 = vpop.f32.mrf.mxu0
      %v2828 = vadd.f32 0.0, %v2827
      %v2829 = vpop.f32.mrf.mxu0
      %2830 = vmatprep.mubr.f32.mxu0 0.0
      %2831 = vmatmul.mubr.f32.gmra.mxu0 %v2612
      %v2832 = vpop.f32.mrf.mxu0
      %v2833 = vadd.f32 0.0, %v2832
      %v2834 = vpop.f32.mrf.mxu0
      %2835 = vmatprep.mubr.f32.mxu0 0.0
      %2836 = vmatmul.mubr.f32.gmra.mxu0 %v2615
      %v2837 = vpop.f32.mrf.mxu0
      %v2838 = vadd.f32 0.0, %v2837
      %v2839 = vpop.f32.mrf.mxu0
      %2840 = vmatprep.mubr.f32.mxu0 0.0
      %2841 = vmatmul.mubr.f32.gmra.mxu0 %v2618
      %v2842 = vpop.f32.mrf.mxu0
      %v2843 = vadd.f32 0.0, %v2842
      %v2844 = vpop.f32.mrf.mxu0
      %2845 = vmatprep.mubr.f32.mxu0 0.0
      %2846 = vmatmul.mubr.f32.gmra.mxu0 %v2621
      %v2847 = vpop.f32.mrf.mxu0
      %v2848 = vadd.f32 0.0, %v2847
      %v2849 = vpop.f32.mrf.mxu0
      %2850 = vdwg.mxu0
      %v2851 = vadd.f32 %v2458, %v2693
      %v2852 = vadd.f32 %v2459, %v2698
      %v2853 = vadd.f32 %v2460, %v2703
      %v2854 = vadd.f32 %v2461, %v2708
      %v2855 = vadd.f32 %v2462, %v2713
      %v2856 = vadd.f32 %v2463, %v2718
      %v2857 = vadd.f32 %v2464, %v2723
      %v2858 = vadd.f32 %v2465, %v2728
      %v2859 = vadd.f32 %v2466, %v2733
      %v2860 = vadd.f32 %v2467, %v2738
      %v2861 = vadd.f32 %v2468, %v2743
      %v2862 = vadd.f32 %v2469, %v2748
      %v2863 = vadd.f32 %v2470, %v2753
      %v2864 = vadd.f32 %v2471, %v2758
      %v2865 = vadd.f32 %v2472, %v2763
      %v2866 = vadd.f32 %v2473, %v2768
      %v2867 = vadd.f32 %v2474, %v2773
      %v2868 = vadd.f32 %v2475, %v2778
      %v2869 = vadd.f32 %v2476, %v2783
      %v2870 = vadd.f32 %v2477, %v2788
      %v2871 = vadd.f32 %v2478, %v2793
      %v2872 = vadd.f32 %v2479, %v2798
      %v2873 = vadd.f32 %v2480, %v2803
      %v2874 = vadd.f32 %v2481, %v2808
      %v2875 = vadd.f32 %v2482, %v2813
      %v2876 = vadd.f32 %v2483, %v2818
      %v2877 = vadd.f32 %v2484, %v2823
      %v2878 = vadd.f32 %v2485, %v2828
      %v2879 = vadd.f32 %v2486, %v2833
      %v2880 = vadd.f32 %v2487, %v2838
      %v2881 = vadd.f32 %v2488, %v2843
      %v2882 = vadd.f32 %v2489, %v2848
      %v2883 = vld [vmem:[%s2492 + $0x1] sm:$0xff]
      %v2884 = vld [vmem:[%s2492 + $0x9] sm:$0xff]
      %v2885 = vld [vmem:[%s2492 + $0x19] sm:$0xff]
      %v2886 = vld [vmem:[%s2492 + $0x21] sm:$0xff]
      %v2887 = vld [vmem:[%s2492 + $0x31] sm:$0xff]
      %v2888 = vld [vmem:[%s2492 + $0x39] sm:$0xff]
      %v2889 = vld [vmem:[%s2492 + $0x49] sm:$0xff]
      %v2890 = vld [vmem:[%s2492 + $0x51] sm:$0xff]
      %v2891 = vld [vmem:[%s2492 + $0x61] sm:$0xff]
      %v2892 = vld [vmem:[%s2492 + $0x69] sm:$0xff]
      %v2893 = vld [vmem:[%s2492 + $0x79] sm:$0xff]
      %v2894 = vld [vmem:[%s2492 + $0x81] sm:$0xff]
      %v2895 = vld [vmem:[%s2492 + $0x91] sm:$0xff]
      %v2896 = vld [vmem:[%s2492 + $0x99] sm:$0xff]
      %v2897 = vld [vmem:[%s2492 + $0xa9] sm:$0xff]
      %v2898 = vld [vmem:[%s2492 + $0xb1] sm:$0xff]
      %v2899 = vld [vmem:[%s2492 + $0xc1] sm:$0xff]
      %v2900 = vld [vmem:[%s2492 + $0xc9] sm:$0xff]
      %v2901 = vld [vmem:[%s2492 + $0xd9] sm:$0xff]
      %v2902 = vld [vmem:[%s2492 + $0xe1] sm:$0xff]
      %v2903 = vld [vmem:[%s2492 + $0xf1] sm:$0xff]
      %v2904 = vld [vmem:[%s2492 + $0xf9] sm:$0xff]
      %v2905 = vld [vmem:[%s2492 + $0x109] sm:$0xff]
      %v2906 = vld [vmem:[%s2492 + $0x111] sm:$0xff]
      %v2907 = vld [vmem:[%s2492 + $0x121] sm:$0xff]
      %v2908 = vld [vmem:[%s2492 + $0x129] sm:$0xff]
      %v2909 = vld [vmem:[%s2492 + $0x139] sm:$0xff]
      %v2910 = vld [vmem:[%s2492 + $0x141] sm:$0xff]
      %v2911 = vld [vmem:[%s2492 + $0x151] sm:$0xff]
      %v2912 = vld [vmem:[%s2492 + $0x159] sm:$0xff]
      %v2913 = vld [vmem:[%s2492 + $0x169] sm:$0xff]
      %v2914 = vld [vmem:[%s2492 + $0x171] sm:$0xff]
      %s2915 = scalar_lea.vmem %s1, 28
      %v2916 = vld [vmem:[%s2915] sm:$0xf]
      %v2918 = vsel %vm277, %v2883, 0
      %v2921 = vsel %vm277, %v2884, 0
      %v2924 = vsel %vm277, %v2885, 0
      %v2927 = vsel %vm277, %v2886, 0
      %v2930 = vsel %vm277, %v2887, 0
      %v2933 = vsel %vm277, %v2888, 0
      %v2936 = vsel %vm277, %v2889, 0
      %v2939 = vsel %vm277, %v2890, 0
      %v2942 = vsel %vm277, %v2891, 0
      %v2945 = vsel %vm277, %v2892, 0
      %v2948 = vsel %vm277, %v2893, 0
      %v2951 = vsel %vm277, %v2894, 0
      %v2954 = vsel %vm277, %v2895, 0
      %v2957 = vsel %vm277, %v2896, 0
      %v2960 = vsel %vm277, %v2897, 0
      %v2963 = vsel %vm277, %v2898, 0
      %v2966 = vsel %vm277, %v2899, 0
      %v2969 = vsel %vm277, %v2900, 0
      %v2972 = vsel %vm277, %v2901, 0
      %v2975 = vsel %vm277, %v2902, 0
      %v2978 = vsel %vm277, %v2903, 0
      %v2981 = vsel %vm277, %v2904, 0
      %v2984 = vsel %vm277, %v2905, 0
      %v2987 = vsel %vm277, %v2906, 0
      %v2990 = vsel %vm277, %v2907, 0
      %v2993 = vsel %vm277, %v2908, 0
      %v2996 = vsel %vm277, %v2909, 0
      %v2999 = vsel %vm277, %v2910, 0
      %v3002 = vsel %vm277, %v2911, 0
      %v3005 = vsel %vm277, %v2912, 0
      %v3008 = vsel %vm277, %v2913, 0
      %v3011 = vsel %vm277, %v2914, 0
      %v3014 = vsel %vm374, %v2916, 0
      %3016 = vmatprep.subr.mxu0 0.0
      %3017 = vmatpush1.msra.mxu0 0.0
      %3018 = vmatprep.subr.mxu0 0.0
      %3019 = vmatpush1.msra.mxu0 0.0
      %3020 = vmatprep.subr.mxu0 0.0
      %3021 = vmatpush1.msra.mxu0 0.0
      %3022 = vmatprep.subr.mxu0 0.0
      %3023 = vmatpush1.msra.mxu0 0.0
      %3024 = vmatprep.subr.mxu0 0.0
      %3025 = vmatpush1.msra.mxu0 0.0
      %3026 = vmatprep.subr.mxu0 0.0
      %3027 = vmatpush1.msra.mxu0 0.0
      %3028 = vmatprep.subr.mxu0 0.0
      %3029 = vmatpush1.msra.mxu0 0.0
      %3030 = vmatprep.subr.mxu0 0.0
      %3031 = vmatpush1.msra.mxu0 0.0
      %3032 = vmatprep.subr.mxu0 0.0
      %3033 = vmatpush1.msra.mxu0 0.0
      %3034 = vmatprep.subr.mxu0 0.0
      %3035 = vmatpush1.msra.mxu0 0.0
      %3036 = vmatprep.subr.mxu0 0.0
      %3037 = vmatpush1.msra.mxu0 0.0
      %3038 = vmatprep.subr.mxu0 0.0
      %3039 = vmatpush1.msra.mxu0 0.0
      %3040 = vmatprep.subr.mxu0 0.0
      %3041 = vmatpush1.msra.mxu0 0.0
      %3042 = vmatprep.subr.mxu0 0.0
      %3043 = vmatpush1.msra.mxu0 0.0
      %3044 = vmatprep.subr.mxu0 0.0
      %3045 = vmatpush1.msra.mxu0 0.0
      %3046 = vmatprep.subr.mxu0 0.0
      %3047 = vmatpush1.msra.mxu0 %v3014
      %3048 = vmatprep.subr.mxu0 0.0
      %3049 = vmatpush2.msra.mxu0 0.0
      %3050 = vmatprep.subr.mxu0 0.0
      %3051 = vmatpush2.msra.mxu0 0.0
      %3052 = vmatprep.subr.mxu0 0.0
      %3053 = vmatpush2.msra.mxu0 0.0
      %3054 = vmatprep.subr.mxu0 0.0
      %3055 = vmatpush2.msra.mxu0 0.0
      %3056 = vmatprep.subr.mxu0 0.0
      %3057 = vmatpush2.msra.mxu0 0.0
      %3058 = vmatprep.subr.mxu0 0.0
      %3059 = vmatpush2.msra.mxu0 0.0
      %3060 = vmatprep.subr.mxu0 0.0
      %3061 = vmatpush2.msra.mxu0 0.0
      %3062 = vmatprep.subr.mxu0 0.0
      %3063 = vmatpush2.msra.mxu0 0.0
      %3064 = vmatprep.subr.mxu0 0.0
      %3065 = vmatpush2.msra.mxu0 0.0
      %3066 = vmatprep.subr.mxu0 0.0
      %3067 = vmatpush2.msra.mxu0 0.0
      %3068 = vmatprep.subr.mxu0 0.0
      %3069 = vmatpush2.msra.mxu0 0.0
      %3070 = vmatprep.subr.mxu0 0.0
      %3071 = vmatpush2.msra.mxu0 0.0
      %3072 = vmatprep.subr.mxu0 0.0
      %3073 = vmatpush2.msra.mxu0 0.0
      %3074 = vmatprep.subr.mxu0 0.0
      %3075 = vmatpush2.msra.mxu0 0.0
      %3076 = vmatprep.subr.mxu0 0.0
      %3077 = vmatpush2.msra.mxu0 0.0
      %3078 = vmatprep.subr.mxu0 0.0
      %3079 = vmatpush2.msra.mxu0 0.0
      %3080 = vmatprep.mubr.f32.mxu0 0.0
      %3081 = vmatmul.mubr.f32.gmra.mxu0 %v2918
      %v3082 = vpop.f32.mrf.mxu0
      %v3083 = vadd.f32 0.0, %v3082
      %v3084 = vpop.f32.mrf.mxu0
      %3085 = vmatprep.mubr.f32.mxu0 0.0
      %3086 = vmatmul.mubr.f32.gmra.mxu0 %v2921
      %v3087 = vpop.f32.mrf.mxu0
      %v3088 = vadd.f32 0.0, %v3087
      %v3089 = vpop.f32.mrf.mxu0
      %3090 = vmatprep.mubr.f32.mxu0 0.0
      %3091 = vmatmul.mubr.f32.gmra.mxu0 %v2924
      %v3092 = vpop.f32.mrf.mxu0
      %v3093 = vadd.f32 0.0, %v3092
      %v3094 = vpop.f32.mrf.mxu0
      %3095 = vmatprep.mubr.f32.mxu0 0.0
      %3096 = vmatmul.mubr.f32.gmra.mxu0 %v2927
      %v3097 = vpop.f32.mrf.mxu0
      %v3098 = vadd.f32 0.0, %v3097
      %v3099 = vpop.f32.mrf.mxu0
      %3100 = vmatprep.mubr.f32.mxu0 0.0
      %3101 = vmatmul.mubr.f32.gmra.mxu0 %v2930
      %v3102 = vpop.f32.mrf.mxu0
      %v3103 = vadd.f32 0.0, %v3102
      %v3104 = vpop.f32.mrf.mxu0
      %3105 = vmatprep.mubr.f32.mxu0 0.0
      %3106 = vmatmul.mubr.f32.gmra.mxu0 %v2933
      %v3107 = vpop.f32.mrf.mxu0
      %v3108 = vadd.f32 0.0, %v3107
      %v3109 = vpop.f32.mrf.mxu0
      %3110 = vmatprep.mubr.f32.mxu0 0.0
      %3111 = vmatmul.mubr.f32.gmra.mxu0 %v2936
      %v3112 = vpop.f32.mrf.mxu0
      %v3113 = vadd.f32 0.0, %v3112
      %v3114 = vpop.f32.mrf.mxu0
      %3115 = vmatprep.mubr.f32.mxu0 0.0
      %3116 = vmatmul.mubr.f32.gmra.mxu0 %v2939
      %v3117 = vpop.f32.mrf.mxu0
      %v3118 = vadd.f32 0.0, %v3117
      %v3119 = vpop.f32.mrf.mxu0
      %3120 = vmatprep.mubr.f32.mxu0 0.0
      %3121 = vmatmul.mubr.f32.gmra.mxu0 %v2942
      %v3122 = vpop.f32.mrf.mxu0
      %v3123 = vadd.f32 0.0, %v3122
      %v3124 = vpop.f32.mrf.mxu0
      %3125 = vmatprep.mubr.f32.mxu0 0.0
      %3126 = vmatmul.mubr.f32.gmra.mxu0 %v2945
      %v3127 = vpop.f32.mrf.mxu0
      %v3128 = vadd.f32 0.0, %v3127
      %v3129 = vpop.f32.mrf.mxu0
      %3130 = vmatprep.mubr.f32.mxu0 0.0
      %3131 = vmatmul.mubr.f32.gmra.mxu0 %v2948
      %v3132 = vpop.f32.mrf.mxu0
      %v3133 = vadd.f32 0.0, %v3132
      %v3134 = vpop.f32.mrf.mxu0
      %3135 = vmatprep.mubr.f32.mxu0 0.0
      %3136 = vmatmul.mubr.f32.gmra.mxu0 %v2951
      %v3137 = vpop.f32.mrf.mxu0
      %v3138 = vadd.f32 0.0, %v3137
      %v3139 = vpop.f32.mrf.mxu0
      %3140 = vmatprep.mubr.f32.mxu0 0.0
      %3141 = vmatmul.mubr.f32.gmra.mxu0 %v2954
      %v3142 = vpop.f32.mrf.mxu0
      %v3143 = vadd.f32 0.0, %v3142
      %v3144 = vpop.f32.mrf.mxu0
      %3145 = vmatprep.mubr.f32.mxu0 0.0
      %3146 = vmatmul.mubr.f32.gmra.mxu0 %v2957
      %v3147 = vpop.f32.mrf.mxu0
      %v3148 = vadd.f32 0.0, %v3147
      %v3149 = vpop.f32.mrf.mxu0
      %3150 = vmatprep.mubr.f32.mxu0 0.0
      %3151 = vmatmul.mubr.f32.gmra.mxu0 %v2960
      %v3152 = vpop.f32.mrf.mxu0
      %v3153 = vadd.f32 0.0, %v3152
      %v3154 = vpop.f32.mrf.mxu0
      %3155 = vmatprep.mubr.f32.mxu0 0.0
      %3156 = vmatmul.mubr.f32.gmra.mxu0 %v2963
      %v3157 = vpop.f32.mrf.mxu0
      %v3158 = vadd.f32 0.0, %v3157
      %v3159 = vpop.f32.mrf.mxu0
      %3160 = vmatprep.mubr.f32.mxu0 0.0
      %3161 = vmatmul.mubr.f32.gmra.mxu0 %v2966
      %v3162 = vpop.f32.mrf.mxu0
      %v3163 = vadd.f32 0.0, %v3162
      %v3164 = vpop.f32.mrf.mxu0
      %3165 = vmatprep.mubr.f32.mxu0 0.0
      %3166 = vmatmul.mubr.f32.gmra.mxu0 %v2969
      %v3167 = vpop.f32.mrf.mxu0
      %v3168 = vadd.f32 0.0, %v3167
      %v3169 = vpop.f32.mrf.mxu0
      %3170 = vmatprep.mubr.f32.mxu0 0.0
      %3171 = vmatmul.mubr.f32.gmra.mxu0 %v2972
      %v3172 = vpop.f32.mrf.mxu0
      %v3173 = vadd.f32 0.0, %v3172
      %v3174 = vpop.f32.mrf.mxu0
      %3175 = vmatprep.mubr.f32.mxu0 0.0
      %3176 = vmatmul.mubr.f32.gmra.mxu0 %v2975
      %v3177 = vpop.f32.mrf.mxu0
      %v3178 = vadd.f32 0.0, %v3177
      %v3179 = vpop.f32.mrf.mxu0
      %3180 = vmatprep.mubr.f32.mxu0 0.0
      %3181 = vmatmul.mubr.f32.gmra.mxu0 %v2978
      %v3182 = vpop.f32.mrf.mxu0
      %v3183 = vadd.f32 0.0, %v3182
      %v3184 = vpop.f32.mrf.mxu0
      %3185 = vmatprep.mubr.f32.mxu0 0.0
      %3186 = vmatmul.mubr.f32.gmra.mxu0 %v2981
      %v3187 = vpop.f32.mrf.mxu0
      %v3188 = vadd.f32 0.0, %v3187
      %v3189 = vpop.f32.mrf.mxu0
      %3190 = vmatprep.mubr.f32.mxu0 0.0
      %3191 = vmatmul.mubr.f32.gmra.mxu0 %v2984
      %v3192 = vpop.f32.mrf.mxu0
      %v3193 = vadd.f32 0.0, %v3192
      %v3194 = vpop.f32.mrf.mxu0
      %3195 = vmatprep.mubr.f32.mxu0 0.0
      %3196 = vmatmul.mubr.f32.gmra.mxu0 %v2987
      %v3197 = vpop.f32.mrf.mxu0
      %v3198 = vadd.f32 0.0, %v3197
      %v3199 = vpop.f32.mrf.mxu0
      %3200 = vmatprep.mubr.f32.mxu0 0.0
      %3201 = vmatmul.mubr.f32.gmra.mxu0 %v2990
      %v3202 = vpop.f32.mrf.mxu0
      %v3203 = vadd.f32 0.0, %v3202
      %v3204 = vpop.f32.mrf.mxu0
      %3205 = vmatprep.mubr.f32.mxu0 0.0
      %3206 = vmatmul.mubr.f32.gmra.mxu0 %v2993
      %v3207 = vpop.f32.mrf.mxu0
      %v3208 = vadd.f32 0.0, %v3207
      %v3209 = vpop.f32.mrf.mxu0
      %3210 = vmatprep.mubr.f32.mxu0 0.0
      %3211 = vmatmul.mubr.f32.gmra.mxu0 %v2996
      %v3212 = vpop.f32.mrf.mxu0
      %v3213 = vadd.f32 0.0, %v3212
      %v3214 = vpop.f32.mrf.mxu0
      %3215 = vmatprep.mubr.f32.mxu0 0.0
      %3216 = vmatmul.mubr.f32.gmra.mxu0 %v2999
      %v3217 = vpop.f32.mrf.mxu0
      %v3218 = vadd.f32 0.0, %v3217
      %v3219 = vpop.f32.mrf.mxu0
      %3220 = vmatprep.mubr.f32.mxu0 0.0
      %3221 = vmatmul.mubr.f32.gmra.mxu0 %v3002
      %v3222 = vpop.f32.mrf.mxu0
      %v3223 = vadd.f32 0.0, %v3222
      %v3224 = vpop.f32.mrf.mxu0
      %3225 = vmatprep.mubr.f32.mxu0 0.0
      %3226 = vmatmul.mubr.f32.gmra.mxu0 %v3005
      %v3227 = vpop.f32.mrf.mxu0
      %v3228 = vadd.f32 0.0, %v3227
      %v3229 = vpop.f32.mrf.mxu0
      %3230 = vmatprep.mubr.f32.mxu0 0.0
      %3231 = vmatmul.mubr.f32.gmra.mxu0 %v3008
      %v3232 = vpop.f32.mrf.mxu0
      %v3233 = vadd.f32 0.0, %v3232
      %v3234 = vpop.f32.mrf.mxu0
      %3235 = vmatprep.mubr.f32.mxu0 0.0
      %3236 = vmatmul.mubr.f32.gmra.mxu0 %v3011
      %v3237 = vpop.f32.mrf.mxu0
      %v3238 = vadd.f32 0.0, %v3237
      %v3239 = vpop.f32.mrf.mxu0
      %3240 = vdwg.mxu0
      %v3241 = vadd.f32 %v2851, %v3083
      %v3242 = vadd.f32 %v2852, %v3088
      %v3243 = vadd.f32 %v2853, %v3093
      %v3244 = vadd.f32 %v2854, %v3098
      %v3245 = vadd.f32 %v2855, %v3103
      %v3246 = vadd.f32 %v2856, %v3108
      %v3247 = vadd.f32 %v2857, %v3113
      %v3248 = vadd.f32 %v2858, %v3118
      %v3249 = vadd.f32 %v2859, %v3123
      %v3250 = vadd.f32 %v2860, %v3128
      %v3251 = vadd.f32 %v2861, %v3133
      %v3252 = vadd.f32 %v2862, %v3138
      %v3253 = vadd.f32 %v2863, %v3143
      %v3254 = vadd.f32 %v2864, %v3148
      %v3255 = vadd.f32 %v2865, %v3153
      %v3256 = vadd.f32 %v2866, %v3158
      %v3257 = vadd.f32 %v2867, %v3163
      %v3258 = vadd.f32 %v2868, %v3168
      %v3259 = vadd.f32 %v2869, %v3173
      %v3260 = vadd.f32 %v2870, %v3178
      %v3261 = vadd.f32 %v2871, %v3183
      %v3262 = vadd.f32 %v2872, %v3188
      %v3263 = vadd.f32 %v2873, %v3193
      %v3264 = vadd.f32 %v2874, %v3198
      %v3265 = vadd.f32 %v2875, %v3203
      %v3266 = vadd.f32 %v2876, %v3208
      %v3267 = vadd.f32 %v2877, %v3213
      %v3268 = vadd.f32 %v2878, %v3218
      %v3269 = vadd.f32 %v2879, %v3223
      %v3270 = vadd.f32 %v2880, %v3228
      %v3271 = vadd.f32 %v2881, %v3233
      %v3272 = vadd.f32 %v2882, %v3238
      %v3273 = vld [vmem:[%s2492 + $0x2] sm:$0xff]
      %v3274 = vld [vmem:[%s2492 + $0xa] sm:$0xff]
      %v3275 = vld [vmem:[%s2492 + $0x1a] sm:$0xff]
      %v3276 = vld [vmem:[%s2492 + $0x22] sm:$0xff]
      %v3277 = vld [vmem:[%s2492 + $0x32] sm:$0xff]
      %v3278 = vld [vmem:[%s2492 + $0x3a] sm:$0xff]
      %v3279 = vld [vmem:[%s2492 + $0x4a] sm:$0xff]
      %v3280 = vld [vmem:[%s2492 + $0x52] sm:$0xff]
      %v3281 = vld [vmem:[%s2492 + $0x62] sm:$0xff]
      %v3282 = vld [vmem:[%s2492 + $0x6a] sm:$0xff]
      %v3283 = vld [vmem:[%s2492 + $0x7a] sm:$0xff]
      %v3284 = vld [vmem:[%s2492 + $0x82] sm:$0xff]
      %v3285 = vld [vmem:[%s2492 + $0x92] sm:$0xff]
      %v3286 = vld [vmem:[%s2492 + $0x9a] sm:$0xff]
      %v3287 = vld [vmem:[%s2492 + $0xaa] sm:$0xff]
      %v3288 = vld [vmem:[%s2492 + $0xb2] sm:$0xff]
      %v3289 = vld [vmem:[%s2492 + $0xc2] sm:$0xff]
      %v3290 = vld [vmem:[%s2492 + $0xca] sm:$0xff]
      %v3291 = vld [vmem:[%s2492 + $0xda] sm:$0xff]
      %v3292 = vld [vmem:[%s2492 + $0xe2] sm:$0xff]
      %v3293 = vld [vmem:[%s2492 + $0xf2] sm:$0xff]
      %v3294 = vld [vmem:[%s2492 + $0xfa] sm:$0xff]
      %v3295 = vld [vmem:[%s2492 + $0x10a] sm:$0xff]
      %v3296 = vld [vmem:[%s2492 + $0x112] sm:$0xff]
      %v3297 = vld [vmem:[%s2492 + $0x122] sm:$0xff]
      %v3298 = vld [vmem:[%s2492 + $0x12a] sm:$0xff]
      %v3299 = vld [vmem:[%s2492 + $0x13a] sm:$0xff]
      %v3300 = vld [vmem:[%s2492 + $0x142] sm:$0xff]
      %v3301 = vld [vmem:[%s2492 + $0x152] sm:$0xff]
      %v3302 = vld [vmem:[%s2492 + $0x15a] sm:$0xff]
      %v3303 = vld [vmem:[%s2492 + $0x16a] sm:$0xff]
      %v3304 = vld [vmem:[%s2492 + $0x172] sm:$0xff]
      %s3305 = scalar_lea.vmem %s1, 32
      %v3306 = vld [vmem:[%s3305] sm:$0xf]
      %v3308 = vsel %vm277, %v3273, 0
      %v3311 = vsel %vm277, %v3274, 0
      %v3314 = vsel %vm277, %v3275, 0
      %v3317 = vsel %vm277, %v3276, 0
      %v3320 = vsel %vm277, %v3277, 0
      %v3323 = vsel %vm277, %v3278, 0
      %v3326 = vsel %vm277, %v3279, 0
      %v3329 = vsel %vm277, %v3280, 0
      %v3332 = vsel %vm277, %v3281, 0
      %v3335 = vsel %vm277, %v3282, 0
      %v3338 = vsel %vm277, %v3283, 0
      %v3341 = vsel %vm277, %v3284, 0
      %v3344 = vsel %vm277, %v3285, 0
      %v3347 = vsel %vm277, %v3286, 0
      %v3350 = vsel %vm277, %v3287, 0
      %v3353 = vsel %vm277, %v3288, 0
      %v3356 = vsel %vm277, %v3289, 0
      %v3359 = vsel %vm277, %v3290, 0
      %v3362 = vsel %vm277, %v3291, 0
      %v3365 = vsel %vm277, %v3292, 0
      %v3368 = vsel %vm277, %v3293, 0
      %v3371 = vsel %vm277, %v3294, 0
      %v3374 = vsel %vm277, %v3295, 0
      %v3377 = vsel %vm277, %v3296, 0
      %v3380 = vsel %vm277, %v3297, 0
      %v3383 = vsel %vm277, %v3298, 0
      %v3386 = vsel %vm277, %v3299, 0
      %v3389 = vsel %vm277, %v3300, 0
      %v3392 = vsel %vm277, %v3301, 0
      %v3395 = vsel %vm277, %v3302, 0
      %v3398 = vsel %vm277, %v3303, 0
      %v3401 = vsel %vm277, %v3304, 0
      %v3404 = vsel %vm374, %v3306, 0
      %3406 = vmatprep.subr.mxu0 0.0
      %3407 = vmatpush1.msra.mxu0 0.0
      %3408 = vmatprep.subr.mxu0 0.0
      %3409 = vmatpush1.msra.mxu0 0.0
      %3410 = vmatprep.subr.mxu0 0.0
      %3411 = vmatpush1.msra.mxu0 0.0
      %3412 = vmatprep.subr.mxu0 0.0
      %3413 = vmatpush1.msra.mxu0 0.0
      %3414 = vmatprep.subr.mxu0 0.0
      %3415 = vmatpush1.msra.mxu0 0.0
      %3416 = vmatprep.subr.mxu0 0.0
      %3417 = vmatpush1.msra.mxu0 0.0
      %3418 = vmatprep.subr.mxu0 0.0
      %3419 = vmatpush1.msra.mxu0 0.0
      %3420 = vmatprep.subr.mxu0 0.0
      %3421 = vmatpush1.msra.mxu0 0.0
      %3422 = vmatprep.subr.mxu0 0.0
      %3423 = vmatpush1.msra.mxu0 0.0
      %3424 = vmatprep.subr.mxu0 0.0
      %3425 = vmatpush1.msra.mxu0 0.0
      %3426 = vmatprep.subr.mxu0 0.0
      %3427 = vmatpush1.msra.mxu0 0.0
      %3428 = vmatprep.subr.mxu0 0.0
      %3429 = vmatpush1.msra.mxu0 0.0
      %3430 = vmatprep.subr.mxu0 0.0
      %3431 = vmatpush1.msra.mxu0 0.0
      %3432 = vmatprep.subr.mxu0 0.0
      %3433 = vmatpush1.msra.mxu0 0.0
      %3434 = vmatprep.subr.mxu0 0.0
      %3435 = vmatpush1.msra.mxu0 0.0
      %3436 = vmatprep.subr.mxu0 0.0
      %3437 = vmatpush1.msra.mxu0 %v3404
      %3438 = vmatprep.subr.mxu0 0.0
      %3439 = vmatpush2.msra.mxu0 0.0
      %3440 = vmatprep.subr.mxu0 0.0
      %3441 = vmatpush2.msra.mxu0 0.0
      %3442 = vmatprep.subr.mxu0 0.0
      %3443 = vmatpush2.msra.mxu0 0.0
      %3444 = vmatprep.subr.mxu0 0.0
      %3445 = vmatpush2.msra.mxu0 0.0
      %3446 = vmatprep.subr.mxu0 0.0
      %3447 = vmatpush2.msra.mxu0 0.0
      %3448 = vmatprep.subr.mxu0 0.0
      %3449 = vmatpush2.msra.mxu0 0.0
      %3450 = vmatprep.subr.mxu0 0.0
      %3451 = vmatpush2.msra.mxu0 0.0
      %3452 = vmatprep.subr.mxu0 0.0
      %3453 = vmatpush2.msra.mxu0 0.0
      %3454 = vmatprep.subr.mxu0 0.0
      %3455 = vmatpush2.msra.mxu0 0.0
      %3456 = vmatprep.subr.mxu0 0.0
      %3457 = vmatpush2.msra.mxu0 0.0
      %3458 = vmatprep.subr.mxu0 0.0
      %3459 = vmatpush2.msra.mxu0 0.0
      %3460 = vmatprep.subr.mxu0 0.0
      %3461 = vmatpush2.msra.mxu0 0.0
      %3462 = vmatprep.subr.mxu0 0.0
      %3463 = vmatpush2.msra.mxu0 0.0
      %3464 = vmatprep.subr.mxu0 0.0
      %3465 = vmatpush2.msra.mxu0 0.0
      %3466 = vmatprep.subr.mxu0 0.0
      %3467 = vmatpush2.msra.mxu0 0.0
      %3468 = vmatprep.subr.mxu0 0.0
      %3469 = vmatpush2.msra.mxu0 0.0
      %3470 = vmatprep.mubr.f32.mxu0 0.0
      %3471 = vmatmul.mubr.f32.gmra.mxu0 %v3308
      %v3472 = vpop.f32.mrf.mxu0
      %v3473 = vadd.f32 0.0, %v3472
      %v3474 = vpop.f32.mrf.mxu0
      %3475 = vmatprep.mubr.f32.mxu0 0.0
      %3476 = vmatmul.mubr.f32.gmra.mxu0 %v3311
      %v3477 = vpop.f32.mrf.mxu0
      %v3478 = vadd.f32 0.0, %v3477
      %v3479 = vpop.f32.mrf.mxu0
      %3480 = vmatprep.mubr.f32.mxu0 0.0
      %3481 = vmatmul.mubr.f32.gmra.mxu0 %v3314
      %v3482 = vpop.f32.mrf.mxu0
      %v3483 = vadd.f32 0.0, %v3482
      %v3484 = vpop.f32.mrf.mxu0
      %3485 = vmatprep.mubr.f32.mxu0 0.0
      %3486 = vmatmul.mubr.f32.gmra.mxu0 %v3317
      %v3487 = vpop.f32.mrf.mxu0
      %v3488 = vadd.f32 0.0, %v3487
      %v3489 = vpop.f32.mrf.mxu0
      %3490 = vmatprep.mubr.f32.mxu0 0.0
      %3491 = vmatmul.mubr.f32.gmra.mxu0 %v3320
      %v3492 = vpop.f32.mrf.mxu0
      %v3493 = vadd.f32 0.0, %v3492
      %v3494 = vpop.f32.mrf.mxu0
      %3495 = vmatprep.mubr.f32.mxu0 0.0
      %3496 = vmatmul.mubr.f32.gmra.mxu0 %v3323
      %v3497 = vpop.f32.mrf.mxu0
      %v3498 = vadd.f32 0.0, %v3497
      %v3499 = vpop.f32.mrf.mxu0
      %3500 = vmatprep.mubr.f32.mxu0 0.0
      %3501 = vmatmul.mubr.f32.gmra.mxu0 %v3326
      %v3502 = vpop.f32.mrf.mxu0
      %v3503 = vadd.f32 0.0, %v3502
      %v3504 = vpop.f32.mrf.mxu0
      %3505 = vmatprep.mubr.f32.mxu0 0.0
      %3506 = vmatmul.mubr.f32.gmra.mxu0 %v3329
      %v3507 = vpop.f32.mrf.mxu0
      %v3508 = vadd.f32 0.0, %v3507
      %v3509 = vpop.f32.mrf.mxu0
      %3510 = vmatprep.mubr.f32.mxu0 0.0
      %3511 = vmatmul.mubr.f32.gmra.mxu0 %v3332
      %v3512 = vpop.f32.mrf.mxu0
      %v3513 = vadd.f32 0.0, %v3512
      %v3514 = vpop.f32.mrf.mxu0
      %3515 = vmatprep.mubr.f32.mxu0 0.0
      %3516 = vmatmul.mubr.f32.gmra.mxu0 %v3335
      %v3517 = vpop.f32.mrf.mxu0
      %v3518 = vadd.f32 0.0, %v3517
      %v3519 = vpop.f32.mrf.mxu0
      %3520 = vmatprep.mubr.f32.mxu0 0.0
      %3521 = vmatmul.mubr.f32.gmra.mxu0 %v3338
      %v3522 = vpop.f32.mrf.mxu0
      %v3523 = vadd.f32 0.0, %v3522
      %v3524 = vpop.f32.mrf.mxu0
      %3525 = vmatprep.mubr.f32.mxu0 0.0
      %3526 = vmatmul.mubr.f32.gmra.mxu0 %v3341
      %v3527 = vpop.f32.mrf.mxu0
      %v3528 = vadd.f32 0.0, %v3527
      %v3529 = vpop.f32.mrf.mxu0
      %3530 = vmatprep.mubr.f32.mxu0 0.0
      %3531 = vmatmul.mubr.f32.gmra.mxu0 %v3344
      %v3532 = vpop.f32.mrf.mxu0
      %v3533 = vadd.f32 0.0, %v3532
      %v3534 = vpop.f32.mrf.mxu0
      %3535 = vmatprep.mubr.f32.mxu0 0.0
      %3536 = vmatmul.mubr.f32.gmra.mxu0 %v3347
      %v3537 = vpop.f32.mrf.mxu0
      %v3538 = vadd.f32 0.0, %v3537
      %v3539 = vpop.f32.mrf.mxu0
      %3540 = vmatprep.mubr.f32.mxu0 0.0
      %3541 = vmatmul.mubr.f32.gmra.mxu0 %v3350
      %v3542 = vpop.f32.mrf.mxu0
      %v3543 = vadd.f32 0.0, %v3542
      %v3544 = vpop.f32.mrf.mxu0
      %3545 = vmatprep.mubr.f32.mxu0 0.0
      %3546 = vmatmul.mubr.f32.gmra.mxu0 %v3353
      %v3547 = vpop.f32.mrf.mxu0
      %v3548 = vadd.f32 0.0, %v3547
      %v3549 = vpop.f32.mrf.mxu0
      %3550 = vmatprep.mubr.f32.mxu0 0.0
      %3551 = vmatmul.mubr.f32.gmra.mxu0 %v3356
      %v3552 = vpop.f32.mrf.mxu0
      %v3553 = vadd.f32 0.0, %v3552
      %v3554 = vpop.f32.mrf.mxu0
      %3555 = vmatprep.mubr.f32.mxu0 0.0
      %3556 = vmatmul.mubr.f32.gmra.mxu0 %v3359
      %v3557 = vpop.f32.mrf.mxu0
      %v3558 = vadd.f32 0.0, %v3557
      %v3559 = vpop.f32.mrf.mxu0
      %3560 = vmatprep.mubr.f32.mxu0 0.0
      %3561 = vmatmul.mubr.f32.gmra.mxu0 %v3362
      %v3562 = vpop.f32.mrf.mxu0
      %v3563 = vadd.f32 0.0, %v3562
      %v3564 = vpop.f32.mrf.mxu0
      %3565 = vmatprep.mubr.f32.mxu0 0.0
      %3566 = vmatmul.mubr.f32.gmra.mxu0 %v3365
      %v3567 = vpop.f32.mrf.mxu0
      %v3568 = vadd.f32 0.0, %v3567
      %v3569 = vpop.f32.mrf.mxu0
      %3570 = vmatprep.mubr.f32.mxu0 0.0
      %3571 = vmatmul.mubr.f32.gmra.mxu0 %v3368
      %v3572 = vpop.f32.mrf.mxu0
      %v3573 = vadd.f32 0.0, %v3572
      %v3574 = vpop.f32.mrf.mxu0
      %3575 = vmatprep.mubr.f32.mxu0 0.0
      %3576 = vmatmul.mubr.f32.gmra.mxu0 %v3371
      %v3577 = vpop.f32.mrf.mxu0
      %v3578 = vadd.f32 0.0, %v3577
      %v3579 = vpop.f32.mrf.mxu0
      %3580 = vmatprep.mubr.f32.mxu0 0.0
      %3581 = vmatmul.mubr.f32.gmra.mxu0 %v3374
      %v3582 = vpop.f32.mrf.mxu0
      %v3583 = vadd.f32 0.0, %v3582
      %v3584 = vpop.f32.mrf.mxu0
      %3585 = vmatprep.mubr.f32.mxu0 0.0
      %3586 = vmatmul.mubr.f32.gmra.mxu0 %v3377
      %v3587 = vpop.f32.mrf.mxu0
      %v3588 = vadd.f32 0.0, %v3587
      %v3589 = vpop.f32.mrf.mxu0
      %3590 = vmatprep.mubr.f32.mxu0 0.0
      %3591 = vmatmul.mubr.f32.gmra.mxu0 %v3380
      %v3592 = vpop.f32.mrf.mxu0
      %v3593 = vadd.f32 0.0, %v3592
      %v3594 = vpop.f32.mrf.mxu0
      %3595 = vmatprep.mubr.f32.mxu0 0.0
      %3596 = vmatmul.mubr.f32.gmra.mxu0 %v3383
      %v3597 = vpop.f32.mrf.mxu0
      %v3598 = vadd.f32 0.0, %v3597
      %v3599 = vpop.f32.mrf.mxu0
      %3600 = vmatprep.mubr.f32.mxu0 0.0
      %3601 = vmatmul.mubr.f32.gmra.mxu0 %v3386
      %v3602 = vpop.f32.mrf.mxu0
      %v3603 = vadd.f32 0.0, %v3602
      %v3604 = vpop.f32.mrf.mxu0
      %3605 = vmatprep.mubr.f32.mxu0 0.0
      %3606 = vmatmul.mubr.f32.gmra.mxu0 %v3389
      %v3607 = vpop.f32.mrf.mxu0
      %v3608 = vadd.f32 0.0, %v3607
      %v3609 = vpop.f32.mrf.mxu0
      %3610 = vmatprep.mubr.f32.mxu0 0.0
      %3611 = vmatmul.mubr.f32.gmra.mxu0 %v3392
      %v3612 = vpop.f32.mrf.mxu0
      %v3613 = vadd.f32 0.0, %v3612
      %v3614 = vpop.f32.mrf.mxu0
      %3615 = vmatprep.mubr.f32.mxu0 0.0
      %3616 = vmatmul.mubr.f32.gmra.mxu0 %v3395
      %v3617 = vpop.f32.mrf.mxu0
      %v3618 = vadd.f32 0.0, %v3617
      %v3619 = vpop.f32.mrf.mxu0
      %3620 = vmatprep.mubr.f32.mxu0 0.0
      %3621 = vmatmul.mubr.f32.gmra.mxu0 %v3398
      %v3622 = vpop.f32.mrf.mxu0
      %v3623 = vadd.f32 0.0, %v3622
      %v3624 = vpop.f32.mrf.mxu0
      %3625 = vmatprep.mubr.f32.mxu0 0.0
      %3626 = vmatmul.mubr.f32.gmra.mxu0 %v3401
      %v3627 = vpop.f32.mrf.mxu0
      %v3628 = vadd.f32 0.0, %v3627
      %v3629 = vpop.f32.mrf.mxu0
      %3630 = vdwg.mxu0
      %v3631 = vadd.f32 %v3241, %v3473
      %v3632 = vadd.f32 %v3242, %v3478
      %v3633 = vadd.f32 %v3243, %v3483
      %v3634 = vadd.f32 %v3244, %v3488
      %v3635 = vadd.f32 %v3245, %v3493
      %v3636 = vadd.f32 %v3246, %v3498
      %v3637 = vadd.f32 %v3247, %v3503
      %v3638 = vadd.f32 %v3248, %v3508
      %v3639 = vadd.f32 %v3249, %v3513
      %v3640 = vadd.f32 %v3250, %v3518
      %v3641 = vadd.f32 %v3251, %v3523
      %v3642 = vadd.f32 %v3252, %v3528
      %v3643 = vadd.f32 %v3253, %v3533
      %v3644 = vadd.f32 %v3254, %v3538
      %v3645 = vadd.f32 %v3255, %v3543
      %v3646 = vadd.f32 %v3256, %v3548
      %v3647 = vadd.f32 %v3257, %v3553
      %v3648 = vadd.f32 %v3258, %v3558
      %v3649 = vadd.f32 %v3259, %v3563
      %v3650 = vadd.f32 %v3260, %v3568
      %v3651 = vadd.f32 %v3261, %v3573
      %v3652 = vadd.f32 %v3262, %v3578
      %v3653 = vadd.f32 %v3263, %v3583
      %v3654 = vadd.f32 %v3264, %v3588
      %v3655 = vadd.f32 %v3265, %v3593
      %v3656 = vadd.f32 %v3266, %v3598
      %v3657 = vadd.f32 %v3267, %v3603
      %v3658 = vadd.f32 %v3268, %v3608
      %v3659 = vadd.f32 %v3269, %v3613
      %v3660 = vadd.f32 %v3270, %v3618
      %v3661 = vadd.f32 %v3271, %v3623
      %v3662 = vadd.f32 %v3272, %v3628
      %3663 = vst [vmem:[%s200] sm:$0xff] %v3631
      %3664 = vst [vmem:[%s200 + $0x8] sm:$0xff] %v3632
      %3665 = vst [vmem:[%s200 + $0x10] sm:$0xff] %v3633
      %3666 = vst [vmem:[%s200 + $0x18] sm:$0xff] %v3634
      %3667 = vst [vmem:[%s200 + $0x20] sm:$0xff] %v3635
      %3668 = vst [vmem:[%s200 + $0x28] sm:$0xff] %v3636
      %3669 = vst [vmem:[%s200 + $0x30] sm:$0xff] %v3637
      %3670 = vst [vmem:[%s200 + $0x38] sm:$0xff] %v3638
      %3671 = vst [vmem:[%s200 + $0x40] sm:$0xff] %v3639
      %3672 = vst [vmem:[%s200 + $0x48] sm:$0xff] %v3640
      %3673 = vst [vmem:[%s200 + $0x50] sm:$0xff] %v3641
      %3674 = vst [vmem:[%s200 + $0x58] sm:$0xff] %v3642
      %3675 = vst [vmem:[%s200 + $0x60] sm:$0xff] %v3643
      %3676 = vst [vmem:[%s200 + $0x68] sm:$0xff] %v3644
      %3677 = vst [vmem:[%s200 + $0x70] sm:$0xff] %v3645
      %3678 = vst [vmem:[%s200 + $0x78] sm:$0xff] %v3646
      %3679 = vst [vmem:[%s200 + $0x80] sm:$0xff] %v3647
      %3680 = vst [vmem:[%s200 + $0x88] sm:$0xff] %v3648
      %3681 = vst [vmem:[%s200 + $0x90] sm:$0xff] %v3649
      %3682 = vst [vmem:[%s200 + $0x98] sm:$0xff] %v3650
      %3683 = vst [vmem:[%s200 + $0xa0] sm:$0xff] %v3651
      %3684 = vst [vmem:[%s200 + $0xa8] sm:$0xff] %v3652
      %3685 = vst [vmem:[%s200 + $0xb0] sm:$0xff] %v3653
      %3686 = vst [vmem:[%s200 + $0xb8] sm:$0xff] %v3654
      %3687 = vst [vmem:[%s200 + $0xc0] sm:$0xff] %v3655
      %3688 = vst [vmem:[%s200 + $0xc8] sm:$0xff] %v3656
      %3689 = vst [vmem:[%s200 + $0xd0] sm:$0xff] %v3657
      %3690 = vst [vmem:[%s200 + $0xd8] sm:$0xff] %v3658
      %3691 = vst [vmem:[%s200 + $0xe0] sm:$0xff] %v3659
      %3692 = vst [vmem:[%s200 + $0xe8] sm:$0xff] %v3660
      %3693 = vst [vmem:[%s200 + $0xf0] sm:$0xff] %v3661
      %3694 = vst [vmem:[%s200 + $0xf8] sm:$0xff] %v3662
      %v3695 = vadd.f32 %v3631, %v3632
      %v3696 = vadd.f32 %v3695, %v3633
      %v3697 = vadd.f32 %v3696, %v3634
      %v3698 = vadd.f32 %v3697, %v3635
      %v3699 = vadd.f32 %v3698, %v3636
      %v3700 = vadd.f32 %v3699, %v3637
      %v3701 = vadd.f32 %v3700, %v3638
      %v3702 = vadd.f32 %v3701, %v3639
      %v3703 = vadd.f32 %v3702, %v3640
      %v3704 = vadd.f32 %v3703, %v3641
      %v3705 = vadd.f32 %v3704, %v3642
      %v3706 = vadd.f32 %v3705, %v3643
      %v3707 = vadd.f32 %v3706, %v3644
      %v3708 = vadd.f32 %v3707, %v3645
      %v3709 = vadd.f32 %v3708, %v3646
      %v3710 = vadd.f32 %v3709, %v3647
      %v3711 = vadd.f32 %v3710, %v3648
      %v3712 = vadd.f32 %v3711, %v3649
      %v3713 = vadd.f32 %v3712, %v3650
      %v3714 = vadd.f32 %v3713, %v3651
      %v3715 = vadd.f32 %v3714, %v3652
      %v3716 = vadd.f32 %v3715, %v3653
      %v3717 = vadd.f32 %v3716, %v3654
      %v3718 = vadd.f32 %v3717, %v3655
      %v3719 = vadd.f32 %v3718, %v3656
      %v3720 = vadd.f32 %v3719, %v3657
      %v3721 = vadd.f32 %v3720, %v3658
      %v3722 = vadd.f32 %v3721, %v3659
      %v3723 = vadd.f32 %v3722, %v3660
      %v3724 = vadd.f32 %v3723, %v3661
      %v3725 = vadd.f32 %v3724, %v3662
      %v3726 = vmul.f32 %v3631, %v3631
      %v3727 = vmul.f32 %v3632, %v3632
      %v3728 = vmul.f32 %v3633, %v3633
      %v3729 = vmul.f32 %v3634, %v3634
      %v3730 = vmul.f32 %v3635, %v3635
      %v3731 = vmul.f32 %v3636, %v3636
      %v3732 = vmul.f32 %v3637, %v3637
      %v3733 = vmul.f32 %v3638, %v3638
      %v3734 = vmul.f32 %v3639, %v3639
      %v3735 = vmul.f32 %v3640, %v3640
      %v3736 = vmul.f32 %v3641, %v3641
      %v3737 = vmul.f32 %v3642, %v3642
      %v3738 = vmul.f32 %v3643, %v3643
      %v3739 = vmul.f32 %v3644, %v3644
      %v3740 = vmul.f32 %v3645, %v3645
      %v3741 = vmul.f32 %v3646, %v3646
      %v3742 = vmul.f32 %v3647, %v3647
      %v3743 = vmul.f32 %v3648, %v3648
      %v3744 = vmul.f32 %v3649, %v3649
      %v3745 = vmul.f32 %v3650, %v3650
      %v3746 = vmul.f32 %v3651, %v3651
      %v3747 = vmul.f32 %v3652, %v3652
      %v3748 = vmul.f32 %v3653, %v3653
      %v3749 = vmul.f32 %v3654, %v3654
      %v3750 = vmul.f32 %v3655, %v3655
      %v3751 = vmul.f32 %v3656, %v3656
      %v3752 = vmul.f32 %v3657, %v3657
      %v3753 = vmul.f32 %v3658, %v3658
      %v3754 = vmul.f32 %v3659, %v3659
      %v3755 = vmul.f32 %v3660, %v3660
      %v3756 = vmul.f32 %v3661, %v3661
      %v3757 = vmul.f32 %v3662, %v3662
      %v3758 = vadd.f32 %v3726, %v3727
      %v3759 = vadd.f32 %v3758, %v3728
      %v3760 = vadd.f32 %v3759, %v3729
      %v3761 = vadd.f32 %v3760, %v3730
      %v3762 = vadd.f32 %v3761, %v3731
      %v3763 = vadd.f32 %v3762, %v3732
      %v3764 = vadd.f32 %v3763, %v3733
      %v3765 = vadd.f32 %v3764, %v3734
      %v3766 = vadd.f32 %v3765, %v3735
      %v3767 = vadd.f32 %v3766, %v3736
      %v3768 = vadd.f32 %v3767, %v3737
      %v3769 = vadd.f32 %v3768, %v3738
      %v3770 = vadd.f32 %v3769, %v3739
      %v3771 = vadd.f32 %v3770, %v3740
      %v3772 = vadd.f32 %v3771, %v3741
      %v3773 = vadd.f32 %v3772, %v3742
      %v3774 = vadd.f32 %v3773, %v3743
      %v3775 = vadd.f32 %v3774, %v3744
      %v3776 = vadd.f32 %v3775, %v3745
      %v3777 = vadd.f32 %v3776, %v3746
      %v3778 = vadd.f32 %v3777, %v3747
      %v3779 = vadd.f32 %v3778, %v3748
      %v3780 = vadd.f32 %v3779, %v3749
      %v3781 = vadd.f32 %v3780, %v3750
      %v3782 = vadd.f32 %v3781, %v3751
      %v3783 = vadd.f32 %v3782, %v3752
      %v3784 = vadd.f32 %v3783, %v3753
      %v3785 = vadd.f32 %v3784, %v3754
      %v3786 = vadd.f32 %v3785, %v3755
      %v3787 = vadd.f32 %v3786, %v3756
      %v3788 = vadd.f32 %v3787, %v3757
      %p3789 = scmp.eq.s32.totalorder %s20, 0
      // Predicated region
      $region29: #{conv_block_forward.2} parent=27 // pred_check
        %p3790 = pneg %p3789
      $region30: #{conv_block_forward.2} parent=27 // pred_check_branch
        %3792 = sbr.rel (%p3790) target = $region32
      $region31: #{conv_block_forward.2} parent=27 // pred_region
        %3793 = vst [vmem:[%s206] sm:$0xff] 0.0
        %3794 = vst [vmem:[%s206 + $0x8] sm:$0xff] 0.0
      $region32: #{conv_block_forward.2} parent=27 // pred_fallthru
        _
      %v3795 = vld [vmem:[%s206] sm:$0xff]
      %v3796 = vadd.f32 %v3795, %v3725
      %3797 = vst [vmem:[%s206] sm:$0xff] %v3796
      %s3798 = scalar_lea.vmem %s206, 8
      %v3799 = vld [vmem:[%s3798] sm:$0xff]
      %v3800 = vadd.f32 %v3799, %v3788
      %3801 = vst [vmem:[%s3798] sm:$0xff] %v3800
      %s3802 = smul.u32 32, %s20
      %p3803 = scmp.lt.s32.totalorder %s19, 1
      %s3804 = scalar_select %p3803, %s19, 1
      %p3805 = scmp.lt.s32.totalorder %s3802, 31
      %s3806 = scalar_select %p3805, %s3802, 31
      %s3807 = smul.addr %s3804, 32
      %s3808 = sadd.s32 %s3806, %s3807
      %s3809 = smul.addr %s3808, 8
      %s3810 = scalar_lea.vmem %s2, %s3809
      %p3811 = scmp.lt.s32.totalorder %s19, 1
      %s3812 = scalar_select %p3811, %s19, 1
      %s3813 = smul.addr %s3812, 2
      %s3814 = smul.addr %s3813, 8
      %s3815 = scalar_lea.vmem %s3, %s3814
      // Predicated region
      $region33: #{conv_block_forward.2} parent=27 // pred_check
        %p3816 = pneg %p94
      $region34: #{conv_block_forward.2} parent=27 // pred_check_branch
        %3818 = sbr.rel (%p3816) target = $region36
      $region35: #{conv_block_forward.2} parent=27 // pred_region
        %s3819 = smul.u32 32, %s20
      $region36: #{conv_block_forward.2} parent=27 // pred_fallthru
        _
      // Predicated region
      $region37: #{conv_block_forward.2} parent=27 // pred_check
        %p3820 = pneg %p120
      $region38: #{conv_block_forward.2} parent=27 // pred_check_branch
        %3822 = sbr.rel (%p3820) target = $region40
      $region39: #{conv_block_forward.2} parent=27 // pred_region
        _
      $region40: #{conv_block_forward.2} parent=27 // pred_fallthru
        _
    $region28: #{conv_block_forward.2} parent=5 // pred_fallthru
      _
    %p3823 = scmp.le.s32.totalorder 2, %s10
    // Predicated region
    $region41: #{conv_block_forward.2} parent=5 // pred_check
      %p3824 = pneg %p3823
    $region42: #{conv_block_forward.2} parent=5 // pred_check_branch
      %3826 = sbr.rel (%p3824) target = $region44
    $region43: #{conv_block_forward.2} parent=5 // pred_region
      %s3827 = ssub.s32 %s10, 2
      // Predicated region
      $region45: #{conv_block_forward.2} parent=43 // pred_check
        %p3828 = pneg %p100
      $region46: #{conv_block_forward.2} parent=43 // pred_check_branch
        %3830 = sbr.rel (%p3828) target = $region48
      $region47: #{conv_block_forward.2} parent=43 // pred_region
        %s3831 = smul.u32 32, %s22
        %p3832 = scmp.lt.s32.totalorder %s21, 1
        %s3833 = scalar_select %p3832, %s21, 1
        %p3834 = scmp.lt.s32.totalorder %s3831, 31
        %s3835 = scalar_select %p3834, %s3831, 31
        %s3836 = smul.addr %s3833, 32
        %s3837 = sadd.s32 %s3835, %s3836
        %s3838 = smul.addr %s3837, 8
        %s3839 = scalar_lea.vmem %s2, %s3838
      $region48: #{conv_block_forward.2} parent=43 // pred_fallthru
        _
      // Predicated region
      $region49: #{conv_block_forward.2} parent=43 // pred_check
        %p3840 = pneg %p126
      $region50: #{conv_block_forward.2} parent=43 // pred_check_branch
        %3842 = sbr.rel (%p3840) target = $region52
      $region51: #{conv_block_forward.2} parent=43 // pred_region
        %p3843 = scmp.lt.s32.totalorder %s21, 1
        %s3844 = scalar_select %p3843, %s21, 1
        %s3845 = smul.addr %s3844, 2
        %s3846 = smul.addr %s3845, 8
        %s3847 = scalar_lea.vmem %s3, %s3846
      $region52: #{conv_block_forward.2} parent=43 // pred_fallthru
        _
    $region44: #{conv_block_forward.2} parent=5 // pred_fallthru
      _
  $region6: #{conv_block_forward.2} parent=0 // loop_footer
    %s14 = sadd.s32 1, %s10
  $region7: #{conv_block_forward.2} parent=0 // loop_footer_branch
    %9 = sbr.rel target = $region3
  $region8: #{conv_block_forward.2} parent=0 // loop_exit
    _

</llo_original>
